<compile_context>
chip_gen: v7x
topology: tpu7x:2x2x1
jax: 0.10.0
libtpu: 0.0.40
codegen_flags: <defaults>
</compile_context>

<pallas_src>
import math

import jax
import jax.numpy as jnp
from jax.experimental import pallas as pl
from jax.experimental.pallas import tpu as pltpu

BN_EPS = 1e-5
LANES = 128  # lane-dense width for every stored activation


# ------------------------------ small helpers -------------------------------

def _vmem():
    return pl.BlockSpec(memory_space=pltpu.MemorySpace.VMEM)


def _pad_lanes(a, n=LANES):
    """Zero-pad the last (lane) dim of a 2-D array up to n columns."""
    return jnp.pad(a, ((0, 0), (0, n - a.shape[-1])))


def _conv_w_to_mat(w):
    """torch Conv1d weight (Cout, Cin, K) -> (K*Cin, Cout), rows tap-major."""
    cout = w.shape[0]
    return jnp.transpose(w, (2, 1, 0)).reshape(-1, cout)


def _convT_w_to_mat(w):
    """torch ConvTranspose1d weight (Cin, Cout, K), stride=1, pad=1 == ordinary
    conv with the kernel flipped and in/out channels swapped."""
    w_eff = jnp.flip(jnp.transpose(w, (1, 0, 2)), axis=-1)  # (Cout, Cin, K)
    return _conv_w_to_mat(w_eff)


# ----------------------- in-kernel building blocks ---------------------------

def _mm(a, b):
    """bf16 MXU matmul with f32 accumulation (operands cast right before the dot)."""
    return jnp.dot(a.astype(jnp.bfloat16), b.astype(jnp.bfloat16),
                   preferred_element_type=jnp.float32)


def _bn_relu(h, gamma, beta):
    """BatchNorm1d with training (batch) statistics over the row axis, then ReLU."""
    mean = jnp.mean(h, axis=0, keepdims=True)
    d = h - mean
    var = jnp.mean(d * d, axis=0, keepdims=True)  # biased var, torch training BN
    return jnp.maximum(d * jax.lax.rsqrt(var + BN_EPS) * gamma + beta, 0.0)


def _make_shifts(rid, L, M):
    """Return prev/next row-shift functions for a (B*L, C) slab; zero at the
    length-L segment (batch) boundaries. Masks are multiplicative f32 (VPU)."""
    not_first = ((rid % L) != 0).astype(jnp.float32)       # (M, 1)
    not_last = ((rid % L) != (L - 1)).astype(jnp.float32)  # (M, 1)

    def prev(a):   # a[l-1]
        return pltpu.roll(a, 1, axis=0) * not_first

    def nxt(a):    # a[l+1]
        return pltpu.roll(a, M - 1, axis=0) * not_last

    return prev, nxt


# ----------------------------- Pallas kernels --------------------------------

def make_ladder_block_kernel(B, L, cin, cout):
    """Fused LadderBlock: conv1(k3)+BN+ReLU -> conv2(k3) + 1x1 skip, one kernel.
    The stored output is (B*L, 128) lane-padded (real channels = 2*cout)."""
    M = B * L

    def kernel(x_ref, w1_ref, b1_ref, g_ref, be_ref, w2_ref, ws_ref, b2s_ref, o_ref):
        x = x_ref[...]                                           # (M, cin) f32
        rid = jax.lax.broadcasted_iota(jnp.int32, (M, 1), 0)
        prev, nxt = _make_shifts(rid, L, M)

        # -- conv1 (k=3, pad=1) ------------------------------------------------
        w1 = w1_ref[...]                                         # (3*cin, cout) f32
        if cin == 1:
            # K=3 would use <3% of an MXU column: scale-then-shift on the VPU.
            h = (prev(x * w1[0:1, :]) + x * w1[1:2, :]
                 + nxt(x * w1[2:3, :]) + b1_ref[...])
        else:
            # Three K=cin accumulating MXU dots over the shifted views.
            h = (_mm(prev(x), w1[0:cin, :])
                 + _mm(x, w1[cin:2 * cin, :])
                 + _mm(nxt(x), w1[2 * cin:3 * cin, :])
                 + b1_ref[...])

        # -- BatchNorm1d (training stats over B*L rows) + ReLU, f32 epilogue ----
        h = _bn_relu(h, g_ref[...], be_ref[...])

        # -- conv2 (k=3) + 1x1 skip: accumulate into one lane-padded f32 slab ---
        w2 = w2_ref[...]                                         # (3*cout, 128)
        y = (_mm(prev(h), w2[0:cout, :])
             + _mm(h, w2[cout:2 * cout, :])
             + _mm(nxt(h), w2[2 * cout:3 * cout, :])
             + _mm(x, ws_ref[...])                               # (cin, 128) skip
             + b2s_ref[...])                                     # b2 + bs, padded
        o_ref[...] = y                                           # lane-dense store

    return kernel


def make_heads_kernel(D):
    """fc_mu and fc_logvar packed into ONE matmul (+ fused reparameterization).
    Main output is a lane-dense (B, 128) slab: cols [0:D]=mu, [D:2D]=logvar."""

    def kernel(x_ref, w_ref, b_ref, eps_ref, ml_ref, z_ref):
        ml = _mm(x_ref[...], w_ref[...]) + b_ref[...]            # (B, 128)
        ml_ref[...] = ml
        mu = ml[:, :D]
        lv = ml[:, D:2 * D]
        # reparameterize: z = mu + eps * exp(0.5 * logvar), f32 epilogue.
        z_ref[...] = mu + eps_ref[...] * jnp.exp(0.5 * lv)

    return kernel


def make_convT_kernel(B, L, cin, bn_relu):
    """Decoder stage: ConvTranspose1d(k3, pad=1) (as a flipped conv) with optional
    BatchNorm(train)+ReLU, lane-padded (B*L, 128) output."""
    M = B * L

    def kernel(x_ref, w_ref, b_ref, *rest):
        if bn_relu:
            g_ref, be_ref, o_ref = rest
        else:
            (o_ref,) = rest
        x = x_ref[...]                                           # (M, cin)
        w = w_ref[...]                                           # (3*cin, 128)
        if L == 1:
            # pad=1 conv on a length-1 sequence: only the middle tap sees data.
            h = _mm(x, w[cin:2 * cin, :]) + b_ref[...]
        else:
            rid = jax.lax.broadcasted_iota(jnp.int32, (M, 1), 0)
            prev, nxt = _make_shifts(rid, L, M)
            h = (_mm(prev(x), w[0:cin, :]) + _mm(x, w[cin:2 * cin, :])
                 + _mm(nxt(x), w[2 * cin:3 * cin, :]) + b_ref[...])
        if bn_relu:
            h = _bn_relu(h, g_ref[...], be_ref[...])
        o_ref[...] = h                                           # lane-dense store

    return kernel


# ------------------------------- model pieces --------------------------------

def ladder_block(x_nlc, p):
    """One fused pallas_call per LadderBlock."""
    B, L, cin = x_nlc.shape
    cout = p["w1"].shape[0]
    M = B * L
    w1 = _conv_w_to_mat(p["w1"])                                 # (3*cin, cout)
    w2 = _pad_lanes(_conv_w_to_mat(p["w2"]))                     # (3*cout, 128)
    ws = _pad_lanes(p["ws"][:, :, 0].T)                          # (cin, 128)
    b2s = _pad_lanes((p["b2"] + p["bs"]).reshape(1, -1))         # (1, 128)
    out = pl.pallas_call(
        make_ladder_block_kernel(B, L, cin, cout),
        out_shape=jax.ShapeDtypeStruct((M, LANES), jnp.float32),
        in_specs=[_vmem()] * 8,
        out_specs=_vmem(),
    )(x_nlc.reshape(M, cin), w1, p["b1"].reshape(1, -1),
      p["gamma"].reshape(1, -1), p["beta"].reshape(1, -1), w2, ws, b2s)
    return out[:, :2 * cout].reshape(B, L, 2 * cout)


def encode(x_nlc, params, key):
    latents, zs = [], []
    keys = jax.random.split(key, 3)
    x = x_nlc
    for i in range(3):
        y = ladder_block(x, params["enc"][i])
        B, L, C = y.shape
        # torch x.flatten(1) on NCL == transpose-then-flatten of the NLC slab.
        flat = jnp.transpose(y, (0, 2, 1)).reshape(B, C * L)
        fc = params["fc"][i]
        D = fc["wm"].shape[0]
        wcat = _pad_lanes(jnp.concatenate([fc["wm"].T, fc["wl"].T], axis=1))
        bcat = _pad_lanes(jnp.concatenate([fc["bm"], fc["bl"]]).reshape(1, -1))
        # TODO(synk): eps could be drawn in-kernel (pltpu.prng_seed +
        # pltpu.prng_random_bits) to drop this tiny RNG op + HBM round trip.
        eps = jax.random.normal(keys[i], (B, D), jnp.float32)
        ml, z = pl.pallas_call(
            make_heads_kernel(D),
            out_shape=(jax.ShapeDtypeStruct((B, LANES), jnp.float32),
                       jax.ShapeDtypeStruct((B, D), jnp.float32)),
            in_specs=[_vmem()] * 4,
            out_specs=(_vmem(), _vmem()),
        )(flat, wcat, bcat, eps)
        latents.append((ml[:, :D], ml[:, D:2 * D]))
        zs.append(z)
        # F.max_pool1d(x, 2): y already lives in HBM for the fc path above, so the
        # pool is one cheap XLA fusion over it (no extra pallas_call round trip).
        x = jnp.max(y.reshape(B, L // 2, 2, C), axis=2)
    return latents[::-1], zs[::-1]


def decode(zs, params):
    # TODO(synk): the reference decode cannot execute in PyTorch for any input:
    # 2-D latents (B, d) are fed straight to ConvTranspose1d and the `x + z` carry
    # has mismatched channel counts (32 vs 16, 64 vs 32). Here each latent gets a
    # singleton spatial axis and the carry add is omitted (x = z per stage); the
    # convT / BatchNorm / ReLU / nearest 2x upsample ops themselves are implemented.
    x = None
    n = len(params["dec"])
    for i, (z, p) in enumerate(zip(zs, params["dec"])):
        x = z[:, None, :]                                        # (B, 1, d) NLC
        B, L, cin = x.shape
        cout = p["w"].shape[1]
        bn = i < n - 1
        w = _pad_lanes(_convT_w_to_mat(p["w"]))                  # (3*cin, 128)
        b = _pad_lanes(p["b"].reshape(1, -1))
        ins = [x.reshape(B * L, cin), w, b]
        if bn:
            ins += [_pad_lanes(p["gamma"].reshape(1, -1)),
                    _pad_lanes(p["beta"].reshape(1, -1))]
        h = pl.pallas_call(
            make_convT_kernel(B, L, cin, bn),
            out_shape=jax.ShapeDtypeStruct((B * L, LANES), jnp.float32),
            in_specs=[_vmem()] * len(ins),
            out_specs=_vmem(),
        )(*ins)
        x = h[:, :cout].reshape(B, L, cout)
        if bn:
            x = jnp.repeat(x, 2, axis=1)  # F.interpolate(scale_factor=2), nearest
    return x


def ladder_vae_forward(x_ncl, params, key):
    x_nlc = jnp.transpose(x_ncl, (0, 2, 1))
    latents, zs = encode(x_nlc, params, key)
    recon = jnp.transpose(decode(zs, params), (0, 2, 1))         # back to NCL
    return recon, latents


# ----------------------------- parameter init --------------------------------

def _uniform(key, shape, bound):
    return jax.random.uniform(key, shape, jnp.float32, minval=-bound, maxval=bound)


def _init_ladder_block(key, cin, cout):
    k1, k2, k3, k4, k5, k6 = jax.random.split(key, 6)
    bc1 = 1.0 / math.sqrt(cin * 3)
    bc2 = 1.0 / math.sqrt(cout * 3)
    bcs = 1.0 / math.sqrt(cin * 1)
    return {
        "w1": _uniform(k1, (cout, cin, 3), bc1), "b1": _uniform(k2, (cout,), bc1),
        "gamma": jnp.ones((cout,), jnp.float32), "beta": jnp.zeros((cout,), jnp.float32),
        "w2": _uniform(k3, (2 * cout, cout, 3), bc2), "b2": _uniform(k4, (2 * cout,), bc2),
        "ws": _uniform(k5, (2 * cout, cin, 1), bcs), "bs": _uniform(k6, (2 * cout,), bcs),
    }


def _init_linear(key, fin, fout):
    kw, kb = jax.random.split(key)
    bound = 1.0 / math.sqrt(fin)
    return _uniform(kw, (fout, fin), bound), _uniform(kb, (fout,), bound)  # torch layout


def _init_convT(key, cin, cout):
    kw, kb = jax.random.split(key)
    bound = 1.0 / math.sqrt(cout * 3)
    return _uniform(kw, (cin, cout, 3), bound), _uniform(kb, (cout,), bound)


def init_params(key, seq_length, latent_dims=(32, 16, 8)):
    keys = jax.random.split(key, 16)
    enc_io = [(1, 32), (64, 16), (32, 8)]
    enc = [_init_ladder_block(keys[i], ci, co) for i, (ci, co) in enumerate(enc_io)]

    # TODO(synk): the reference builds fc layers with in_features 64/32/16 * seq_length
    # (constant seq_length), which ignores the /2 pooling and can never match
    # x.flatten(1); here in_features are the true per-stage sizes.
    chans = [64, 32, 16]
    lens = [seq_length, seq_length // 2, seq_length // 4]
    fc = []
    for i in range(3):
        km, kl = jax.random.split(keys[3 + i])
        wm, bm = _init_linear(km, chans[i] * lens[i], latent_dims[i])
        wl, bl = _init_linear(kl, chans[i] * lens[i], latent_dims[i])
        fc.append({"wm": wm, "bm": bm, "wl": wl, "bl": bl})

    dec_io = [(8, 32), (16, 64), (32, 1)]
    dec = []
    for i, (ci, co) in enumerate(dec_io):
        w, b = _init_convT(keys[6 + i], ci, co)
        blk = {"w": w, "b": b}
        if i < 2:
            blk["gamma"] = jnp.ones((co,), jnp.float32)
            blk["beta"] = jnp.zeros((co,), jnp.float32)
        dec.append(blk)

    return {"enc": enc, "fc": fc, "dec": dec}


# ---------------------------------- main --------------------------------------

if __name__ == "__main__":
    root = jax.random.PRNGKey(0)
    k_x, k_p, k_eps = jax.random.split(root, 3)
    B, L = 2, 16  # small shapes; L plays the role of seq_length=435
    x = jax.random.normal(k_x, (B, 1, L), jnp.float32)  # NCL, like the torch module
    params = init_params(k_p, seq_length=L)

    fwd = jax.jit(ladder_vae_forward)
    recon, latents = fwd(x, params, k_eps)
    jax.block_until_ready(recon)
    for mu, lv in latents:
        jax.block_until_ready(mu)
        jax.block_until_ready(lv)

    assert recon.shape == (B, 1, 1)
    assert [m.shape for m, _ in latents] == [(B, 8), (B, 16), (B, 32)]
    print("KERNEL_OK")
</pallas_src>

<mosaic_0001>
module attributes {stable_mosaic.version = 11 : i64} {
  func.func @kernel(%arg0: memref<32x1xf32, #tpu.memory_space<vmem>>, %arg1: memref<3x32xf32, #tpu.memory_space<vmem>>, %arg2: memref<1x32xf32, #tpu.memory_space<vmem>>, %arg3: memref<1x32xf32, #tpu.memory_space<vmem>>, %arg4: memref<1x32xf32, #tpu.memory_space<vmem>>, %arg5: memref<96x128xf32, #tpu.memory_space<vmem>>, %arg6: memref<1x128xf32, #tpu.memory_space<vmem>>, %arg7: memref<1x128xf32, #tpu.memory_space<vmem>>, %arg8: memref<32x128xf32, #tpu.memory_space<vmem>>) attributes {dimension_semantics = [], scalar_prefetch = 0 : i64, scratch_operands = 0 : i64, tpu.core_type = #tpu.core_type<tc>} {
    %c0 = arith.constant 0 : index
    %c0_0 = arith.constant 0 : index
    %0 = vector.load %arg0[%c0, %c0_0] : memref<32x1xf32, #tpu.memory_space<vmem>>, vector<32x1xf32>
    %1 = tpu.iota {dimensions = array<i32: 0>} : vector<32x1xi32>
    %c16_i32 = arith.constant 16 : i32
    %c0_i32 = arith.constant 0 : i32
    %2 = arith.cmpi eq, %c16_i32, %c0_i32 : i32
    %c1_i32 = arith.constant 1 : i32
    %3 = arith.select %2, %c1_i32, %c16_i32 : i32
    %4 = vector.broadcast %3 : i32 to vector<32x1xi32>
    %5 = arith.remsi %1, %4 : vector<32x1xi32>
    %c0_i32_1 = arith.constant 0 : i32
    %6 = vector.broadcast %c0_i32_1 : i32 to vector<32x1xi32>
    %7 = arith.cmpi ne, %5, %6 : vector<32x1xi32>
    %c0_i32_2 = arith.constant 0 : i32
    %8 = vector.broadcast %c0_i32_2 : i32 to vector<32x1xi32>
    %9 = arith.cmpi slt, %5, %8 : vector<32x1xi32>
    %c0_i32_3 = arith.constant 0 : i32
    %10 = arith.cmpi slt, %3, %c0_i32_3 : i32
    %11 = vector.broadcast %10 : i1 to vector<32x1xi1>
    %12 = vector.broadcast %11 : vector<32x1xi1> to vector<32x1xi1>
    %13 = arith.xori %9, %12 : vector<32x1xi1>
    %14 = arith.andi %13, %7 : vector<32x1xi1>
    %15 = vector.broadcast %3 : i32 to vector<32x1xi32>
    %16 = arith.addi %5, %15 : vector<32x1xi32>
    %17 = arith.select %14, %16, %5 : vector<32x1xi1>, vector<32x1xi32>
    %c0_i32_4 = arith.constant 0 : i32
    %18 = vector.broadcast %c0_i32_4 : i32 to vector<32x1xi32>
    %19 = arith.cmpi ne, %17, %18 : vector<32x1xi32>
    %20 = arith.extui %19 : vector<32x1xi1> to vector<32x1xi32>
    %21 = arith.sitofp %20 : vector<32x1xi32> to vector<32x1xf32>
    %c16_i32_5 = arith.constant 16 : i32
    %c0_i32_6 = arith.constant 0 : i32
    %22 = arith.cmpi eq, %c16_i32_5, %c0_i32_6 : i32
    %c1_i32_7 = arith.constant 1 : i32
    %23 = arith.select %22, %c1_i32_7, %c16_i32_5 : i32
    %24 = vector.broadcast %23 : i32 to vector<32x1xi32>
    %25 = arith.remsi %1, %24 : vector<32x1xi32>
    %c0_i32_8 = arith.constant 0 : i32
    %26 = vector.broadcast %c0_i32_8 : i32 to vector<32x1xi32>
    %27 = arith.cmpi ne, %25, %26 : vector<32x1xi32>
    %c0_i32_9 = arith.constant 0 : i32
    %28 = vector.broadcast %c0_i32_9 : i32 to vector<32x1xi32>
    %29 = arith.cmpi slt, %25, %28 : vector<32x1xi32>
    %c0_i32_10 = arith.constant 0 : i32
    %30 = arith.cmpi slt, %23, %c0_i32_10 : i32
    %31 = vector.broadcast %30 : i1 to vector<32x1xi1>
    %32 = vector.broadcast %31 : vector<32x1xi1> to vector<32x1xi1>
    %33 = arith.xori %29, %32 : vector<32x1xi1>
    %34 = arith.andi %33, %27 : vector<32x1xi1>
    %35 = vector.broadcast %23 : i32 to vector<32x1xi32>
    %36 = arith.addi %25, %35 : vector<32x1xi32>
    %37 = arith.select %34, %36, %25 : vector<32x1xi1>, vector<32x1xi32>
    %c15_i32 = arith.constant 15 : i32
    %38 = vector.broadcast %c15_i32 : i32 to vector<32x1xi32>
    %39 = arith.cmpi ne, %37, %38 : vector<32x1xi32>
    %40 = arith.extui %39 : vector<32x1xi1> to vector<32x1xi32>
    %41 = arith.sitofp %40 : vector<32x1xi32> to vector<32x1xf32>
    %c0_11 = arith.constant 0 : index
    %c0_12 = arith.constant 0 : index
    %42 = vector.load %arg1[%c0_11, %c0_12] : memref<3x32xf32, #tpu.memory_space<vmem>>, vector<3x32xf32>
    %43 = vector.extract_strided_slice %42 {offsets = [0, 0], sizes = [1, 32], strides = [1, 1]} : vector<3x32xf32> to vector<1x32xf32>
    %44 = vector.broadcast %0 : vector<32x1xf32> to vector<32x32xf32>
    %45 = vector.broadcast %43 : vector<1x32xf32> to vector<32x32xf32>
    %46 = arith.mulf %44, %45 : vector<32x32xf32>
    %c1_i32_13 = arith.constant 1 : i32
    %47 = tpu.dynamic_rotate %46 by %c1_i32_13 dim 0 : vector<32x32xf32>, i32 -> vector<32x32xf32>
    %48 = vector.broadcast %21 : vector<32x1xf32> to vector<32x32xf32>
    %49 = arith.mulf %47, %48 : vector<32x32xf32>
    %50 = vector.extract_strided_slice %42 {offsets = [1, 0], sizes = [1, 32], strides = [1, 1]} : vector<3x32xf32> to vector<1x32xf32>
    %51 = vector.broadcast %0 : vector<32x1xf32> to vector<32x32xf32>
    %52 = vector.broadcast %50 : vector<1x32xf32> to vector<32x32xf32>
    %53 = arith.mulf %51, %52 : vector<32x32xf32>
    %54 = arith.addf %49, %53 : vector<32x32xf32>
    %55 = vector.extract_strided_slice %42 {offsets = [2, 0], sizes = [1, 32], strides = [1, 1]} : vector<3x32xf32> to vector<1x32xf32>
    %56 = vector.broadcast %0 : vector<32x1xf32> to vector<32x32xf32>
    %57 = vector.broadcast %55 : vector<1x32xf32> to vector<32x32xf32>
    %58 = arith.mulf %56, %57 : vector<32x32xf32>
    %c31_i32 = arith.constant 31 : i32
    %59 = tpu.dynamic_rotate %58 by %c31_i32 dim 0 : vector<32x32xf32>, i32 -> vector<32x32xf32>
    %60 = vector.broadcast %41 : vector<32x1xf32> to vector<32x32xf32>
    %61 = arith.mulf %59, %60 : vector<32x32xf32>
    %62 = arith.addf %54, %61 : vector<32x32xf32>
    %c0_14 = arith.constant 0 : index
    %c0_15 = arith.constant 0 : index
    %63 = vector.load %arg2[%c0_14, %c0_15] : memref<1x32xf32, #tpu.memory_space<vmem>>, vector<1x32xf32>
    %64 = vector.broadcast %63 : vector<1x32xf32> to vector<32x32xf32>
    %65 = arith.addf %62, %64 : vector<32x32xf32>
    %c0_16 = arith.constant 0 : index
    %c0_17 = arith.constant 0 : index
    %66 = vector.load %arg3[%c0_16, %c0_17] : memref<1x32xf32, #tpu.memory_space<vmem>>, vector<1x32xf32>
    %c0_18 = arith.constant 0 : index
    %c0_19 = arith.constant 0 : index
    %67 = vector.load %arg4[%c0_18, %c0_19] : memref<1x32xf32, #tpu.memory_space<vmem>>, vector<1x32xf32>
    %cst = arith.constant dense<0.000000e+00> : vector<32xf32>
    %68 = vector.multi_reduction <add>, %65, %cst [0] : vector<32x32xf32> to vector<32xf32>
    %69 = vector.shape_cast %68 : vector<32xf32> to vector<1x32xf32>
    %cst_20 = arith.constant 3.200000e+01 : f32
    %70 = vector.broadcast %cst_20 : f32 to vector<1x32xf32>
    %71 = arith.divf %69, %70 : vector<1x32xf32>
    %72 = vector.broadcast %71 : vector<1x32xf32> to vector<32x32xf32>
    %73 = arith.subf %65, %72 : vector<32x32xf32>
    %74 = arith.mulf %73, %73 : vector<32x32xf32>
    %cst_21 = arith.constant dense<0.000000e+00> : vector<32xf32>
    %75 = vector.multi_reduction <add>, %74, %cst_21 [0] : vector<32x32xf32> to vector<32xf32>
    %76 = vector.shape_cast %75 : vector<32xf32> to vector<1x32xf32>
    %cst_22 = arith.constant 3.200000e+01 : f32
    %77 = vector.broadcast %cst_22 : f32 to vector<1x32xf32>
    %78 = arith.divf %76, %77 : vector<1x32xf32>
    %cst_23 = arith.constant 9.99999974E-6 : f32
    %79 = vector.broadcast %cst_23 : f32 to vector<1x32xf32>
    %80 = arith.addf %78, %79 : vector<1x32xf32>
    %81 = math.rsqrt %80 : vector<1x32xf32>
    %82 = vector.broadcast %81 : vector<1x32xf32> to vector<32x32xf32>
    %83 = arith.mulf %73, %82 : vector<32x32xf32>
    %84 = vector.broadcast %66 : vector<1x32xf32> to vector<32x32xf32>
    %85 = arith.mulf %83, %84 : vector<32x32xf32>
    %86 = vector.broadcast %67 : vector<1x32xf32> to vector<32x32xf32>
    %87 = arith.addf %85, %86 : vector<32x32xf32>
    %cst_24 = arith.constant 0.000000e+00 : f32
    %88 = vector.broadcast %cst_24 : f32 to vector<32x32xf32>
    %89 = arith.maximumf %87, %88 : vector<32x32xf32>
    %c0_25 = arith.constant 0 : index
    %c0_26 = arith.constant 0 : index
    %90 = vector.load %arg5[%c0_25, %c0_26] : memref<96x128xf32, #tpu.memory_space<vmem>>, vector<96x128xf32>
    %c1_i32_27 = arith.constant 1 : i32
    %91 = tpu.dynamic_rotate %89 by %c1_i32_27 dim 0 : vector<32x32xf32>, i32 -> vector<32x32xf32>
    %92 = vector.broadcast %21 : vector<32x1xf32> to vector<32x32xf32>
    %93 = arith.mulf %91, %92 : vector<32x32xf32>
    %94 = vector.extract_strided_slice %90 {offsets = [0, 0], sizes = [32, 128], strides = [1, 1]} : vector<96x128xf32> to vector<32x128xf32>
    %95 = arith.truncf %93 : vector<32x32xf32> to vector<32x32xbf16>
    %96 = arith.truncf %94 : vector<32x128xf32> to vector<32x128xbf16>
    %cst_28 = arith.constant dense<0.000000e+00> : vector<32x128xf32>
    %97 = tpu.matmul %95, %96, %cst_28 {dimension_numbers = #tpu.dot_dimension_numbers<[1], [0], [0], [1], [0, 0, 1, 1], [], []>} : vector<32x32xbf16>, vector<32x128xbf16>, vector<32x128xf32> -> vector<32x128xf32>
    %98 = vector.extract_strided_slice %90 {offsets = [32, 0], sizes = [32, 128], strides = [1, 1]} : vector<96x128xf32> to vector<32x128xf32>
    %99 = arith.truncf %89 : vector<32x32xf32> to vector<32x32xbf16>
    %100 = arith.truncf %98 : vector<32x128xf32> to vector<32x128xbf16>
    %cst_29 = arith.constant dense<0.000000e+00> : vector<32x128xf32>
    %101 = tpu.matmul %99, %100, %cst_29 {dimension_numbers = #tpu.dot_dimension_numbers<[1], [0], [0], [1], [0, 0, 1, 1], [], []>} : vector<32x32xbf16>, vector<32x128xbf16>, vector<32x128xf32> -> vector<32x128xf32>
    %102 = arith.addf %97, %101 : vector<32x128xf32>
    %c31_i32_30 = arith.constant 31 : i32
    %103 = tpu.dynamic_rotate %89 by %c31_i32_30 dim 0 : vector<32x32xf32>, i32 -> vector<32x32xf32>
    %104 = vector.broadcast %41 : vector<32x1xf32> to vector<32x32xf32>
    %105 = arith.mulf %103, %104 : vector<32x32xf32>
    %106 = vector.extract_strided_slice %90 {offsets = [64, 0], sizes = [32, 128], strides = [1, 1]} : vector<96x128xf32> to vector<32x128xf32>
    %107 = arith.truncf %105 : vector<32x32xf32> to vector<32x32xbf16>
    %108 = arith.truncf %106 : vector<32x128xf32> to vector<32x128xbf16>
    %cst_31 = arith.constant dense<0.000000e+00> : vector<32x128xf32>
    %109 = tpu.matmul %107, %108, %cst_31 {dimension_numbers = #tpu.dot_dimension_numbers<[1], [0], [0], [1], [0, 0, 1, 1], [], []>} : vector<32x32xbf16>, vector<32x128xbf16>, vector<32x128xf32> -> vector<32x128xf32>
    %110 = arith.addf %102, %109 : vector<32x128xf32>
    %c0_32 = arith.constant 0 : index
    %c0_33 = arith.constant 0 : index
    %111 = vector.load %arg6[%c0_32, %c0_33] : memref<1x128xf32, #tpu.memory_space<vmem>>, vector<1x128xf32>
    %112 = arith.truncf %0 : vector<32x1xf32> to vector<32x1xbf16>
    %113 = arith.truncf %111 : vector<1x128xf32> to vector<1x128xbf16>
    %cst_34 = arith.constant dense<0.000000e+00> : vector<32x128xf32>
    %114 = tpu.matmul %112, %113, %cst_34 {dimension_numbers = #tpu.dot_dimension_numbers<[1], [0], [0], [1], [0, 0, 1, 1], [], []>} : vector<32x1xbf16>, vector<1x128xbf16>, vector<32x128xf32> -> vector<32x128xf32>
    %115 = arith.addf %110, %114 : vector<32x128xf32>
    %c0_35 = arith.constant 0 : index
    %c0_36 = arith.constant 0 : index
    %116 = vector.load %arg7[%c0_35, %c0_36] : memref<1x128xf32, #tpu.memory_space<vmem>>, vector<1x128xf32>
    %117 = vector.broadcast %116 : vector<1x128xf32> to vector<32x128xf32>
    %118 = arith.addf %115, %117 : vector<32x128xf32>
    %c0_37 = arith.constant 0 : index
    %c0_38 = arith.constant 0 : index
    %119 = vector.load %arg8[%c0_37, %c0_38] : memref<32x128xf32, #tpu.memory_space<vmem>>, vector<32x128xf32>
    tpu.vector_store %arg8[%c0_37, %c0_38], %118 {strides = array<i32>} : memref<32x128xf32, #tpu.memory_space<vmem>>, vector<32x128xf32>,
    return
  }
}

module attributes {stable_mosaic.version = 11 : i64} {
  func.func @kernel(%arg0: memref<2x1024xf32, #tpu.memory_space<vmem>>, %arg1: memref<1024x128xf32, #tpu.memory_space<vmem>>, %arg2: memref<1x128xf32, #tpu.memory_space<vmem>>, %arg3: memref<2x32xf32, #tpu.memory_space<vmem>>, %arg4: memref<2x128xf32, #tpu.memory_space<vmem>>, %arg5: memref<2x32xf32, #tpu.memory_space<vmem>>) attributes {dimension_semantics = [], scalar_prefetch = 0 : i64, scratch_operands = 0 : i64, tpu.core_type = #tpu.core_type<tc>} {
    %c0 = arith.constant 0 : index
    %c0_0 = arith.constant 0 : index
    %0 = vector.load %arg0[%c0, %c0_0] : memref<2x1024xf32, #tpu.memory_space<vmem>>, vector<2x1024xf32>
    %c0_1 = arith.constant 0 : index
    %c0_2 = arith.constant 0 : index
    %1 = vector.load %arg1[%c0_1, %c0_2] : memref<1024x128xf32, #tpu.memory_space<vmem>>, vector<1024x128xf32>
    %2 = arith.truncf %0 : vector<2x1024xf32> to vector<2x1024xbf16>
    %3 = arith.truncf %1 : vector<1024x128xf32> to vector<1024x128xbf16>
    %cst = arith.constant dense<0.000000e+00> : vector<2x128xf32>
    %4 = tpu.matmul %2, %3, %cst {dimension_numbers = #tpu.dot_dimension_numbers<[1], [0], [0], [1], [0, 0, 1, 1], [], []>} : vector<2x1024xbf16>, vector<1024x128xbf16>, vector<2x128xf32> -> vector<2x128xf32>
    %c0_3 = arith.constant 0 : index
    %c0_4 = arith.constant 0 : index
    %5 = vector.load %arg2[%c0_3, %c0_4] : memref<1x128xf32, #tpu.memory_space<vmem>>, vector<1x128xf32>
    %6 = vector.broadcast %5 : vector<1x128xf32> to vector<2x128xf32>
    %7 = arith.addf %4, %6 : vector<2x128xf32>
    %c0_5 = arith.constant 0 : index
    %c0_6 = arith.constant 0 : index
    %8 = vector.load %arg4[%c0_5, %c0_6] : memref<2x128xf32, #tpu.memory_space<vmem>>, vector<2x128xf32>
    tpu.vector_store %arg4[%c0_5, %c0_6], %7 {strides = array<i32>} : memref<2x128xf32, #tpu.memory_space<vmem>>, vector<2x128xf32>,
    %9 = vector.extract_strided_slice %7 {offsets = [0, 0], sizes = [2, 32], strides = [1, 1]} : vector<2x128xf32> to vector<2x32xf32>
    %10 = vector.extract_strided_slice %7 {offsets = [0, 32], sizes = [2, 32], strides = [1, 1]} : vector<2x128xf32> to vector<2x32xf32>
    %c0_7 = arith.constant 0 : index
    %c0_8 = arith.constant 0 : index
    %11 = vector.load %arg3[%c0_7, %c0_8] : memref<2x32xf32, #tpu.memory_space<vmem>>, vector<2x32xf32>
    %cst_9 = arith.constant 5.000000e-01 : f32
    %12 = vector.broadcast %cst_9 : f32 to vector<2x32xf32>
    %13 = arith.mulf %12, %10 : vector<2x32xf32>
    %14 = math.exp %13 : vector<2x32xf32>
    %15 = arith.mulf %11, %14 : vector<2x32xf32>
    %16 = arith.addf %9, %15 : vector<2x32xf32>
    %c0_10 = arith.constant 0 : index
    %c0_11 = arith.constant 0 : index
    %17 = vector.load %arg5[%c0_10, %c0_11] : memref<2x32xf32, #tpu.memory_space<vmem>>, vector<2x32xf32>
    tpu.vector_store %arg5[%c0_10, %c0_11], %16 {strides = array<i32>} : memref<2x32xf32, #tpu.memory_space<vmem>>, vector<2x32xf32>,
    return
  }
}

module attributes {stable_mosaic.version = 11 : i64} {
  func.func @kernel(%arg0: memref<2x32xf32, #tpu.memory_space<vmem>>, %arg1: memref<96x128xf32, #tpu.memory_space<vmem>>, %arg2: memref<1x128xf32, #tpu.memory_space<vmem>>, %arg3: memref<2x128xf32, #tpu.memory_space<vmem>>) attributes {dimension_semantics = [], scalar_prefetch = 0 : i64, scratch_operands = 0 : i64, tpu.core_type = #tpu.core_type<tc>} {
    %c0 = arith.constant 0 : index
    %c0_0 = arith.constant 0 : index
    %0 = vector.load %arg0[%c0, %c0_0] : memref<2x32xf32, #tpu.memory_space<vmem>>, vector<2x32xf32>
    %c0_1 = arith.constant 0 : index
    %c0_2 = arith.constant 0 : index
    %1 = vector.load %arg1[%c0_1, %c0_2] : memref<96x128xf32, #tpu.memory_space<vmem>>, vector<96x128xf32>
    %2 = vector.extract_strided_slice %1 {offsets = [32, 0], sizes = [32, 128], strides = [1, 1]} : vector<96x128xf32> to vector<32x128xf32>
    %3 = arith.truncf %0 : vector<2x32xf32> to vector<2x32xbf16>
    %4 = arith.truncf %2 : vector<32x128xf32> to vector<32x128xbf16>
    %cst = arith.constant dense<0.000000e+00> : vector<2x128xf32>
    %5 = tpu.matmul %3, %4, %cst {dimension_numbers = #tpu.dot_dimension_numbers<[1], [0], [0], [1], [0, 0, 1, 1], [], []>} : vector<2x32xbf16>, vector<32x128xbf16>, vector<2x128xf32> -> vector<2x128xf32>
    %c0_3 = arith.constant 0 : index
    %c0_4 = arith.constant 0 : index
    %6 = vector.load %arg2[%c0_3, %c0_4] : memref<1x128xf32, #tpu.memory_space<vmem>>, vector<1x128xf32>
    %7 = vector.broadcast %6 : vector<1x128xf32> to vector<2x128xf32>
    %8 = arith.addf %5, %7 : vector<2x128xf32>
    %c0_5 = arith.constant 0 : index
    %c0_6 = arith.constant 0 : index
    %9 = vector.load %arg3[%c0_5, %c0_6] : memref<2x128xf32, #tpu.memory_space<vmem>>, vector<2x128xf32>
    tpu.vector_store %arg3[%c0_5, %c0_6], %8 {strides = array<i32>} : memref<2x128xf32, #tpu.memory_space<vmem>>, vector<2x128xf32>,
    return
  }
}

module attributes {stable_mosaic.version = 11 : i64} {
  func.func @kernel(%arg0: memref<16x64xf32, #tpu.memory_space<vmem>>, %arg1: memref<192x16xf32, #tpu.memory_space<vmem>>, %arg2: memref<1x16xf32, #tpu.memory_space<vmem>>, %arg3: memref<1x16xf32, #tpu.memory_space<vmem>>, %arg4: memref<1x16xf32, #tpu.memory_space<vmem>>, %arg5: memref<48x128xf32, #tpu.memory_space<vmem>>, %arg6: memref<64x128xf32, #tpu.memory_space<vmem>>, %arg7: memref<1x128xf32, #tpu.memory_space<vmem>>, %arg8: memref<16x128xf32, #tpu.memory_space<vmem>>) attributes {dimension_semantics = [], scalar_prefetch = 0 : i64, scratch_operands = 0 : i64, tpu.core_type = #tpu.core_type<tc>} {
    %c0 = arith.constant 0 : index
    %c0_0 = arith.constant 0 : index
    %0 = vector.load %arg0[%c0, %c0_0] : memref<16x64xf32, #tpu.memory_space<vmem>>, vector<16x64xf32>
    %1 = tpu.iota {dimensions = array<i32: 0>} : vector<16x1xi32>
    %c8_i32 = arith.constant 8 : i32
    %c0_i32 = arith.constant 0 : i32
    %2 = arith.cmpi eq, %c8_i32, %c0_i32 : i32
    %c1_i32 = arith.constant 1 : i32
    %3 = arith.select %2, %c1_i32, %c8_i32 : i32
    %4 = vector.broadcast %3 : i32 to vector<16x1xi32>
    %5 = arith.remsi %1, %4 : vector<16x1xi32>
    %c0_i32_1 = arith.constant 0 : i32
    %6 = vector.broadcast %c0_i32_1 : i32 to vector<16x1xi32>
    %7 = arith.cmpi ne, %5, %6 : vector<16x1xi32>
    %c0_i32_2 = arith.constant 0 : i32
    %8 = vector.broadcast %c0_i32_2 : i32 to vector<16x1xi32>
    %9 = arith.cmpi slt, %5, %8 : vector<16x1xi32>
    %c0_i32_3 = arith.constant 0 : i32
    %10 = arith.cmpi slt, %3, %c0_i32_3 : i32
    %11 = vector.broadcast %10 : i1 to vector<16x1xi1>
    %12 = vector.broadcast %11 : vector<16x1xi1> to vector<16x1xi1>
    %13 = arith.xori %9, %12 : vector<16x1xi1>
    %14 = arith.andi %13, %7 : vector<16x1xi1>
    %15 = vector.broadcast %3 : i32 to vector<16x1xi32>
    %16 = arith.addi %5, %15 : vector<16x1xi32>
    %17 = arith.select %14, %16, %5 : vector<16x1xi1>, vector<16x1xi32>
    %c0_i32_4 = arith.constant 0 : i32
    %18 = vector.broadcast %c0_i32_4 : i32 to vector<16x1xi32>
    %19 = arith.cmpi ne, %17, %18 : vector<16x1xi32>
    %20 = arith.extui %19 : vector<16x1xi1> to vector<16x1xi32>
    %21 = arith.sitofp %20 : vector<16x1xi32> to vector<16x1xf32>
    %c8_i32_5 = arith.constant 8 : i32
    %c0_i32_6 = arith.constant 0 : i32
    %22 = arith.cmpi eq, %c8_i32_5, %c0_i32_6 : i32
    %c1_i32_7 = arith.constant 1 : i32
    %23 = arith.select %22, %c1_i32_7, %c8_i32_5 : i32
    %24 = vector.broadcast %23 : i32 to vector<16x1xi32>
    %25 = arith.remsi %1, %24 : vector<16x1xi32>
    %c0_i32_8 = arith.constant 0 : i32
    %26 = vector.broadcast %c0_i32_8 : i32 to vector<16x1xi32>
    %27 = arith.cmpi ne, %25, %26 : vector<16x1xi32>
    %c0_i32_9 = arith.constant 0 : i32
    %28 = vector.broadcast %c0_i32_9 : i32 to vector<16x1xi32>
    %29 = arith.cmpi slt, %25, %28 : vector<16x1xi32>
    %c0_i32_10 = arith.constant 0 : i32
    %30 = arith.cmpi slt, %23, %c0_i32_10 : i32
    %31 = vector.broadcast %30 : i1 to vector<16x1xi1>
    %32 = vector.broadcast %31 : vector<16x1xi1> to vector<16x1xi1>
    %33 = arith.xori %29, %32 : vector<16x1xi1>
    %34 = arith.andi %33, %27 : vector<16x1xi1>
    %35 = vector.broadcast %23 : i32 to vector<16x1xi32>
    %36 = arith.addi %25, %35 : vector<16x1xi32>
    %37 = arith.select %34, %36, %25 : vector<16x1xi1>, vector<16x1xi32>
    %c7_i32 = arith.constant 7 : i32
    %38 = vector.broadcast %c7_i32 : i32 to vector<16x1xi32>
    %39 = arith.cmpi ne, %37, %38 : vector<16x1xi32>
    %40 = arith.extui %39 : vector<16x1xi1> to vector<16x1xi32>
    %41 = arith.sitofp %40 : vector<16x1xi32> to vector<16x1xf32>
    %c0_11 = arith.constant 0 : index
    %c0_12 = arith.constant 0 : index
    %42 = vector.load %arg1[%c0_11, %c0_12] : memref<192x16xf32, #tpu.memory_space<vmem>>, vector<192x16xf32>
    %c1_i32_13 = arith.constant 1 : i32
    %43 = tpu.dynamic_rotate %0 by %c1_i32_13 dim 0 : vector<16x64xf32>, i32 -> vector<16x64xf32>
    %44 = vector.broadcast %21 : vector<16x1xf32> to vector<16x64xf32>
    %45 = arith.mulf %43, %44 : vector<16x64xf32>
    %46 = vector.extract_strided_slice %42 {offsets = [0, 0], sizes = [64, 16], strides = [1, 1]} : vector<192x16xf32> to vector<64x16xf32>
    %47 = arith.truncf %45 : vector<16x64xf32> to vector<16x64xbf16>
    %48 = arith.truncf %46 : vector<64x16xf32> to vector<64x16xbf16>
    %cst = arith.constant dense<0.000000e+00> : vector<16x16xf32>
    %49 = tpu.matmul %47, %48, %cst {dimension_numbers = #tpu.dot_dimension_numbers<[1], [0], [0], [1], [0, 0, 1, 1], [], []>} : vector<16x64xbf16>, vector<64x16xbf16>, vector<16x16xf32> -> vector<16x16xf32>
    %50 = vector.extract_strided_slice %42 {offsets = [64, 0], sizes = [64, 16], strides = [1, 1]} : vector<192x16xf32> to vector<64x16xf32>
    %51 = arith.truncf %0 : vector<16x64xf32> to vector<16x64xbf16>
    %52 = arith.truncf %50 : vector<64x16xf32> to vector<64x16xbf16>
    %cst_14 = arith.constant dense<0.000000e+00> : vector<16x16xf32>
    %53 = tpu.matmul %51, %52, %cst_14 {dimension_numbers = #tpu.dot_dimension_numbers<[1], [0], [0], [1], [0, 0, 1, 1], [], []>} : vector<16x64xbf16>, vector<64x16xbf16>, vector<16x16xf32> -> vector<16x16xf32>
    %54 = arith.addf %49, %53 : vector<16x16xf32>
    %c15_i32 = arith.constant 15 : i32
    %55 = tpu.dynamic_rotate %0 by %c15_i32 dim 0 : vector<16x64xf32>, i32 -> vector<16x64xf32>
    %56 = vector.broadcast %41 : vector<16x1xf32> to vector<16x64xf32>
    %57 = arith.mulf %55, %56 : vector<16x64xf32>
    %58 = vector.extract_strided_slice %42 {offsets = [128, 0], sizes = [64, 16], strides = [1, 1]} : vector<192x16xf32> to vector<64x16xf32>
    %59 = arith.truncf %57 : vector<16x64xf32> to vector<16x64xbf16>
    %60 = arith.truncf %58 : vector<64x16xf32> to vector<64x16xbf16>
    %cst_15 = arith.constant dense<0.000000e+00> : vector<16x16xf32>
    %61 = tpu.matmul %59, %60, %cst_15 {dimension_numbers = #tpu.dot_dimension_numbers<[1], [0], [0], [1], [0, 0, 1, 1], [], []>} : vector<16x64xbf16>, vector<64x16xbf16>, vector<16x16xf32> -> vector<16x16xf32>
    %62 = arith.addf %54, %61 : vector<16x16xf32>
    %c0_16 = arith.constant 0 : index
    %c0_17 = arith.constant 0 : index
    %63 = vector.load %arg2[%c0_16, %c0_17] : memref<1x16xf32, #tpu.memory_space<vmem>>, vector<1x16xf32>
    %64 = vector.broadcast %63 : vector<1x16xf32> to vector<16x16xf32>
    %65 = arith.addf %62, %64 : vector<16x16xf32>
    %c0_18 = arith.constant 0 : index
    %c0_19 = arith.constant 0 : index
    %66 = vector.load %arg3[%c0_18, %c0_19] : memref<1x16xf32, #tpu.memory_space<vmem>>, vector<1x16xf32>
    %c0_20 = arith.constant 0 : index
    %c0_21 = arith.constant 0 : index
    %67 = vector.load %arg4[%c0_20, %c0_21] : memref<1x16xf32, #tpu.memory_space<vmem>>, vector<1x16xf32>
    %cst_22 = arith.constant dense<0.000000e+00> : vector<16xf32>
    %68 = vector.multi_reduction <add>, %65, %cst_22 [0] : vector<16x16xf32> to vector<16xf32>
    %69 = vector.shape_cast %68 : vector<16xf32> to vector<1x16xf32>
    %cst_23 = arith.constant 1.600000e+01 : f32
    %70 = vector.broadcast %cst_23 : f32 to vector<1x16xf32>
    %71 = arith.divf %69, %70 : vector<1x16xf32>
    %72 = vector.broadcast %71 : vector<1x16xf32> to vector<16x16xf32>
    %73 = arith.subf %65, %72 : vector<16x16xf32>
    %74 = arith.mulf %73, %73 : vector<16x16xf32>
    %cst_24 = arith.constant dense<0.000000e+00> : vector<16xf32>
    %75 = vector.multi_reduction <add>, %74, %cst_24 [0] : vector<16x16xf32> to vector<16xf32>
    %76 = vector.shape_cast %75 : vector<16xf32> to vector<1x16xf32>
    %cst_25 = arith.constant 1.600000e+01 : f32
    %77 = vector.broadcast %cst_25 : f32 to vector<1x16xf32>
    %78 = arith.divf %76, %77 : vector<1x16xf32>
    %cst_26 = arith.constant 9.99999974E-6 : f32
    %79 = vector.broadcast %cst_26 : f32 to vector<1x16xf32>
    %80 = arith.addf %78, %79 : vector<1x16xf32>
    %81 = math.rsqrt %80 : vector<1x16xf32>
    %82 = vector.broadcast %81 : vector<1x16xf32> to vector<16x16xf32>
    %83 = arith.mulf %73, %82 : vector<16x16xf32>
    %84 = vector.broadcast %66 : vector<1x16xf32> to vector<16x16xf32>
    %85 = arith.mulf %83, %84 : vector<16x16xf32>
    %86 = vector.broadcast %67 : vector<1x16xf32> to vector<16x16xf32>
    %87 = arith.addf %85, %86 : vector<16x16xf32>
    %cst_27 = arith.constant 0.000000e+00 : f32
    %88 = vector.broadcast %cst_27 : f32 to vector<16x16xf32>
    %89 = arith.maximumf %87, %88 : vector<16x16xf32>
    %c0_28 = arith.constant 0 : index
    %c0_29 = arith.constant 0 : index
    %90 = vector.load %arg5[%c0_28, %c0_29] : memref<48x128xf32, #tpu.memory_space<vmem>>, vector<48x128xf32>
    %c1_i32_30 = arith.constant 1 : i32
    %91 = tpu.dynamic_rotate %89 by %c1_i32_30 dim 0 : vector<16x16xf32>, i32 -> vector<16x16xf32>
    %92 = vector.broadcast %21 : vector<16x1xf32> to vector<16x16xf32>
    %93 = arith.mulf %91, %92 : vector<16x16xf32>
    %94 = vector.extract_strided_slice %90 {offsets = [0, 0], sizes = [16, 128], strides = [1, 1]} : vector<48x128xf32> to vector<16x128xf32>
    %95 = arith.truncf %93 : vector<16x16xf32> to vector<16x16xbf16>
    %96 = arith.truncf %94 : vector<16x128xf32> to vector<16x128xbf16>
    %cst_31 = arith.constant dense<0.000000e+00> : vector<16x128xf32>
    %97 = tpu.matmul %95, %96, %cst_31 {dimension_numbers = #tpu.dot_dimension_numbers<[1], [0], [0], [1], [0, 0, 1, 1], [], []>} : vector<16x16xbf16>, vector<16x128xbf16>, vector<16x128xf32> -> vector<16x128xf32>
    %98 = vector.extract_strided_slice %90 {offsets = [16, 0], sizes = [16, 128], strides = [1, 1]} : vector<48x128xf32> to vector<16x128xf32>
    %99 = arith.truncf %89 : vector<16x16xf32> to vector<16x16xbf16>
    %100 = arith.truncf %98 : vector<16x128xf32> to vector<16x128xbf16>
    %cst_32 = arith.constant dense<0.000000e+00> : vector<16x128xf32>
    %101 = tpu.matmul %99, %100, %cst_32 {dimension_numbers = #tpu.dot_dimension_numbers<[1], [0], [0], [1], [0, 0, 1, 1], [], []>} : vector<16x16xbf16>, vector<16x128xbf16>, vector<16x128xf32> -> vector<16x128xf32>
    %102 = arith.addf %97, %101 : vector<16x128xf32>
    %c15_i32_33 = arith.constant 15 : i32
    %103 = tpu.dynamic_rotate %89 by %c15_i32_33 dim 0 : vector<16x16xf32>, i32 -> vector<16x16xf32>
    %104 = vector.broadcast %41 : vector<16x1xf32> to vector<16x16xf32>
    %105 = arith.mulf %103, %104 : vector<16x16xf32>
    %106 = vector.extract_strided_slice %90 {offsets = [32, 0], sizes = [16, 128], strides = [1, 1]} : vector<48x128xf32> to vector<16x128xf32>
    %107 = arith.truncf %105 : vector<16x16xf32> to vector<16x16xbf16>
    %108 = arith.truncf %106 : vector<16x128xf32> to vector<16x128xbf16>
    %cst_34 = arith.constant dense<0.000000e+00> : vector<16x128xf32>
    %109 = tpu.matmul %107, %108, %cst_34 {dimension_numbers = #tpu.dot_dimension_numbers<[1], [0], [0], [1], [0, 0, 1, 1], [], []>} : vector<16x16xbf16>, vector<16x128xbf16>, vector<16x128xf32> -> vector<16x128xf32>
    %110 = arith.addf %102, %109 : vector<16x128xf32>
    %c0_35 = arith.constant 0 : index
    %c0_36 = arith.constant 0 : index
    %111 = vector.load %arg6[%c0_35, %c0_36] : memref<64x128xf32, #tpu.memory_space<vmem>>, vector<64x128xf32>
    %112 = arith.truncf %0 : vector<16x64xf32> to vector<16x64xbf16>
    %113 = arith.truncf %111 : vector<64x128xf32> to vector<64x128xbf16>
    %cst_37 = arith.constant dense<0.000000e+00> : vector<16x128xf32>
    %114 = tpu.matmul %112, %113, %cst_37 {dimension_numbers = #tpu.dot_dimension_numbers<[1], [0], [0], [1], [0, 0, 1, 1], [], []>} : vector<16x64xbf16>, vector<64x128xbf16>, vector<16x128xf32> -> vector<16x128xf32>
    %115 = arith.addf %110, %114 : vector<16x128xf32>
    %c0_38 = arith.constant 0 : index
    %c0_39 = arith.constant 0 : index
    %116 = vector.load %arg7[%c0_38, %c0_39] : memref<1x128xf32, #tpu.memory_space<vmem>>, vector<1x128xf32>
    %117 = vector.broadcast %116 : vector<1x128xf32> to vector<16x128xf32>
    %118 = arith.addf %115, %117 : vector<16x128xf32>
    %c0_40 = arith.constant 0 : index
    %c0_41 = arith.constant 0 : index
    %119 = vector.load %arg8[%c0_40, %c0_41] : memref<16x128xf32, #tpu.memory_space<vmem>>, vector<16x128xf32>
    tpu.vector_store %arg8[%c0_40, %c0_41], %118 {strides = array<i32>} : memref<16x128xf32, #tpu.memory_space<vmem>>, vector<16x128xf32>,
    return
  }
}

module attributes {stable_mosaic.version = 11 : i64} {
  func.func @kernel(%arg0: memref<8x32xf32, #tpu.memory_space<vmem>>, %arg1: memref<96x8xf32, #tpu.memory_space<vmem>>, %arg2: memref<1x8xf32, #tpu.memory_space<vmem>>, %arg3: memref<1x8xf32, #tpu.memory_space<vmem>>, %arg4: memref<1x8xf32, #tpu.memory_space<vmem>>, %arg5: memref<24x128xf32, #tpu.memory_space<vmem>>, %arg6: memref<32x128xf32, #tpu.memory_space<vmem>>, %arg7: memref<1x128xf32, #tpu.memory_space<vmem>>, %arg8: memref<8x128xf32, #tpu.memory_space<vmem>>) attributes {dimension_semantics = [], scalar_prefetch = 0 : i64, scratch_operands = 0 : i64, tpu.core_type = #tpu.core_type<tc>} {
    %c0 = arith.constant 0 : index
    %c0_0 = arith.constant 0 : index
    %0 = vector.load %arg0[%c0, %c0_0] : memref<8x32xf32, #tpu.memory_space<vmem>>, vector<8x32xf32>
    %1 = tpu.iota {dimensions = array<i32: 0>} : vector<8x1xi32>
    %c4_i32 = arith.constant 4 : i32
    %c0_i32 = arith.constant 0 : i32
    %2 = arith.cmpi eq, %c4_i32, %c0_i32 : i32
    %c1_i32 = arith.constant 1 : i32
    %3 = arith.select %2, %c1_i32, %c4_i32 : i32
    %4 = vector.broadcast %3 : i32 to vector<8x1xi32>
    %5 = arith.remsi %1, %4 : vector<8x1xi32>
    %c0_i32_1 = arith.constant 0 : i32
    %6 = vector.broadcast %c0_i32_1 : i32 to vector<8x1xi32>
    %7 = arith.cmpi ne, %5, %6 : vector<8x1xi32>
    %c0_i32_2 = arith.constant 0 : i32
    %8 = vector.broadcast %c0_i32_2 : i32 to vector<8x1xi32>
    %9 = arith.cmpi slt, %5, %8 : vector<8x1xi32>
    %c0_i32_3 = arith.constant 0 : i32
    %10 = arith.cmpi slt, %3, %c0_i32_3 : i32
    %11 = vector.broadcast %10 : i1 to vector<8x1xi1>
    %12 = vector.broadcast %11 : vector<8x1xi1> to vector<8x1xi1>
    %13 = arith.xori %9, %12 : vector<8x1xi1>
    %14 = arith.andi %13, %7 : vector<8x1xi1>
    %15 = vector.broadcast %3 : i32 to vector<8x1xi32>
    %16 = arith.addi %5, %15 : vector<8x1xi32>
    %17 = arith.select %14, %16, %5 : vector<8x1xi1>, vector<8x1xi32>
    %c0_i32_4 = arith.constant 0 : i32
    %18 = vector.broadcast %c0_i32_4 : i32 to vector<8x1xi32>
    %19 = arith.cmpi ne, %17, %18 : vector<8x1xi32>
    %20 = arith.extui %19 : vector<8x1xi1> to vector<8x1xi32>
    %21 = arith.sitofp %20 : vector<8x1xi32> to vector<8x1xf32>
    %c4_i32_5 = arith.constant 4 : i32
    %c0_i32_6 = arith.constant 0 : i32
    %22 = arith.cmpi eq, %c4_i32_5, %c0_i32_6 : i32
    %c1_i32_7 = arith.constant 1 : i32
    %23 = arith.select %22, %c1_i32_7, %c4_i32_5 : i32
    %24 = vector.broadcast %23 : i32 to vector<8x1xi32>
    %25 = arith.remsi %1, %24 : vector<8x1xi32>
    %c0_i32_8 = arith.constant 0 : i32
    %26 = vector.broadcast %c0_i32_8 : i32 to vector<8x1xi32>
    %27 = arith.cmpi ne, %25, %26 : vector<8x1xi32>
    %c0_i32_9 = arith.constant 0 : i32
    %28 = vector.broadcast %c0_i32_9 : i32 to vector<8x1xi32>
    %29 = arith.cmpi slt, %25, %28 : vector<8x1xi32>
    %c0_i32_10 = arith.constant 0 : i32
    %30 = arith.cmpi slt, %23, %c0_i32_10 : i32
    %31 = vector.broadcast %30 : i1 to vector<8x1xi1>
    %32 = vector.broadcast %31 : vector<8x1xi1> to vector<8x1xi1>
    %33 = arith.xori %29, %32 : vector<8x1xi1>
    %34 = arith.andi %33, %27 : vector<8x1xi1>
    %35 = vector.broadcast %23 : i32 to vector<8x1xi32>
    %36 = arith.addi %25, %35 : vector<8x1xi32>
    %37 = arith.select %34, %36, %25 : vector<8x1xi1>, vector<8x1xi32>
    %c3_i32 = arith.constant 3 : i32
    %38 = vector.broadcast %c3_i32 : i32 to vector<8x1xi32>
    %39 = arith.cmpi ne, %37, %38 : vector<8x1xi32>
    %40 = arith.extui %39 : vector<8x1xi1> to vector<8x1xi32>
    %41 = arith.sitofp %40 : vector<8x1xi32> to vector<8x1xf32>
    %c0_11 = arith.constant 0 : index
    %c0_12 = arith.constant 0 : index
    %42 = vector.load %arg1[%c0_11, %c0_12] : memref<96x8xf32, #tpu.memory_space<vmem>>, vector<96x8xf32>
    %c1_i32_13 = arith.constant 1 : i32
    %43 = tpu.dynamic_rotate %0 by %c1_i32_13 dim 0 : vector<8x32xf32>, i32 -> vector<8x32xf32>
    %44 = vector.broadcast %21 : vector<8x1xf32> to vector<8x32xf32>
    %45 = arith.mulf %43, %44 : vector<8x32xf32>
    %46 = vector.extract_strided_slice %42 {offsets = [0, 0], sizes = [32, 8], strides = [1, 1]} : vector<96x8xf32> to vector<32x8xf32>
    %47 = arith.truncf %45 : vector<8x32xf32> to vector<8x32xbf16>
    %48 = arith.truncf %46 : vector<32x8xf32> to vector<32x8xbf16>
    %cst = arith.constant dense<0.000000e+00> : vector<8x8xf32>
    %49 = tpu.matmul %47, %48, %cst {dimension_numbers = #tpu.dot_dimension_numbers<[1], [0], [0], [1], [0, 0, 1, 1], [], []>} : vector<8x32xbf16>, vector<32x8xbf16>, vector<8x8xf32> -> vector<8x8xf32>
    %50 = vector.extract_strided_slice %42 {offsets = [32, 0], sizes = [32, 8], strides = [1, 1]} : vector<96x8xf32> to vector<32x8xf32>
    %51 = arith.truncf %0 : vector<8x32xf32> to vector<8x32xbf16>
    %52 = arith.truncf %50 : vector<32x8xf32> to vector<32x8xbf16>
    %cst_14 = arith.constant dense<0.000000e+00> : vector<8x8xf32>
    %53 = tpu.matmul %51, %52, %cst_14 {dimension_numbers = #tpu.dot_dimension_numbers<[1], [0], [0], [1], [0, 0, 1, 1], [], []>} : vector<8x32xbf16>, vector<32x8xbf16>, vector<8x8xf32> -> vector<8x8xf32>
    %54 = arith.addf %49, %53 : vector<8x8xf32>
    %c7_i32 = arith.constant 7 : i32
    %55 = tpu.dynamic_rotate %0 by %c7_i32 dim 0 : vector<8x32xf32>, i32 -> vector<8x32xf32>
    %56 = vector.broadcast %41 : vector<8x1xf32> to vector<8x32xf32>
    %57 = arith.mulf %55, %56 : vector<8x32xf32>
    %58 = vector.extract_strided_slice %42 {offsets = [64, 0], sizes = [32, 8], strides = [1, 1]} : vector<96x8xf32> to vector<32x8xf32>
    %59 = arith.truncf %57 : vector<8x32xf32> to vector<8x32xbf16>
    %60 = arith.truncf %58 : vector<32x8xf32> to vector<32x8xbf16>
    %cst_15 = arith.constant dense<0.000000e+00> : vector<8x8xf32>
    %61 = tpu.matmul %59, %60, %cst_15 {dimension_numbers = #tpu.dot_dimension_numbers<[1], [0], [0], [1], [0, 0, 1, 1], [], []>} : vector<8x32xbf16>, vector<32x8xbf16>, vector<8x8xf32> -> vector<8x8xf32>
    %62 = arith.addf %54, %61 : vector<8x8xf32>
    %c0_16 = arith.constant 0 : index
    %c0_17 = arith.constant 0 : index
    %63 = vector.load %arg2[%c0_16, %c0_17] : memref<1x8xf32, #tpu.memory_space<vmem>>, vector<1x8xf32>
    %64 = vector.broadcast %63 : vector<1x8xf32> to vector<8x8xf32>
    %65 = arith.addf %62, %64 : vector<8x8xf32>
    %c0_18 = arith.constant 0 : index
    %c0_19 = arith.constant 0 : index
    %66 = vector.load %arg3[%c0_18, %c0_19] : memref<1x8xf32, #tpu.memory_space<vmem>>, vector<1x8xf32>
    %c0_20 = arith.constant 0 : index
    %c0_21 = arith.constant 0 : index
    %67 = vector.load %arg4[%c0_20, %c0_21] : memref<1x8xf32, #tpu.memory_space<vmem>>, vector<1x8xf32>
    %cst_22 = arith.constant dense<0.000000e+00> : vector<8xf32>
    %68 = vector.multi_reduction <add>, %65, %cst_22 [0] : vector<8x8xf32> to vector<8xf32>
    %69 = vector.shape_cast %68 : vector<8xf32> to vector<1x8xf32>
    %cst_23 = arith.constant 8.000000e+00 : f32
    %70 = vector.broadcast %cst_23 : f32 to vector<1x8xf32>
    %71 = arith.divf %69, %70 : vector<1x8xf32>
    %72 = vector.broadcast %71 : vector<1x8xf32> to vector<8x8xf32>
    %73 = arith.subf %65, %72 : vector<8x8xf32>
    %74 = arith.mulf %73, %73 : vector<8x8xf32>
    %cst_24 = arith.constant dense<0.000000e+00> : vector<8xf32>
    %75 = vector.multi_reduction <add>, %74, %cst_24 [0] : vector<8x8xf32> to vector<8xf32>
    %76 = vector.shape_cast %75 : vector<8xf32> to vector<1x8xf32>
    %cst_25 = arith.constant 8.000000e+00 : f32
    %77 = vector.broadcast %cst_25 : f32 to vector<1x8xf32>
    %78 = arith.divf %76, %77 : vector<1x8xf32>
    %cst_26 = arith.constant 9.99999974E-6 : f32
    %79 = vector.broadcast %cst_26 : f32 to vector<1x8xf32>
    %80 = arith.addf %78, %79 : vector<1x8xf32>
    %81 = math.rsqrt %80 : vector<1x8xf32>
    %82 = vector.broadcast %81 : vector<1x8xf32> to vector<8x8xf32>
    %83 = arith.mulf %73, %82 : vector<8x8xf32>
    %84 = vector.broadcast %66 : vector<1x8xf32> to vector<8x8xf32>
    %85 = arith.mulf %83, %84 : vector<8x8xf32>
    %86 = vector.broadcast %67 : vector<1x8xf32> to vector<8x8xf32>
    %87 = arith.addf %85, %86 : vector<8x8xf32>
    %cst_27 = arith.constant 0.000000e+00 : f32
    %88 = vector.broadcast %cst_27 : f32 to vector<8x8xf32>
    %89 = arith.maximumf %87, %88 : vector<8x8xf32>
    %c0_28 = arith.constant 0 : index
    %c0_29 = arith.constant 0 : index
    %90 = vector.load %arg5[%c0_28, %c0_29] : memref<24x128xf32, #tpu.memory_space<vmem>>, vector<24x128xf32>
    %c1_i32_30 = arith.constant 1 : i32
    %91 = tpu.dynamic_rotate %89 by %c1_i32_30 dim 0 : vector<8x8xf32>, i32 -> vector<8x8xf32>
    %92 = vector.broadcast %21 : vector<8x1xf32> to vector<8x8xf32>
    %93 = arith.mulf %91, %92 : vector<8x8xf32>
    %94 = vector.extract_strided_slice %90 {offsets = [0, 0], sizes = [8, 128], strides = [1, 1]} : vector<24x128xf32> to vector<8x128xf32>
    %95 = arith.truncf %93 : vector<8x8xf32> to vector<8x8xbf16>
    %96 = arith.truncf %94 : vector<8x128xf32> to vector<8x128xbf16>
    %cst_31 = arith.constant dense<0.000000e+00> : vector<8x128xf32>
    %97 = tpu.matmul %95, %96, %cst_31 {dimension_numbers = #tpu.dot_dimension_numbers<[1], [0], [0], [1], [0, 0, 1, 1], [], []>} : vector<8x8xbf16>, vector<8x128xbf16>, vector<8x128xf32> -> vector<8x128xf32>
    %98 = vector.extract_strided_slice %90 {offsets = [8, 0], sizes = [8, 128], strides = [1, 1]} : vector<24x128xf32> to vector<8x128xf32>
    %99 = arith.truncf %89 : vector<8x8xf32> to vector<8x8xbf16>
    %100 = arith.truncf %98 : vector<8x128xf32> to vector<8x128xbf16>
    %cst_32 = arith.constant dense<0.000000e+00> : vector<8x128xf32>
    %101 = tpu.matmul %99, %100, %cst_32 {dimension_numbers = #tpu.dot_dimension_numbers<[1], [0], [0], [1], [0, 0, 1, 1], [], []>} : vector<8x8xbf16>, vector<8x128xbf16>, vector<8x128xf32> -> vector<8x128xf32>
    %102 = arith.addf %97, %101 : vector<8x128xf32>
    %c7_i32_33 = arith.constant 7 : i32
    %103 = tpu.dynamic_rotate %89 by %c7_i32_33 dim 0 : vector<8x8xf32>, i32 -> vector<8x8xf32>
    %104 = vector.broadcast %41 : vector<8x1xf32> to vector<8x8xf32>
    %105 = arith.mulf %103, %104 : vector<8x8xf32>
    %106 = vector.extract_strided_slice %90 {offsets = [16, 0], sizes = [8, 128], strides = [1, 1]} : vector<24x128xf32> to vector<8x128xf32>
    %107 = arith.truncf %105 : vector<8x8xf32> to vector<8x8xbf16>
    %108 = arith.truncf %106 : vector<8x128xf32> to vector<8x128xbf16>
    %cst_34 = arith.constant dense<0.000000e+00> : vector<8x128xf32>
    %109 = tpu.matmul %107, %108, %cst_34 {dimension_numbers = #tpu.dot_dimension_numbers<[1], [0], [0], [1], [0, 0, 1, 1], [], []>} : vector<8x8xbf16>, vector<8x128xbf16>, vector<8x128xf32> -> vector<8x128xf32>
    %110 = arith.addf %102, %109 : vector<8x128xf32>
    %c0_35 = arith.constant 0 : index
    %c0_36 = arith.constant 0 : index
    %111 = vector.load %arg6[%c0_35, %c0_36] : memref<32x128xf32, #tpu.memory_space<vmem>>, vector<32x128xf32>
    %112 = arith.truncf %0 : vector<8x32xf32> to vector<8x32xbf16>
    %113 = arith.truncf %111 : vector<32x128xf32> to vector<32x128xbf16>
    %cst_37 = arith.constant dense<0.000000e+00> : vector<8x128xf32>
    %114 = tpu.matmul %112, %113, %cst_37 {dimension_numbers = #tpu.dot_dimension_numbers<[1], [0], [0], [1], [0, 0, 1, 1], [], []>} : vector<8x32xbf16>, vector<32x128xbf16>, vector<8x128xf32> -> vector<8x128xf32>
    %115 = arith.addf %110, %114 : vector<8x128xf32>
    %c0_38 = arith.constant 0 : index
    %c0_39 = arith.constant 0 : index
    %116 = vector.load %arg7[%c0_38, %c0_39] : memref<1x128xf32, #tpu.memory_space<vmem>>, vector<1x128xf32>
    %117 = vector.broadcast %116 : vector<1x128xf32> to vector<8x128xf32>
    %118 = arith.addf %115, %117 : vector<8x128xf32>
    %c0_40 = arith.constant 0 : index
    %c0_41 = arith.constant 0 : index
    %119 = vector.load %arg8[%c0_40, %c0_41] : memref<8x128xf32, #tpu.memory_space<vmem>>, vector<8x128xf32>
    tpu.vector_store %arg8[%c0_40, %c0_41], %118 {strides = array<i32>} : memref<8x128xf32, #tpu.memory_space<vmem>>, vector<8x128xf32>,
    return
  }
}

module attributes {stable_mosaic.version = 11 : i64} {
  func.func @kernel(%arg0: memref<2x64xf32, #tpu.memory_space<vmem>>, %arg1: memref<64x128xf32, #tpu.memory_space<vmem>>, %arg2: memref<1x128xf32, #tpu.memory_space<vmem>>, %arg3: memref<2x8xf32, #tpu.memory_space<vmem>>, %arg4: memref<2x128xf32, #tpu.memory_space<vmem>>, %arg5: memref<2x8xf32, #tpu.memory_space<vmem>>) attributes {dimension_semantics = [], scalar_prefetch = 0 : i64, scratch_operands = 0 : i64, tpu.core_type = #tpu.core_type<tc>} {
    %c0 = arith.constant 0 : index
    %c0_0 = arith.constant 0 : index
    %0 = vector.load %arg0[%c0, %c0_0] : memref<2x64xf32, #tpu.memory_space<vmem>>, vector<2x64xf32>
    %c0_1 = arith.constant 0 : index
    %c0_2 = arith.constant 0 : index
    %1 = vector.load %arg1[%c0_1, %c0_2] : memref<64x128xf32, #tpu.memory_space<vmem>>, vector<64x128xf32>
    %2 = arith.truncf %0 : vector<2x64xf32> to vector<2x64xbf16>
    %3 = arith.truncf %1 : vector<64x128xf32> to vector<64x128xbf16>
    %cst = arith.constant dense<0.000000e+00> : vector<2x128xf32>
    %4 = tpu.matmul %2, %3, %cst {dimension_numbers = #tpu.dot_dimension_numbers<[1], [0], [0], [1], [0, 0, 1, 1], [], []>} : vector<2x64xbf16>, vector<64x128xbf16>, vector<2x128xf32> -> vector<2x128xf32>
    %c0_3 = arith.constant 0 : index
    %c0_4 = arith.constant 0 : index
    %5 = vector.load %arg2[%c0_3, %c0_4] : memref<1x128xf32, #tpu.memory_space<vmem>>, vector<1x128xf32>
    %6 = vector.broadcast %5 : vector<1x128xf32> to vector<2x128xf32>
    %7 = arith.addf %4, %6 : vector<2x128xf32>
    %c0_5 = arith.constant 0 : index
    %c0_6 = arith.constant 0 : index
    %8 = vector.load %arg4[%c0_5, %c0_6] : memref<2x128xf32, #tpu.memory_space<vmem>>, vector<2x128xf32>
    tpu.vector_store %arg4[%c0_5, %c0_6], %7 {strides = array<i32>} : memref<2x128xf32, #tpu.memory_space<vmem>>, vector<2x128xf32>,
    %9 = vector.extract_strided_slice %7 {offsets = [0, 0], sizes = [2, 8], strides = [1, 1]} : vector<2x128xf32> to vector<2x8xf32>
    %10 = vector.extract_strided_slice %7 {offsets = [0, 8], sizes = [2, 8], strides = [1, 1]} : vector<2x128xf32> to vector<2x8xf32>
    %c0_7 = arith.constant 0 : index
    %c0_8 = arith.constant 0 : index
    %11 = vector.load %arg3[%c0_7, %c0_8] : memref<2x8xf32, #tpu.memory_space<vmem>>, vector<2x8xf32>
    %cst_9 = arith.constant 5.000000e-01 : f32
    %12 = vector.broadcast %cst_9 : f32 to vector<2x8xf32>
    %13 = arith.mulf %12, %10 : vector<2x8xf32>
    %14 = math.exp %13 : vector<2x8xf32>
    %15 = arith.mulf %11, %14 : vector<2x8xf32>
    %16 = arith.addf %9, %15 : vector<2x8xf32>
    %c0_10 = arith.constant 0 : index
    %c0_11 = arith.constant 0 : index
    %17 = vector.load %arg5[%c0_10, %c0_11] : memref<2x8xf32, #tpu.memory_space<vmem>>, vector<2x8xf32>
    tpu.vector_store %arg5[%c0_10, %c0_11], %16 {strides = array<i32>} : memref<2x8xf32, #tpu.memory_space<vmem>>, vector<2x8xf32>,
    return
  }
}

module attributes {stable_mosaic.version = 11 : i64} {
  func.func @kernel(%arg0: memref<2x256xf32, #tpu.memory_space<vmem>>, %arg1: memref<256x128xf32, #tpu.memory_space<vmem>>, %arg2: memref<1x128xf32, #tpu.memory_space<vmem>>, %arg3: memref<2x16xf32, #tpu.memory_space<vmem>>, %arg4: memref<2x128xf32, #tpu.memory_space<vmem>>, %arg5: memref<2x16xf32, #tpu.memory_space<vmem>>) attributes {dimension_semantics = [], scalar_prefetch = 0 : i64, scratch_operands = 0 : i64, tpu.core_type = #tpu.core_type<tc>} {
    %c0 = arith.constant 0 : index
    %c0_0 = arith.constant 0 : index
    %0 = vector.load %arg0[%c0, %c0_0] : memref<2x256xf32, #tpu.memory_space<vmem>>, vector<2x256xf32>
    %c0_1 = arith.constant 0 : index
    %c0_2 = arith.constant 0 : index
    %1 = vector.load %arg1[%c0_1, %c0_2] : memref<256x128xf32, #tpu.memory_space<vmem>>, vector<256x128xf32>
    %2 = arith.truncf %0 : vector<2x256xf32> to vector<2x256xbf16>
    %3 = arith.truncf %1 : vector<256x128xf32> to vector<256x128xbf16>
    %cst = arith.constant dense<0.000000e+00> : vector<2x128xf32>
    %4 = tpu.matmul %2, %3, %cst {dimension_numbers = #tpu.dot_dimension_numbers<[1], [0], [0], [1], [0, 0, 1, 1], [], []>} : vector<2x256xbf16>, vector<256x128xbf16>, vector<2x128xf32> -> vector<2x128xf32>
    %c0_3 = arith.constant 0 : index
    %c0_4 = arith.constant 0 : index
    %5 = vector.load %arg2[%c0_3, %c0_4] : memref<1x128xf32, #tpu.memory_space<vmem>>, vector<1x128xf32>
    %6 = vector.broadcast %5 : vector<1x128xf32> to vector<2x128xf32>
    %7 = arith.addf %4, %6 : vector<2x128xf32>
    %c0_5 = arith.constant 0 : index
    %c0_6 = arith.constant 0 : index
    %8 = vector.load %arg4[%c0_5, %c0_6] : memref<2x128xf32, #tpu.memory_space<vmem>>, vector<2x128xf32>
    tpu.vector_store %arg4[%c0_5, %c0_6], %7 {strides = array<i32>} : memref<2x128xf32, #tpu.memory_space<vmem>>, vector<2x128xf32>,
    %9 = vector.extract_strided_slice %7 {offsets = [0, 0], sizes = [2, 16], strides = [1, 1]} : vector<2x128xf32> to vector<2x16xf32>
    %10 = vector.extract_strided_slice %7 {offsets = [0, 16], sizes = [2, 16], strides = [1, 1]} : vector<2x128xf32> to vector<2x16xf32>
    %c0_7 = arith.constant 0 : index
    %c0_8 = arith.constant 0 : index
    %11 = vector.load %arg3[%c0_7, %c0_8] : memref<2x16xf32, #tpu.memory_space<vmem>>, vector<2x16xf32>
    %cst_9 = arith.constant 5.000000e-01 : f32
    %12 = vector.broadcast %cst_9 : f32 to vector<2x16xf32>
    %13 = arith.mulf %12, %10 : vector<2x16xf32>
    %14 = math.exp %13 : vector<2x16xf32>
    %15 = arith.mulf %11, %14 : vector<2x16xf32>
    %16 = arith.addf %9, %15 : vector<2x16xf32>
    %c0_10 = arith.constant 0 : index
    %c0_11 = arith.constant 0 : index
    %17 = vector.load %arg5[%c0_10, %c0_11] : memref<2x16xf32, #tpu.memory_space<vmem>>, vector<2x16xf32>
    tpu.vector_store %arg5[%c0_10, %c0_11], %16 {strides = array<i32>} : memref<2x16xf32, #tpu.memory_space<vmem>>, vector<2x16xf32>,
    return
  }
}

</mosaic_0001>

<llo_original>
// kernel: ladder_vae_forward.7
$region0: #{ladder_vae_forward.7}
  #allocation0 [shape = 'u32[]', space=smem, size = 0x4, offset = 0x4, fixed_abs, tag = 'smem constant byte address 0x4 - core index']
  #allocation1 [shape = 'u32[144,128]{1,0:T(1,128)}', space=vmem, size = 0x12000, scoped, tag = 'internal scratch']
  %s0 = inlined_call_operand.vmem [shape: f32[32,1], index: 0, kind: input, shape index: {}]
  %s1 = inlined_call_operand.vmem [shape: f32[3,32], index: 1, kind: input, shape index: {}]
  %s2 = inlined_call_operand.vmem [shape: f32[1,32], index: 2, kind: input, shape index: {}]
  %s3 = inlined_call_operand.vmem [shape: f32[1,32], index: 3, kind: input, shape index: {}]
  %s4 = inlined_call_operand.vmem [shape: f32[1,32], index: 4, kind: input, shape index: {}]
  %s5 = inlined_call_operand.vmem [shape: f32[96,128], index: 5, kind: input, shape index: {}]
  %s6 = inlined_call_operand.vmem [shape: f32[1,128], index: 6, kind: input, shape index: {}]
  %s7 = inlined_call_operand.vmem [shape: f32[1,128], index: 7, kind: input, shape index: {}]
  %s8 = inlined_call_operand.vmem [shape: f32[32,128], index: 8, kind: output, shape index: {}]
  %s9 = sld [smem:[#allocation0]]
  $region42: #{ladder_vae_forward.7} parent=0
    _
  %s11 = ssub.s32 1, %s9
  %s12 = scalar_select 0, %s11, %s9
  // Predicated region
  $region2: #{ladder_vae_forward.7} parent=0 // pred_check
    _
  $region3: #{ladder_vae_forward.7} parent=0 // pred_check_branch
    %14 = sbr.rel (0) target = $region5
  $region4: #{ladder_vae_forward.7} parent=0 // pred_region
    _
  $region5: #{ladder_vae_forward.7} parent=0 // pred_fallthru
    _
  // Predicated region
  $region6: #{ladder_vae_forward.7} parent=0 // pred_check
    _
  $region7: #{ladder_vae_forward.7} parent=0 // pred_check_branch
    %16 = sbr.rel (0) target = $region9
  $region8: #{ladder_vae_forward.7} parent=0 // pred_region
    _
  $region9: #{ladder_vae_forward.7} parent=0 // pred_fallthru
    _
  // Predicated region
  $region10: #{ladder_vae_forward.7} parent=0 // pred_check
    _
  $region11: #{ladder_vae_forward.7} parent=0 // pred_check_branch
    %18 = sbr.rel (0) target = $region13
  $region12: #{ladder_vae_forward.7} parent=0 // pred_region
    _
  $region13: #{ladder_vae_forward.7} parent=0 // pred_fallthru
    _
  // Predicated region
  $region14: #{ladder_vae_forward.7} parent=0 // pred_check
    _
  $region15: #{ladder_vae_forward.7} parent=0 // pred_check_branch
    %20 = sbr.rel (0) target = $region17
  $region16: #{ladder_vae_forward.7} parent=0 // pred_region
    _
  $region17: #{ladder_vae_forward.7} parent=0 // pred_fallthru
    _
  // Predicated region
  $region18: #{ladder_vae_forward.7} parent=0 // pred_check
    _
  $region19: #{ladder_vae_forward.7} parent=0 // pred_check_branch
    %22 = sbr.rel (0) target = $region21
  $region20: #{ladder_vae_forward.7} parent=0 // pred_region
    _
  $region21: #{ladder_vae_forward.7} parent=0 // pred_fallthru
    _
  // Predicated region
  $region22: #{ladder_vae_forward.7} parent=0 // pred_check
    _
  $region23: #{ladder_vae_forward.7} parent=0 // pred_check_branch
    %24 = sbr.rel (0) target = $region25
  $region24: #{ladder_vae_forward.7} parent=0 // pred_region
    _
  $region25: #{ladder_vae_forward.7} parent=0 // pred_fallthru
    _
  // Predicated region
  $region26: #{ladder_vae_forward.7} parent=0 // pred_check
    _
  $region27: #{ladder_vae_forward.7} parent=0 // pred_check_branch
    %26 = sbr.rel (0) target = $region29
  $region28: #{ladder_vae_forward.7} parent=0 // pred_region
    _
  $region29: #{ladder_vae_forward.7} parent=0 // pred_fallthru
    _
  // Predicated region
  $region30: #{ladder_vae_forward.7} parent=0 // pred_check
    _
  $region31: #{ladder_vae_forward.7} parent=0 // pred_check_branch
    %28 = sbr.rel (0) target = $region33
  $region32: #{ladder_vae_forward.7} parent=0 // pred_region
    _
  $region33: #{ladder_vae_forward.7} parent=0 // pred_fallthru
    _
  %v30 = vld [vmem:[%s0] sm:$0xff]
  %v31 = vld [vmem:[%s0 + $0x8] sm:$0xff]
  %v32 = vld [vmem:[%s0 + $0x10] sm:$0xff]
  %v33 = vld [vmem:[%s0 + $0x18] sm:$0xff]
  %v34 = vlaneseq
  %v35 = vshrl.u32 %v34, 7
  %v36 = vadd.s32 %v35, 8
  %v37 = vadd.s32 %v35, 16
  %v38 = vadd.s32 %v35, 24
  %vm39 = vcmp.lt.s32.totalorder %v35, 0
  %v40 = vsub.s32 0, %v35
  %v41 = vsel %vm39, %v40, %v35
  %v42 = vshrl.u32 %v41, 4
  %v43 = vand.u32 %v41, 15
  %v44 = vsub.s32 0, %v43
  %v45 = vsel %vm39, %v44, %v43
  %vm46 = vcmp.lt.s32.totalorder %v36, 0
  %v47 = vsub.s32 0, %v36
  %v48 = vsel %vm46, %v47, %v36
  %v49 = vshrl.u32 %v48, 4
  %v50 = vand.u32 %v48, 15
  %v51 = vsub.s32 0, %v50
  %v52 = vsel %vm46, %v51, %v50
  %vm53 = vcmp.lt.s32.totalorder %v37, 0
  %v54 = vsub.s32 0, %v37
  %v55 = vsel %vm53, %v54, %v37
  %v56 = vshrl.u32 %v55, 4
  %v57 = vand.u32 %v55, 15
  %v58 = vsub.s32 0, %v57
  %v59 = vsel %vm53, %v58, %v57
  %vm60 = vcmp.lt.s32.totalorder %v38, 0
  %v61 = vsub.s32 0, %v38
  %v62 = vsel %vm60, %v61, %v38
  %v63 = vshrl.u32 %v62, 4
  %v64 = vand.u32 %v62, 15
  %v65 = vsub.s32 0, %v64
  %v66 = vsel %vm60, %v65, %v64
  %vm67 = vcmp.ne.s32.totalorder %v45, 0
  %vm68 = vcmp.ne.s32.totalorder %v52, 0
  %vm69 = vcmp.ne.s32.totalorder %v59, 0
  %vm70 = vcmp.ne.s32.totalorder %v66, 0
  %vm71 = vcmp.lt.s32.totalorder %v45, 0
  %vm72 = vcmp.lt.s32.totalorder %v52, 0
  %vm73 = vcmp.lt.s32.totalorder %v59, 0
  %vm74 = vcmp.lt.s32.totalorder %v66, 0
  %vm75 = vmand %vm71, %vm67
  %vm76 = vmand %vm72, %vm68
  %vm77 = vmand %vm73, %vm69
  %vm78 = vmand %vm74, %vm70
  %v79 = vadd.s32 %v45, 16
  %v80 = vadd.s32 %v52, 16
  %v81 = vadd.s32 %v59, 16
  %v82 = vadd.s32 %v66, 16
  %v83 = vsel %vm75, %v79, %v45
  %v84 = vsel %vm76, %v80, %v52
  %v85 = vsel %vm77, %v81, %v59
  %v86 = vsel %vm78, %v82, %v66
  %vm87 = vcmp.ne.s32.totalorder %v83, 0
  %vm88 = vcmp.ne.s32.totalorder %v84, 0
  %vm89 = vcmp.ne.s32.totalorder %v85, 0
  %vm90 = vcmp.ne.s32.totalorder %v86, 0
  %v91 = vsel %vm87, 1, 0
  %v92 = vsel %vm88, 1, 0
  %v93 = vsel %vm89, 1, 0
  %v94 = vsel %vm90, 1, 0
  %v95 = vcvt.s32.f32 %v91
  %v96 = vcvt.s32.f32 %v92
  %v97 = vcvt.s32.f32 %v93
  %v98 = vcvt.s32.f32 %v94
  %vm99 = vcmp.ne.s32.totalorder %v83, 15
  %vm100 = vcmp.ne.s32.totalorder %v84, 15
  %vm101 = vcmp.ne.s32.totalorder %v85, 15
  %vm102 = vcmp.ne.s32.totalorder %v86, 15
  %v103 = vsel %vm99, 1, 0
  %v104 = vsel %vm100, 1, 0
  %v105 = vsel %vm101, 1, 0
  %v106 = vsel %vm102, 1, 0
  %v107 = vcvt.s32.f32 %v103
  %v108 = vcvt.s32.f32 %v104
  %v109 = vcvt.s32.f32 %v105
  %v110 = vcvt.s32.f32 %v106
  %v111 = vld [vmem:[%s1] sm:$0x7]
  %113 = vset.pattern.permute.xlu0 0
  %114 = vperm.xlu0 %113, %v30
  %v115 = vpop.permute.xlu0 %114
  %118 = vset.pattern.permute.xlu0 0
  %119 = vperm.xlu0 %118, %v31
  %v120 = vpop.permute.xlu0 %119
  %123 = vset.pattern.permute.xlu0 0
  %124 = vperm.xlu0 %123, %v32
  %v125 = vpop.permute.xlu0 %124
  %128 = vset.pattern.permute.xlu0 0
  %129 = vperm.xlu0 %128, %v33
  %v130 = vpop.permute.xlu0 %129
  %v132 = vlaneseq
  %v133 = vshrl.u32 %v132, 7
  %v134 = vsub.s32 0, %v133
  %v135 = vrot.slane %v111, %v134
  %v136 = vmul.f32 %v115, %v135
  %v137 = vmul.f32 %v120, %v135
  %v138 = vmul.f32 %v125, %v135
  %v139 = vmul.f32 %v130, %v135
  %v140 = vrot.slane %v136, 7
  %v141 = vrot.slane %v137, 7
  %v142 = vrot.slane %v138, 7
  %v143 = vrot.slane %v139, 7
  %vm144 = vcmp.lt.s32.totalorder %v35, 1
  %v145 = vsel %vm144, %v142, %v143
  %v146 = vsel %vm144, %v141, %v142
  %v147 = vsel %vm144, %v140, %v141
  %v148 = vsel %vm144, %v143, %v140
  %v149 = vmul.f32 %v148, %v95
  %v150 = vmul.f32 %v147, %v96
  %v151 = vmul.f32 %v146, %v97
  %v152 = vmul.f32 %v145, %v98
  %v153 = vlaneseq
  %v154 = vshrl.u32 %v153, 7
  %v155 = vsub.s32 1, %v154
  %v156 = vrot.slane %v111, %v155
  %v157 = vmul.f32 %v115, %v156
  %v158 = vmul.f32 %v120, %v156
  %v159 = vmul.f32 %v125, %v156
  %v160 = vmul.f32 %v130, %v156
  %v161 = vadd.f32 %v149, %v157
  %v162 = vadd.f32 %v150, %v158
  %v163 = vadd.f32 %v151, %v159
  %v164 = vadd.f32 %v152, %v160
  %v165 = vlaneseq
  %v166 = vshrl.u32 %v165, 7
  %v167 = vsub.s32 2, %v166
  %v168 = vrot.slane %v111, %v167
  %v169 = vmul.f32 %v115, %v168
  %v170 = vmul.f32 %v120, %v168
  %v171 = vmul.f32 %v125, %v168
  %v172 = vmul.f32 %v130, %v168
  %v173 = vrot.slane %v169, 1
  %v174 = vrot.slane %v170, 1
  %v175 = vrot.slane %v171, 1
  %v176 = vrot.slane %v172, 1
  %vm177 = vcmp.lt.s32.totalorder %v35, 7
  %v178 = vsel %vm177, %v175, %v176
  %v179 = vsel %vm177, %v174, %v175
  %v180 = vsel %vm177, %v173, %v174
  %v181 = vsel %vm177, %v176, %v173
  %v182 = vmul.f32 %v180, %v107
  %v183 = vmul.f32 %v179, %v108
  %v184 = vmul.f32 %v178, %v109
  %v185 = vmul.f32 %v181, %v110
  %v186 = vadd.f32 %v161, %v182
  %v187 = vadd.f32 %v162, %v183
  %v188 = vadd.f32 %v163, %v184
  %v189 = vadd.f32 %v164, %v185
  %v190 = vld [vmem:[%s2] sm:$0x1]
  %v192 = vlaneseq
  %v193 = vshrl.u32 %v192, 7
  %v194 = vsub.s32 0, %v193
  %v195 = vrot.slane %v190, %v194
  %v197 = vadd.f32 %v186, %v195
  %v198 = vadd.f32 %v187, %v195
  %v199 = vadd.f32 %v188, %v195
  %v200 = vadd.f32 %v189, %v195
  %v201 = vld [vmem:[%s3] sm:$0x1]
  %v202 = vld [vmem:[%s4] sm:$0x1]
  %vm203 = vcmask 261120
  %v204 = vsel %vm203, %v197, 0.0
  %v205 = vsel %vm203, %v198, 0.0
  %v206 = vadd.f32 %v204, %v205
  %v207 = vsel %vm203, %v199, 0.0
  %v208 = vadd.f32 %v206, %v207
  %v209 = vsel %vm203, %v200, 0.0
  %v210 = vadd.f32 %v208, %v209
  %v211 = vrot.slane %v210, 4
  %v212 = vadd.f32 %v210, %v211
  %v213 = vrot.slane %v212, 2
  %v214 = vadd.f32 %v212, %v213
  %v215 = vrot.slane %v214, 1
  %v216 = vadd.f32 %v214, %v215
  %v217 = vrcp.pop 32.0
  %v218 = vmul.f32 %v216, %v217
  %v219 = vsub.f32 %v197, %v218
  %v220 = vsub.f32 %v198, %v218
  %v221 = vsub.f32 %v199, %v218
  %v222 = vsub.f32 %v200, %v218
  %v223 = vmul.f32 %v219, %v219
  %v224 = vmul.f32 %v220, %v220
  %v225 = vmul.f32 %v221, %v221
  %v226 = vmul.f32 %v222, %v222
  %v227 = vsel %vm203, %v223, 0.0
  %v228 = vsel %vm203, %v224, 0.0
  %v229 = vadd.f32 %v227, %v228
  %v230 = vsel %vm203, %v225, 0.0
  %v231 = vadd.f32 %v229, %v230
  %v232 = vsel %vm203, %v226, 0.0
  %v233 = vadd.f32 %v231, %v232
  %v234 = vrot.slane %v233, 4
  %v235 = vadd.f32 %v233, %v234
  %v236 = vrot.slane %v235, 2
  %v237 = vadd.f32 %v235, %v236
  %v238 = vrot.slane %v237, 1
  %v239 = vadd.f32 %v237, %v238
  %v240 = vmul.f32 %v239, %v217
  %v241 = vadd.f32 %v240, 1e-05
  %v242 = vrsqrt.pop %v241
  %v243 = vmul.f32 %v219, %v242
  %v244 = vmul.f32 %v220, %v242
  %v245 = vmul.f32 %v221, %v242
  %v246 = vmul.f32 %v222, %v242
  %v248 = vlaneseq
  %v249 = vshrl.u32 %v248, 7
  %v250 = vsub.s32 0, %v249
  %v251 = vrot.slane %v201, %v250
  %v253 = vmul.f32 %v243, %v251
  %v254 = vmul.f32 %v244, %v251
  %v255 = vmul.f32 %v245, %v251
  %v256 = vmul.f32 %v246, %v251
  %v258 = vlaneseq
  %v259 = vshrl.u32 %v258, 7
  %v260 = vsub.s32 0, %v259
  %v261 = vrot.slane %v202, %v260
  %v263 = vadd.f32 %v253, %v261
  %v264 = vadd.f32 %v254, %v261
  %v265 = vadd.f32 %v255, %v261
  %v266 = vadd.f32 %v256, %v261
  %v267 = vmax.f32 %v263, 0.0
  %v268 = vmax.f32 %v264, 0.0
  %v269 = vmax.f32 %v265, 0.0
  %v270 = vmax.f32 %v266, 0.0
  %v271 = vld [vmem:[%s5] sm:$0xff]
  %v272 = vld [vmem:[%s5 + $0x8] sm:$0xff]
  %v273 = vld [vmem:[%s5 + $0x10] sm:$0xff]
  %v274 = vld [vmem:[%s5 + $0x18] sm:$0xff]
  %v275 = vld [vmem:[%s5 + $0x20] sm:$0xff]
  %v276 = vld [vmem:[%s5 + $0x28] sm:$0xff]
  %v277 = vld [vmem:[%s5 + $0x30] sm:$0xff]
  %v278 = vld [vmem:[%s5 + $0x38] sm:$0xff]
  %v279 = vld [vmem:[%s5 + $0x40] sm:$0xff]
  %v280 = vld [vmem:[%s5 + $0x48] sm:$0xff]
  %v281 = vld [vmem:[%s5 + $0x50] sm:$0xff]
  %v282 = vld [vmem:[%s5 + $0x58] sm:$0xff]
  %v283 = vrot.slane %v267, 7
  %v284 = vrot.slane %v268, 7
  %v285 = vrot.slane %v269, 7
  %v286 = vrot.slane %v270, 7
  %v287 = vsel %vm144, %v285, %v286
  %v288 = vsel %vm144, %v284, %v285
  %v289 = vsel %vm144, %v283, %v284
  %v290 = vsel %vm144, %v286, %v283
  %v291 = vmul.f32 %v290, %v95
  %v292 = vmul.f32 %v289, %v96
  %v293 = vmul.f32 %v288, %v97
  %v294 = vmul.f32 %v287, %v98
  %v295 = vpack.c.bf16 %v292, %v291
  %v296 = vpack.c.bf16 %v294, %v293
  %v297 = vpack.c.bf16 %v272, %v271
  %v298 = vpack.c.bf16 %v274, %v273
  %v299 = vpack.c.bf16 %v268, %v267
  %v300 = vpack.c.bf16 %v270, %v269
  %v301 = vpack.c.bf16 %v276, %v275
  %v302 = vpack.c.bf16 %v278, %v277
  %v304 = vsel %vm203, %v299, 0
  %v307 = vsel %vm203, %v300, 0
  %309 = vmatprep.subr.bf16.mxu0 0
  %310 = vmatpush1.bf16.msra.mxu0 %v301
  %311 = vmatprep.subr.bf16.mxu0 0
  %312 = vmatpush1.bf16.msra.mxu0 %v302
  %313 = vmatprep.subr.bf16.mxu0 0
  %314 = vmatpush1.bf16.msra.mxu0 0
  %315 = vmatprep.subr.bf16.mxu0 0
  %316 = vmatpush1.bf16.msra.mxu0 0
  %317 = vmatprep.subr.bf16.mxu0 0
  %318 = vmatpush1.bf16.msra.mxu0 0
  %319 = vmatprep.subr.bf16.mxu0 0
  %320 = vmatpush1.bf16.msra.mxu0 0
  %321 = vmatprep.subr.bf16.mxu0 0
  %322 = vmatpush1.bf16.msra.mxu0 0
  %323 = vmatprep.subr.bf16.mxu0 0
  %324 = vmatpush1.bf16.msra.mxu0 0
  %325 = vmatprep.subr.bf16.mxu0 0
  %326 = vmatpush1.bf16.msra.mxu0 0
  %327 = vmatprep.subr.bf16.mxu0 0
  %328 = vmatpush1.bf16.msra.mxu0 0
  %329 = vmatprep.subr.bf16.mxu0 0
  %330 = vmatpush1.bf16.msra.mxu0 0
  %331 = vmatprep.subr.bf16.mxu0 0
  %332 = vmatpush1.bf16.msra.mxu0 0
  %333 = vmatprep.subr.bf16.mxu0 0
  %334 = vmatpush1.bf16.msra.mxu0 0
  %335 = vmatprep.subr.bf16.mxu0 0
  %336 = vmatpush1.bf16.msra.mxu0 0
  %337 = vmatprep.subr.bf16.mxu0 0
  %338 = vmatpush1.bf16.msra.mxu0 0
  %339 = vmatprep.subr.bf16.mxu0 0
  %340 = vmatpush1.bf16.msra.mxu0 0
  %341 = vmatprep.mubr.bf16.mxu0 0
  %342 = vmatmul.mubr.bf16.gmra.mrb[0].mxu0 %v304
  %v343 = vpop.f32.mrb[0].mxu0
  %v344 = vadd.f32 0.0, %v343
  %v345 = vpop.f32.mrb[0].mxu0
  %v346 = vpop.f32.mrb[0].mxu0
  %v347 = vadd.f32 0.0, %v346
  %v348 = vpop.f32.mrb[0].mxu0
  %349 = vmatprep.mubr.bf16.mxu0 0
  %350 = vmatmul.mubr.bf16.gmra.mrb[0].mxu0 %v307
  %v351 = vpop.f32.mrb[0].mxu0
  %v352 = vadd.f32 0.0, %v351
  %v353 = vpop.f32.mrb[0].mxu0
  %v354 = vpop.f32.mrb[0].mxu0
  %v355 = vadd.f32 0.0, %v354
  %v356 = vpop.f32.mrb[0].mxu0
  %357 = vdwg.mxu0
  %v359 = vsel %vm203, %v295, 0
  %v362 = vsel %vm203, %v296, 0
  %364 = vmatprep.subr.bf16.mxu0 0
  %365 = vmatpush1.bf16.msra.mxu0 %v297
  %366 = vmatprep.subr.bf16.mxu0 0
  %367 = vmatpush1.bf16.msra.mxu0 %v298
  %368 = vmatprep.subr.bf16.mxu0 0
  %369 = vmatpush1.bf16.msra.mxu0 0
  %370 = vmatprep.subr.bf16.mxu0 0
  %371 = vmatpush1.bf16.msra.mxu0 0
  %372 = vmatprep.subr.bf16.mxu0 0
  %373 = vmatpush1.bf16.msra.mxu0 0
  %374 = vmatprep.subr.bf16.mxu0 0
  %375 = vmatpush1.bf16.msra.mxu0 0
  %376 = vmatprep.subr.bf16.mxu0 0
  %377 = vmatpush1.bf16.msra.mxu0 0
  %378 = vmatprep.subr.bf16.mxu0 0
  %379 = vmatpush1.bf16.msra.mxu0 0
  %380 = vmatprep.subr.bf16.mxu0 0
  %381 = vmatpush1.bf16.msra.mxu0 0
  %382 = vmatprep.subr.bf16.mxu0 0
  %383 = vmatpush1.bf16.msra.mxu0 0
  %384 = vmatprep.subr.bf16.mxu0 0
  %385 = vmatpush1.bf16.msra.mxu0 0
  %386 = vmatprep.subr.bf16.mxu0 0
  %387 = vmatpush1.bf16.msra.mxu0 0
  %388 = vmatprep.subr.bf16.mxu0 0
  %389 = vmatpush1.bf16.msra.mxu0 0
  %390 = vmatprep.subr.bf16.mxu0 0
  %391 = vmatpush1.bf16.msra.mxu0 0
  %392 = vmatprep.subr.bf16.mxu0 0
  %393 = vmatpush1.bf16.msra.mxu0 0
  %394 = vmatprep.subr.bf16.mxu0 0
  %395 = vmatpush1.bf16.msra.mxu0 0
  %396 = vmatprep.mubr.bf16.mxu0 0
  %397 = vmatmul.mubr.bf16.gmra.mrb[0].mxu0 %v359
  %v398 = vpop.f32.mrb[0].mxu0
  %v399 = vadd.f32 %v344, %v398
  %v400 = vpop.f32.mrb[0].mxu0
  %v401 = vpop.f32.mrb[0].mxu0
  %v402 = vadd.f32 %v347, %v401
  %v403 = vpop.f32.mrb[0].mxu0
  %404 = vmatprep.mubr.bf16.mxu0 0
  %405 = vmatmul.mubr.bf16.gmra.mrb[0].mxu0 %v362
  %v406 = vpop.f32.mrb[0].mxu0
  %v407 = vadd.f32 %v352, %v406
  %v408 = vpop.f32.mrb[0].mxu0
  %v409 = vpop.f32.mrb[0].mxu0
  %v410 = vadd.f32 %v355, %v409
  %v411 = vpop.f32.mrb[0].mxu0
  %412 = vdwg.mxu0
  %v413 = vrot.slane %v267, 1
  %v414 = vrot.slane %v268, 1
  %v415 = vrot.slane %v269, 1
  %v416 = vrot.slane %v270, 1
  %v417 = vsel %vm177, %v415, %v416
  %v418 = vsel %vm177, %v414, %v415
  %v419 = vsel %vm177, %v413, %v414
  %v420 = vsel %vm177, %v416, %v413
  %v421 = vmul.f32 %v419, %v107
  %v422 = vmul.f32 %v418, %v108
  %v423 = vmul.f32 %v417, %v109
  %v424 = vmul.f32 %v420, %v110
  %v425 = vpack.c.bf16 %v422, %v421
  %v426 = vpack.c.bf16 %v424, %v423
  %v427 = vpack.c.bf16 %v280, %v279
  %v428 = vpack.c.bf16 %v282, %v281
  %v430 = vsel %vm203, %v425, 0
  %v433 = vsel %vm203, %v426, 0
  %435 = vmatprep.subr.bf16.mxu0 0
  %436 = vmatpush1.bf16.msra.mxu0 %v427
  %437 = vmatprep.subr.bf16.mxu0 0
  %438 = vmatpush1.bf16.msra.mxu0 %v428
  %439 = vmatprep.subr.bf16.mxu0 0
  %440 = vmatpush1.bf16.msra.mxu0 0
  %441 = vmatprep.subr.bf16.mxu0 0
  %442 = vmatpush1.bf16.msra.mxu0 0
  %443 = vmatprep.subr.bf16.mxu0 0
  %444 = vmatpush1.bf16.msra.mxu0 0
  %445 = vmatprep.subr.bf16.mxu0 0
  %446 = vmatpush1.bf16.msra.mxu0 0
  %447 = vmatprep.subr.bf16.mxu0 0
  %448 = vmatpush1.bf16.msra.mxu0 0
  %449 = vmatprep.subr.bf16.mxu0 0
  %450 = vmatpush1.bf16.msra.mxu0 0
  %451 = vmatprep.subr.bf16.mxu0 0
  %452 = vmatpush1.bf16.msra.mxu0 0
  %453 = vmatprep.subr.bf16.mxu0 0
  %454 = vmatpush1.bf16.msra.mxu0 0
  %455 = vmatprep.subr.bf16.mxu0 0
  %456 = vmatpush1.bf16.msra.mxu0 0
  %457 = vmatprep.subr.bf16.mxu0 0
  %458 = vmatpush1.bf16.msra.mxu0 0
  %459 = vmatprep.subr.bf16.mxu0 0
  %460 = vmatpush1.bf16.msra.mxu0 0
  %461 = vmatprep.subr.bf16.mxu0 0
  %462 = vmatpush1.bf16.msra.mxu0 0
  %463 = vmatprep.subr.bf16.mxu0 0
  %464 = vmatpush1.bf16.msra.mxu0 0
  %465 = vmatprep.subr.bf16.mxu0 0
  %466 = vmatpush1.bf16.msra.mxu0 0
  %467 = vmatprep.mubr.bf16.mxu0 0
  %468 = vmatmul.mubr.bf16.gmra.mrb[0].mxu0 %v430
  %v469 = vpop.f32.mrb[0].mxu0
  %v470 = vadd.f32 0.0, %v469
  %v471 = vpop.f32.mrb[0].mxu0
  %v472 = vpop.f32.mrb[0].mxu0
  %v473 = vadd.f32 0.0, %v472
  %v474 = vpop.f32.mrb[0].mxu0
  %475 = vmatprep.mubr.bf16.mxu0 0
  %476 = vmatmul.mubr.bf16.gmra.mrb[0].mxu0 %v433
  %v477 = vpop.f32.mrb[0].mxu0
  %v478 = vadd.f32 0.0, %v477
  %v479 = vpop.f32.mrb[0].mxu0
  %v480 = vpop.f32.mrb[0].mxu0
  %v481 = vadd.f32 0.0, %v480
  %v482 = vpop.f32.mrb[0].mxu0
  %483 = vdwg.mxu0
  %v484 = vadd.f32 %v399, %v470
  %v485 = vadd.f32 %v402, %v473
  %v486 = vadd.f32 %v407, %v478
  %v487 = vadd.f32 %v410, %v481
  %v488 = vld [vmem:[%s6] sm:$0x1]
  %v489 = vpack.c.bf16 %v31, %v30
  %v490 = vpack.c.bf16 %v33, %v32
  %v491 = vpack.c.bf16 %v488, %v488
  %vm492 = vcmask 7168
  %v494 = vsel %vm492, %v489, 0
  %v497 = vsel %vm492, %v490, 0
  %vm499 = vcmask 1040384
  %v500 = vsel 0, 4294967295, 65535
  %v501 = vsel %vm499, %v500, 0
  %v503 = vand.u32 %v491, %v501
  %505 = vmatprep.subr.bf16.mxu0 0
  %506 = vmatpush1.bf16.msra.mxu0 %v503
  %507 = vmatprep.subr.bf16.mxu0 0
  %508 = vmatpush1.bf16.msra.mxu0 0
  %509 = vmatprep.subr.bf16.mxu0 0
  %510 = vmatpush1.bf16.msra.mxu0 0
  %511 = vmatprep.subr.bf16.mxu0 0
  %512 = vmatpush1.bf16.msra.mxu0 0
  %513 = vmatprep.subr.bf16.mxu0 0
  %514 = vmatpush1.bf16.msra.mxu0 0
  %515 = vmatprep.subr.bf16.mxu0 0
  %516 = vmatpush1.bf16.msra.mxu0 0
  %517 = vmatprep.subr.bf16.mxu0 0
  %518 = vmatpush1.bf16.msra.mxu0 0
  %519 = vmatprep.subr.bf16.mxu0 0
  %520 = vmatpush1.bf16.msra.mxu0 0
  %521 = vmatprep.subr.bf16.mxu0 0
  %522 = vmatpush1.bf16.msra.mxu0 0
  %523 = vmatprep.subr.bf16.mxu0 0
  %524 = vmatpush1.bf16.msra.mxu0 0
  %525 = vmatprep.subr.bf16.mxu0 0
  %526 = vmatpush1.bf16.msra.mxu0 0
  %527 = vmatprep.subr.bf16.mxu0 0
  %528 = vmatpush1.bf16.msra.mxu0 0
  %529 = vmatprep.subr.bf16.mxu0 0
  %530 = vmatpush1.bf16.msra.mxu0 0
  %531 = vmatprep.subr.bf16.mxu0 0
  %532 = vmatpush1.bf16.msra.mxu0 0
  %533 = vmatprep.subr.bf16.mxu0 0
  %534 = vmatpush1.bf16.msra.mxu0 0
  %535 = vmatprep.subr.bf16.mxu0 0
  %536 = vmatpush1.bf16.msra.mxu0 0
  %537 = vmatprep.mubr.bf16.mxu0 0
  %538 = vmatmul.mubr.bf16.gmra.mrb[0].mxu0 %v494
  %v539 = vpop.f32.mrb[0].mxu0
  %v540 = vadd.f32 0.0, %v539
  %v541 = vpop.f32.mrb[0].mxu0
  %v542 = vpop.f32.mrb[0].mxu0
  %v543 = vadd.f32 0.0, %v542
  %v544 = vpop.f32.mrb[0].mxu0
  %545 = vmatprep.mubr.bf16.mxu0 0
  %546 = vmatmul.mubr.bf16.gmra.mrb[0].mxu0 %v497
  %v547 = vpop.f32.mrb[0].mxu0
  %v548 = vadd.f32 0.0, %v547
  %v549 = vpop.f32.mrb[0].mxu0
  %v550 = vpop.f32.mrb[0].mxu0
  %v551 = vadd.f32 0.0, %v550
  %v552 = vpop.f32.mrb[0].mxu0
  %553 = vdwg.mxu0
  %v554 = vadd.f32 %v484, %v540
  %v555 = vadd.f32 %v485, %v543
  %v556 = vadd.f32 %v486, %v548
  %v557 = vadd.f32 %v487, %v551
  %v558 = vld [vmem:[%s7] sm:$0x1]
  %v560 = vlaneseq
  %v561 = vshrl.u32 %v560, 7
  %v562 = vsub.s32 0, %v561
  %v563 = vrot.slane %v558, %v562
  %v565 = vadd.f32 %v554, %v563
  %v566 = vadd.f32 %v555, %v563
  %v567 = vadd.f32 %v556, %v563
  %v568 = vadd.f32 %v557, %v563
  %569 = vst [vmem:[%s8] sm:$0xff] %v565
  %570 = vst [vmem:[%s8 + $0x8] sm:$0xff] %v566
  %571 = vst [vmem:[%s8 + $0x10] sm:$0xff] %v567
  %572 = vst [vmem:[%s8 + $0x18] sm:$0xff] %v568
  // Predicated region
  $region34: #{ladder_vae_forward.7} parent=0 // pred_check
    _
  $region35: #{ladder_vae_forward.7} parent=0 // pred_check_branch
    %574 = sbr.rel (0) target = $region37
  $region36: #{ladder_vae_forward.7} parent=0 // pred_region
    _
  $region37: #{ladder_vae_forward.7} parent=0 // pred_fallthru
    _
  // Predicated region
  $region38: #{ladder_vae_forward.7} parent=0 // pred_check
    _
  $region39: #{ladder_vae_forward.7} parent=0 // pred_check_branch
    %576 = sbr.rel (0) target = $region41
  $region40: #{ladder_vae_forward.7} parent=0 // pred_region
    _
  $region41: #{ladder_vae_forward.7} parent=0 // pred_fallthru
    _

// kernel: ladder_vae_forward.8
$region0: #{ladder_vae_forward.8}
  #allocation0 [shape = 'u32[]', space=smem, size = 0x4, offset = 0x4, fixed_abs, tag = 'smem constant byte address 0x4 - core index']
  #allocation1 [shape = 'u32[144,128]{1,0:T(1,128)}', space=vmem, size = 0x12000, scoped, tag = 'internal scratch']
  %s0 = inlined_call_operand.vmem [shape: f32[2,1024], index: 0, kind: input, shape index: {}]
  %s1 = inlined_call_operand.vmem [shape: f32[1024,128], index: 1, kind: input, shape index: {}]
  %s2 = inlined_call_operand.vmem [shape: f32[1,128], index: 2, kind: input, shape index: {}]
  %s3 = inlined_call_operand.vmem [shape: f32[2,32], index: 3, kind: input, shape index: {}]
  %s4 = inlined_call_operand.vmem [shape: f32[2,128], index: 4, kind: output, shape index: {0}]
  %s5 = inlined_call_operand.vmem [shape: f32[2,32], index: 5, kind: output, shape index: {1}]
  %6 = xla_tuple %s4, %s5
  %s7 = sld [smem:[#allocation0]]
  $region34: #{ladder_vae_forward.8} parent=0
    _
  %s9 = ssub.s32 1, %s7
  %s10 = scalar_select 0, %s9, %s7
  // Predicated region
  $region2: #{ladder_vae_forward.8} parent=0 // pred_check
    _
  $region3: #{ladder_vae_forward.8} parent=0 // pred_check_branch
    %12 = sbr.rel (0) target = $region5
  $region4: #{ladder_vae_forward.8} parent=0 // pred_region
    _
  $region5: #{ladder_vae_forward.8} parent=0 // pred_fallthru
    _
  // Predicated region
  $region6: #{ladder_vae_forward.8} parent=0 // pred_check
    _
  $region7: #{ladder_vae_forward.8} parent=0 // pred_check_branch
    %14 = sbr.rel (0) target = $region9
  $region8: #{ladder_vae_forward.8} parent=0 // pred_region
    _
  $region9: #{ladder_vae_forward.8} parent=0 // pred_fallthru
    _
  // Predicated region
  $region10: #{ladder_vae_forward.8} parent=0 // pred_check
    _
  $region11: #{ladder_vae_forward.8} parent=0 // pred_check_branch
    %16 = sbr.rel (0) target = $region13
  $region12: #{ladder_vae_forward.8} parent=0 // pred_region
    _
  $region13: #{ladder_vae_forward.8} parent=0 // pred_fallthru
    _
  // Predicated region
  $region14: #{ladder_vae_forward.8} parent=0 // pred_check
    _
  $region15: #{ladder_vae_forward.8} parent=0 // pred_check_branch
    %18 = sbr.rel (0) target = $region17
  $region16: #{ladder_vae_forward.8} parent=0 // pred_region
    _
  $region17: #{ladder_vae_forward.8} parent=0 // pred_fallthru
    _
  %v20 = vld [vmem:[%s0] sm:$0xff]
  %v21 = vld [vmem:[%s0 + $0x8] sm:$0xff]
  %v22 = vld [vmem:[%s1] sm:$0xff]
  %v23 = vld [vmem:[%s1 + $0x8] sm:$0xff]
  %v24 = vld [vmem:[%s1 + $0x10] sm:$0xff]
  %v25 = vld [vmem:[%s1 + $0x18] sm:$0xff]
  %v26 = vld [vmem:[%s1 + $0x20] sm:$0xff]
  %v27 = vld [vmem:[%s1 + $0x28] sm:$0xff]
  %v28 = vld [vmem:[%s1 + $0x30] sm:$0xff]
  %v29 = vld [vmem:[%s1 + $0x38] sm:$0xff]
  %v30 = vld [vmem:[%s1 + $0x40] sm:$0xff]
  %v31 = vld [vmem:[%s1 + $0x48] sm:$0xff]
  %v32 = vld [vmem:[%s1 + $0x50] sm:$0xff]
  %v33 = vld [vmem:[%s1 + $0x58] sm:$0xff]
  %v34 = vld [vmem:[%s1 + $0x60] sm:$0xff]
  %v35 = vld [vmem:[%s1 + $0x68] sm:$0xff]
  %v36 = vld [vmem:[%s1 + $0x70] sm:$0xff]
  %v37 = vld [vmem:[%s1 + $0x78] sm:$0xff]
  %v38 = vld [vmem:[%s1 + $0x80] sm:$0xff]
  %v39 = vld [vmem:[%s1 + $0x88] sm:$0xff]
  %v40 = vld [vmem:[%s1 + $0x90] sm:$0xff]
  %v41 = vld [vmem:[%s1 + $0x98] sm:$0xff]
  %v42 = vld [vmem:[%s1 + $0xa0] sm:$0xff]
  %v43 = vld [vmem:[%s1 + $0xa8] sm:$0xff]
  %v44 = vld [vmem:[%s1 + $0xb0] sm:$0xff]
  %v45 = vld [vmem:[%s1 + $0xb8] sm:$0xff]
  %v46 = vld [vmem:[%s1 + $0xc0] sm:$0xff]
  %v47 = vld [vmem:[%s1 + $0xc8] sm:$0xff]
  %v48 = vld [vmem:[%s1 + $0xd0] sm:$0xff]
  %v49 = vld [vmem:[%s1 + $0xd8] sm:$0xff]
  %v50 = vld [vmem:[%s1 + $0xe0] sm:$0xff]
  %v51 = vld [vmem:[%s1 + $0xe8] sm:$0xff]
  %v52 = vld [vmem:[%s1 + $0xf0] sm:$0xff]
  %v53 = vld [vmem:[%s1 + $0xf8] sm:$0xff]
  %v54 = vld [vmem:[%s1 + $0x100] sm:$0xff]
  %v55 = vld [vmem:[%s1 + $0x108] sm:$0xff]
  %v56 = vld [vmem:[%s1 + $0x110] sm:$0xff]
  %v57 = vld [vmem:[%s1 + $0x118] sm:$0xff]
  %v58 = vld [vmem:[%s1 + $0x120] sm:$0xff]
  %v59 = vld [vmem:[%s1 + $0x128] sm:$0xff]
  %v60 = vld [vmem:[%s1 + $0x130] sm:$0xff]
  %v61 = vld [vmem:[%s1 + $0x138] sm:$0xff]
  %v62 = vld [vmem:[%s1 + $0x140] sm:$0xff]
  %v63 = vld [vmem:[%s1 + $0x148] sm:$0xff]
  %v64 = vld [vmem:[%s1 + $0x150] sm:$0xff]
  %v65 = vld [vmem:[%s1 + $0x158] sm:$0xff]
  %v66 = vld [vmem:[%s1 + $0x160] sm:$0xff]
  %v67 = vld [vmem:[%s1 + $0x168] sm:$0xff]
  %v68 = vld [vmem:[%s1 + $0x170] sm:$0xff]
  %v69 = vld [vmem:[%s1 + $0x178] sm:$0xff]
  %v70 = vld [vmem:[%s1 + $0x180] sm:$0xff]
  %v71 = vld [vmem:[%s1 + $0x188] sm:$0xff]
  %v72 = vld [vmem:[%s1 + $0x190] sm:$0xff]
  %v73 = vld [vmem:[%s1 + $0x198] sm:$0xff]
  %v74 = vld [vmem:[%s1 + $0x1a0] sm:$0xff]
  %v75 = vld [vmem:[%s1 + $0x1a8] sm:$0xff]
  %v76 = vld [vmem:[%s1 + $0x1b0] sm:$0xff]
  %v77 = vld [vmem:[%s1 + $0x1b8] sm:$0xff]
  %v78 = vld [vmem:[%s1 + $0x1c0] sm:$0xff]
  %v79 = vld [vmem:[%s1 + $0x1c8] sm:$0xff]
  %v80 = vld [vmem:[%s1 + $0x1d0] sm:$0xff]
  %v81 = vld [vmem:[%s1 + $0x1d8] sm:$0xff]
  %v82 = vld [vmem:[%s1 + $0x1e0] sm:$0xff]
  %v83 = vld [vmem:[%s1 + $0x1e8] sm:$0xff]
  %v84 = vld [vmem:[%s1 + $0x1f0] sm:$0xff]
  %v85 = vld [vmem:[%s1 + $0x1f8] sm:$0xff]
  %v86 = vld [vmem:[%s1 + $0x200] sm:$0xff]
  %v87 = vld [vmem:[%s1 + $0x208] sm:$0xff]
  %v88 = vld [vmem:[%s1 + $0x210] sm:$0xff]
  %v89 = vld [vmem:[%s1 + $0x218] sm:$0xff]
  %v90 = vld [vmem:[%s1 + $0x220] sm:$0xff]
  %v91 = vld [vmem:[%s1 + $0x228] sm:$0xff]
  %v92 = vld [vmem:[%s1 + $0x230] sm:$0xff]
  %v93 = vld [vmem:[%s1 + $0x238] sm:$0xff]
  %v94 = vld [vmem:[%s1 + $0x240] sm:$0xff]
  %v95 = vld [vmem:[%s1 + $0x248] sm:$0xff]
  %v96 = vld [vmem:[%s1 + $0x250] sm:$0xff]
  %v97 = vld [vmem:[%s1 + $0x258] sm:$0xff]
  %v98 = vld [vmem:[%s1 + $0x260] sm:$0xff]
  %v99 = vld [vmem:[%s1 + $0x268] sm:$0xff]
  %v100 = vld [vmem:[%s1 + $0x270] sm:$0xff]
  %v101 = vld [vmem:[%s1 + $0x278] sm:$0xff]
  %v102 = vld [vmem:[%s1 + $0x280] sm:$0xff]
  %v103 = vld [vmem:[%s1 + $0x288] sm:$0xff]
  %v104 = vld [vmem:[%s1 + $0x290] sm:$0xff]
  %v105 = vld [vmem:[%s1 + $0x298] sm:$0xff]
  %v106 = vld [vmem:[%s1 + $0x2a0] sm:$0xff]
  %v107 = vld [vmem:[%s1 + $0x2a8] sm:$0xff]
  %v108 = vld [vmem:[%s1 + $0x2b0] sm:$0xff]
  %v109 = vld [vmem:[%s1 + $0x2b8] sm:$0xff]
  %v110 = vld [vmem:[%s1 + $0x2c0] sm:$0xff]
  %v111 = vld [vmem:[%s1 + $0x2c8] sm:$0xff]
  %v112 = vld [vmem:[%s1 + $0x2d0] sm:$0xff]
  %v113 = vld [vmem:[%s1 + $0x2d8] sm:$0xff]
  %v114 = vld [vmem:[%s1 + $0x2e0] sm:$0xff]
  %v115 = vld [vmem:[%s1 + $0x2e8] sm:$0xff]
  %v116 = vld [vmem:[%s1 + $0x2f0] sm:$0xff]
  %v117 = vld [vmem:[%s1 + $0x2f8] sm:$0xff]
  %v118 = vld [vmem:[%s1 + $0x300] sm:$0xff]
  %v119 = vld [vmem:[%s1 + $0x308] sm:$0xff]
  %v120 = vld [vmem:[%s1 + $0x310] sm:$0xff]
  %v121 = vld [vmem:[%s1 + $0x318] sm:$0xff]
  %v122 = vld [vmem:[%s1 + $0x320] sm:$0xff]
  %v123 = vld [vmem:[%s1 + $0x328] sm:$0xff]
  %v124 = vld [vmem:[%s1 + $0x330] sm:$0xff]
  %v125 = vld [vmem:[%s1 + $0x338] sm:$0xff]
  %v126 = vld [vmem:[%s1 + $0x340] sm:$0xff]
  %v127 = vld [vmem:[%s1 + $0x348] sm:$0xff]
  %v128 = vld [vmem:[%s1 + $0x350] sm:$0xff]
  %v129 = vld [vmem:[%s1 + $0x358] sm:$0xff]
  %v130 = vld [vmem:[%s1 + $0x360] sm:$0xff]
  %v131 = vld [vmem:[%s1 + $0x368] sm:$0xff]
  %v132 = vld [vmem:[%s1 + $0x370] sm:$0xff]
  %v133 = vld [vmem:[%s1 + $0x378] sm:$0xff]
  %v134 = vld [vmem:[%s1 + $0x380] sm:$0xff]
  %v135 = vld [vmem:[%s1 + $0x388] sm:$0xff]
  %v136 = vld [vmem:[%s1 + $0x390] sm:$0xff]
  %v137 = vld [vmem:[%s1 + $0x398] sm:$0xff]
  %v138 = vld [vmem:[%s1 + $0x3a0] sm:$0xff]
  %v139 = vld [vmem:[%s1 + $0x3a8] sm:$0xff]
  %v140 = vld [vmem:[%s1 + $0x3b0] sm:$0xff]
  %v141 = vld [vmem:[%s1 + $0x3b8] sm:$0xff]
  %v142 = vld [vmem:[%s1 + $0x3c0] sm:$0xff]
  %v143 = vld [vmem:[%s1 + $0x3c8] sm:$0xff]
  %v144 = vld [vmem:[%s1 + $0x3d0] sm:$0xff]
  %v145 = vld [vmem:[%s1 + $0x3d8] sm:$0xff]
  %v146 = vld [vmem:[%s1 + $0x3e0] sm:$0xff]
  %v147 = vld [vmem:[%s1 + $0x3e8] sm:$0xff]
  %v148 = vld [vmem:[%s1 + $0x3f0] sm:$0xff]
  %v149 = vld [vmem:[%s1 + $0x3f8] sm:$0xff]
  %v152 = vcombine.high %v20, %v20
  %v154 = vunpack.c.l.s4 1983009808
  %v155 = vunpack.c.0.s8 %v154
  %v156 = vlaneseq
  %v157 = vshrl.u32 %v156, 7
  %v158 = vsub.s32 %v155, %v157
  %v159 = vrot.slane %v20, %v158
  %v161 = vunpack.c.l.s4 1983009808
  %v162 = vunpack.c.0.s8 %v161
  %v163 = vlaneseq
  %v164 = vshrl.u32 %v163, 7
  %v165 = vsub.s32 %v162, %v164
  %v166 = vrot.slane %v152, %v165
  %v167 = vcombine.high %v159, %v159
  %v168 = vcombine.high %v166, %v166
  %v169 = vcombine.high %v21, %v21
  %v171 = vunpack.c.l.s4 1983009808
  %v172 = vunpack.c.0.s8 %v171
  %v173 = vlaneseq
  %v174 = vshrl.u32 %v173, 7
  %v175 = vsub.s32 %v172, %v174
  %v176 = vrot.slane %v21, %v175
  %v178 = vunpack.c.l.s4 1983009808
  %v179 = vunpack.c.0.s8 %v178
  %v180 = vlaneseq
  %v181 = vshrl.u32 %v180, 7
  %v182 = vsub.s32 %v179, %v181
  %v183 = vrot.slane %v169, %v182
  %v184 = vcombine.high %v176, %v176
  %v185 = vcombine.high %v183, %v183
  %v194 = vpack.c.bf16 %v159, %v159
  %v195 = vpack.c.bf16 %v167, %v167
  %v196 = vpack.c.bf16 %v166, %v166
  %v197 = vpack.c.bf16 %v168, %v168
  %v198 = vpack.c.bf16 %v176, %v176
  %v199 = vpack.c.bf16 %v184, %v184
  %v200 = vpack.c.bf16 %v183, %v183
  %v201 = vpack.c.bf16 %v185, %v185
  %v202 = vpack.c.bf16 %v23, %v22
  %v203 = vpack.c.bf16 %v25, %v24
  %v204 = vpack.c.bf16 %v27, %v26
  %v205 = vpack.c.bf16 %v29, %v28
  %v206 = vpack.c.bf16 %v31, %v30
  %v207 = vpack.c.bf16 %v33, %v32
  %v208 = vpack.c.bf16 %v35, %v34
  %v209 = vpack.c.bf16 %v37, %v36
  %v210 = vpack.c.bf16 %v39, %v38
  %v211 = vpack.c.bf16 %v41, %v40
  %v212 = vpack.c.bf16 %v43, %v42
  %v213 = vpack.c.bf16 %v45, %v44
  %v214 = vpack.c.bf16 %v47, %v46
  %v215 = vpack.c.bf16 %v49, %v48
  %v216 = vpack.c.bf16 %v51, %v50
  %v217 = vpack.c.bf16 %v53, %v52
  %v218 = vpack.c.bf16 %v55, %v54
  %v219 = vpack.c.bf16 %v57, %v56
  %v220 = vpack.c.bf16 %v59, %v58
  %v221 = vpack.c.bf16 %v61, %v60
  %v222 = vpack.c.bf16 %v63, %v62
  %v223 = vpack.c.bf16 %v65, %v64
  %v224 = vpack.c.bf16 %v67, %v66
  %v225 = vpack.c.bf16 %v69, %v68
  %v226 = vpack.c.bf16 %v71, %v70
  %v227 = vpack.c.bf16 %v73, %v72
  %v228 = vpack.c.bf16 %v75, %v74
  %v229 = vpack.c.bf16 %v77, %v76
  %v230 = vpack.c.bf16 %v79, %v78
  %v231 = vpack.c.bf16 %v81, %v80
  %v232 = vpack.c.bf16 %v83, %v82
  %v233 = vpack.c.bf16 %v85, %v84
  %v234 = vpack.c.bf16 %v87, %v86
  %v235 = vpack.c.bf16 %v89, %v88
  %v236 = vpack.c.bf16 %v91, %v90
  %v237 = vpack.c.bf16 %v93, %v92
  %v238 = vpack.c.bf16 %v95, %v94
  %v239 = vpack.c.bf16 %v97, %v96
  %v240 = vpack.c.bf16 %v99, %v98
  %v241 = vpack.c.bf16 %v101, %v100
  %v242 = vpack.c.bf16 %v103, %v102
  %v243 = vpack.c.bf16 %v105, %v104
  %v244 = vpack.c.bf16 %v107, %v106
  %v245 = vpack.c.bf16 %v109, %v108
  %v246 = vpack.c.bf16 %v111, %v110
  %v247 = vpack.c.bf16 %v113, %v112
  %v248 = vpack.c.bf16 %v115, %v114
  %v249 = vpack.c.bf16 %v117, %v116
  %v250 = vpack.c.bf16 %v119, %v118
  %v251 = vpack.c.bf16 %v121, %v120
  %v252 = vpack.c.bf16 %v123, %v122
  %v253 = vpack.c.bf16 %v125, %v124
  %v254 = vpack.c.bf16 %v127, %v126
  %v255 = vpack.c.bf16 %v129, %v128
  %v256 = vpack.c.bf16 %v131, %v130
  %v257 = vpack.c.bf16 %v133, %v132
  %v258 = vpack.c.bf16 %v135, %v134
  %v259 = vpack.c.bf16 %v137, %v136
  %v260 = vpack.c.bf16 %v139, %v138
  %v261 = vpack.c.bf16 %v141, %v140
  %v262 = vpack.c.bf16 %v143, %v142
  %v263 = vpack.c.bf16 %v145, %v144
  %v264 = vpack.c.bf16 %v147, %v146
  %v265 = vpack.c.bf16 %v149, %v148
  %v266 = vld [vmem:[%s2] sm:$0x1]
  %v268 = vlaneseq
  %v269 = vshrl.u32 %v268, 7
  %v270 = vsub.s32 0, %v269
  %v271 = vrot.slane %v266, %v270
  %273 = vmatprep.subr.bf16.mxu0 0
  %274 = vmatpush1.bf16.msra.mxu0 %v202
  %275 = vmatprep.subr.bf16.mxu0 0
  %276 = vmatpush1.bf16.msra.mxu0 %v203
  %277 = vmatprep.subr.bf16.mxu0 0
  %278 = vmatpush1.bf16.msra.mxu0 %v204
  %279 = vmatprep.subr.bf16.mxu0 0
  %280 = vmatpush1.bf16.msra.mxu0 %v205
  %281 = vmatprep.subr.bf16.mxu0 0
  %282 = vmatpush1.bf16.msra.mxu0 %v206
  %283 = vmatprep.subr.bf16.mxu0 0
  %284 = vmatpush1.bf16.msra.mxu0 %v207
  %285 = vmatprep.subr.bf16.mxu0 0
  %286 = vmatpush1.bf16.msra.mxu0 %v208
  %287 = vmatprep.subr.bf16.mxu0 0
  %288 = vmatpush1.bf16.msra.mxu0 %v209
  %289 = vmatprep.subr.bf16.mxu0 0
  %290 = vmatpush1.bf16.msra.mxu0 %v210
  %291 = vmatprep.subr.bf16.mxu0 0
  %292 = vmatpush1.bf16.msra.mxu0 %v211
  %293 = vmatprep.subr.bf16.mxu0 0
  %294 = vmatpush1.bf16.msra.mxu0 %v212
  %295 = vmatprep.subr.bf16.mxu0 0
  %296 = vmatpush1.bf16.msra.mxu0 %v213
  %297 = vmatprep.subr.bf16.mxu0 0
  %298 = vmatpush1.bf16.msra.mxu0 %v214
  %299 = vmatprep.subr.bf16.mxu0 0
  %300 = vmatpush1.bf16.msra.mxu0 %v215
  %301 = vmatprep.subr.bf16.mxu0 0
  %302 = vmatpush1.bf16.msra.mxu0 %v216
  %303 = vmatprep.subr.bf16.mxu0 0
  %304 = vmatpush1.bf16.msra.mxu0 %v217
  %305 = vmatprep.mubr.bf16.mxu0 %v195
  %306 = vmatmul.mubr.bf16.gmra.mrb[0].mxu0 %v194
  %v307 = vpop.f32.mrb[0].mxu0
  %v308 = vadd.f32 %v271, %v307
  %v309 = vpop.f32.mrb[0].mxu0
  %v310 = vpop.f32.mrb[0].mxu0
  %v311 = vpop.f32.mrb[0].mxu0
  %312 = vdwg.mxu0
  %313 = vmatprep.subr.bf16.mxu0 0
  %314 = vmatpush1.bf16.msra.mxu0 %v218
  %315 = vmatprep.subr.bf16.mxu0 0
  %316 = vmatpush1.bf16.msra.mxu0 %v219
  %317 = vmatprep.subr.bf16.mxu0 0
  %318 = vmatpush1.bf16.msra.mxu0 %v220
  %319 = vmatprep.subr.bf16.mxu0 0
  %320 = vmatpush1.bf16.msra.mxu0 %v221
  %321 = vmatprep.subr.bf16.mxu0 0
  %322 = vmatpush1.bf16.msra.mxu0 %v222
  %323 = vmatprep.subr.bf16.mxu0 0
  %324 = vmatpush1.bf16.msra.mxu0 %v223
  %325 = vmatprep.subr.bf16.mxu0 0
  %326 = vmatpush1.bf16.msra.mxu0 %v224
  %327 = vmatprep.subr.bf16.mxu0 0
  %328 = vmatpush1.bf16.msra.mxu0 %v225
  %329 = vmatprep.subr.bf16.mxu0 0
  %330 = vmatpush1.bf16.msra.mxu0 %v226
  %331 = vmatprep.subr.bf16.mxu0 0
  %332 = vmatpush1.bf16.msra.mxu0 %v227
  %333 = vmatprep.subr.bf16.mxu0 0
  %334 = vmatpush1.bf16.msra.mxu0 %v228
  %335 = vmatprep.subr.bf16.mxu0 0
  %336 = vmatpush1.bf16.msra.mxu0 %v229
  %337 = vmatprep.subr.bf16.mxu0 0
  %338 = vmatpush1.bf16.msra.mxu0 %v230
  %339 = vmatprep.subr.bf16.mxu0 0
  %340 = vmatpush1.bf16.msra.mxu0 %v231
  %341 = vmatprep.subr.bf16.mxu0 0
  %342 = vmatpush1.bf16.msra.mxu0 %v232
  %343 = vmatprep.subr.bf16.mxu0 0
  %344 = vmatpush1.bf16.msra.mxu0 %v233
  %345 = vmatprep.mubr.bf16.mxu0 %v197
  %346 = vmatmul.mubr.bf16.gmra.mrb[0].mxu0 %v196
  %v347 = vpop.f32.mrb[0].mxu0
  %v348 = vadd.f32 %v308, %v347
  %v349 = vpop.f32.mrb[0].mxu0
  %v350 = vpop.f32.mrb[0].mxu0
  %v351 = vpop.f32.mrb[0].mxu0
  %352 = vdwg.mxu0
  %353 = vmatprep.subr.bf16.mxu0 0
  %354 = vmatpush1.bf16.msra.mxu0 %v234
  %355 = vmatprep.subr.bf16.mxu0 0
  %356 = vmatpush1.bf16.msra.mxu0 %v235
  %357 = vmatprep.subr.bf16.mxu0 0
  %358 = vmatpush1.bf16.msra.mxu0 %v236
  %359 = vmatprep.subr.bf16.mxu0 0
  %360 = vmatpush1.bf16.msra.mxu0 %v237
  %361 = vmatprep.subr.bf16.mxu0 0
  %362 = vmatpush1.bf16.msra.mxu0 %v238
  %363 = vmatprep.subr.bf16.mxu0 0
  %364 = vmatpush1.bf16.msra.mxu0 %v239
  %365 = vmatprep.subr.bf16.mxu0 0
  %366 = vmatpush1.bf16.msra.mxu0 %v240
  %367 = vmatprep.subr.bf16.mxu0 0
  %368 = vmatpush1.bf16.msra.mxu0 %v241
  %369 = vmatprep.subr.bf16.mxu0 0
  %370 = vmatpush1.bf16.msra.mxu0 %v242
  %371 = vmatprep.subr.bf16.mxu0 0
  %372 = vmatpush1.bf16.msra.mxu0 %v243
  %373 = vmatprep.subr.bf16.mxu0 0
  %374 = vmatpush1.bf16.msra.mxu0 %v244
  %375 = vmatprep.subr.bf16.mxu0 0
  %376 = vmatpush1.bf16.msra.mxu0 %v245
  %377 = vmatprep.subr.bf16.mxu0 0
  %378 = vmatpush1.bf16.msra.mxu0 %v246
  %379 = vmatprep.subr.bf16.mxu0 0
  %380 = vmatpush1.bf16.msra.mxu0 %v247
  %381 = vmatprep.subr.bf16.mxu0 0
  %382 = vmatpush1.bf16.msra.mxu0 %v248
  %383 = vmatprep.subr.bf16.mxu0 0
  %384 = vmatpush1.bf16.msra.mxu0 %v249
  %385 = vmatprep.mubr.bf16.mxu0 %v199
  %386 = vmatmul.mubr.bf16.gmra.mrb[0].mxu0 %v198
  %v387 = vpop.f32.mrb[0].mxu0
  %v388 = vadd.f32 %v348, %v387
  %v389 = vpop.f32.mrb[0].mxu0
  %v390 = vpop.f32.mrb[0].mxu0
  %v391 = vpop.f32.mrb[0].mxu0
  %392 = vdwg.mxu0
  %393 = vmatprep.subr.bf16.mxu0 0
  %394 = vmatpush1.bf16.msra.mxu0 %v250
  %395 = vmatprep.subr.bf16.mxu0 0
  %396 = vmatpush1.bf16.msra.mxu0 %v251
  %397 = vmatprep.subr.bf16.mxu0 0
  %398 = vmatpush1.bf16.msra.mxu0 %v252
  %399 = vmatprep.subr.bf16.mxu0 0
  %400 = vmatpush1.bf16.msra.mxu0 %v253
  %401 = vmatprep.subr.bf16.mxu0 0
  %402 = vmatpush1.bf16.msra.mxu0 %v254
  %403 = vmatprep.subr.bf16.mxu0 0
  %404 = vmatpush1.bf16.msra.mxu0 %v255
  %405 = vmatprep.subr.bf16.mxu0 0
  %406 = vmatpush1.bf16.msra.mxu0 %v256
  %407 = vmatprep.subr.bf16.mxu0 0
  %408 = vmatpush1.bf16.msra.mxu0 %v257
  %409 = vmatprep.subr.bf16.mxu0 0
  %410 = vmatpush1.bf16.msra.mxu0 %v258
  %411 = vmatprep.subr.bf16.mxu0 0
  %412 = vmatpush1.bf16.msra.mxu0 %v259
  %413 = vmatprep.subr.bf16.mxu0 0
  %414 = vmatpush1.bf16.msra.mxu0 %v260
  %415 = vmatprep.subr.bf16.mxu0 0
  %416 = vmatpush1.bf16.msra.mxu0 %v261
  %417 = vmatprep.subr.bf16.mxu0 0
  %418 = vmatpush1.bf16.msra.mxu0 %v262
  %419 = vmatprep.subr.bf16.mxu0 0
  %420 = vmatpush1.bf16.msra.mxu0 %v263
  %421 = vmatprep.subr.bf16.mxu0 0
  %422 = vmatpush1.bf16.msra.mxu0 %v264
  %423 = vmatprep.subr.bf16.mxu0 0
  %424 = vmatpush1.bf16.msra.mxu0 %v265
  %425 = vmatprep.mubr.bf16.mxu0 %v201
  %426 = vmatmul.mubr.bf16.gmra.mrb[0].mxu0 %v200
  %v427 = vpop.f32.mrb[0].mxu0
  %v428 = vadd.f32 %v388, %v427
  %v429 = vpop.f32.mrb[0].mxu0
  %v430 = vpop.f32.mrb[0].mxu0
  %v431 = vpop.f32.mrb[0].mxu0
  %432 = vdwg.mxu0
  %433 = vst [vmem:[%s4] sm:$0x3] %v428
  %v434 = vld [vmem:[%s3] sm:$0x3]
  %v435 = vmul.f32 %v428, 0.5
  %v436 = vmul.f32 %v435, 1.442695
  %v437 = vpow.pop %v436
  %439 = vrot.lane.b32.xlu0 %v437, 96
  %v440 = vpop.permute.xlu0 %439
  %v442 = vmul.f32 %v434, %v440
  %v443 = vadd.f32 %v428, %v442
  %vm444 = vcmask 254976
  %445 = vst.msk [vmem:[%s5] sm:$0x3] %vm444, %v443
  // Predicated region
  $region18: #{ladder_vae_forward.8} parent=0 // pred_check
    _
  $region19: #{ladder_vae_forward.8} parent=0 // pred_check_branch
    %447 = sbr.rel (0) target = $region21
  $region20: #{ladder_vae_forward.8} parent=0 // pred_region
    _
  $region21: #{ladder_vae_forward.8} parent=0 // pred_fallthru
    _
  // Predicated region
  $region22: #{ladder_vae_forward.8} parent=0 // pred_check
    _
  $region23: #{ladder_vae_forward.8} parent=0 // pred_check_branch
    %449 = sbr.rel (0) target = $region25
  $region24: #{ladder_vae_forward.8} parent=0 // pred_region
    _
  $region25: #{ladder_vae_forward.8} parent=0 // pred_fallthru
    _
  // Predicated region
  $region26: #{ladder_vae_forward.8} parent=0 // pred_check
    _
  $region27: #{ladder_vae_forward.8} parent=0 // pred_check_branch
    %451 = sbr.rel (0) target = $region29
  $region28: #{ladder_vae_forward.8} parent=0 // pred_region
    _
  $region29: #{ladder_vae_forward.8} parent=0 // pred_fallthru
    _
  // Predicated region
  $region30: #{ladder_vae_forward.8} parent=0 // pred_check
    _
  $region31: #{ladder_vae_forward.8} parent=0 // pred_check_branch
    %453 = sbr.rel (0) target = $region33
  $region32: #{ladder_vae_forward.8} parent=0 // pred_region
    _
  $region33: #{ladder_vae_forward.8} parent=0 // pred_fallthru
    _

// kernel: ladder_vae_forward.9
$region0: #{ladder_vae_forward.9}
  #allocation0 [shape = 'u32[]', space=smem, size = 0x4, offset = 0x4, fixed_abs, tag = 'smem constant byte address 0x4 - core index']
  #allocation1 [shape = 'u32[144,128]{1,0:T(1,128)}', space=vmem, size = 0x12000, scoped, tag = 'internal scratch']
  %s0 = inlined_call_operand.vmem [shape: f32[2,32], index: 0, kind: input, shape index: {}]
  %s1 = inlined_call_operand.vmem [shape: f32[96,128], index: 1, kind: input, shape index: {}]
  %s2 = inlined_call_operand.vmem [shape: f32[1,128], index: 2, kind: input, shape index: {}]
  %s3 = inlined_call_operand.vmem [shape: f32[2,128], index: 3, kind: output, shape index: {}]
  %s4 = sld [smem:[#allocation0]]
  $region22: #{ladder_vae_forward.9} parent=0
    _
  %s6 = ssub.s32 1, %s4
  %s7 = scalar_select 0, %s6, %s4
  // Predicated region
  $region2: #{ladder_vae_forward.9} parent=0 // pred_check
    _
  $region3: #{ladder_vae_forward.9} parent=0 // pred_check_branch
    %9 = sbr.rel (0) target = $region5
  $region4: #{ladder_vae_forward.9} parent=0 // pred_region
    _
  $region5: #{ladder_vae_forward.9} parent=0 // pred_fallthru
    _
  // Predicated region
  $region6: #{ladder_vae_forward.9} parent=0 // pred_check
    _
  $region7: #{ladder_vae_forward.9} parent=0 // pred_check_branch
    %11 = sbr.rel (0) target = $region9
  $region8: #{ladder_vae_forward.9} parent=0 // pred_region
    _
  $region9: #{ladder_vae_forward.9} parent=0 // pred_fallthru
    _
  // Predicated region
  $region10: #{ladder_vae_forward.9} parent=0 // pred_check
    _
  $region11: #{ladder_vae_forward.9} parent=0 // pred_check_branch
    %13 = sbr.rel (0) target = $region13
  $region12: #{ladder_vae_forward.9} parent=0 // pred_region
    _
  $region13: #{ladder_vae_forward.9} parent=0 // pred_fallthru
    _
  %v15 = vld [vmem:[%s0] sm:$0x3]
  %v16 = vld [vmem:[%s1 + $0x20] sm:$0xff]
  %v17 = vld [vmem:[%s1 + $0x28] sm:$0xff]
  %v18 = vld [vmem:[%s1 + $0x30] sm:$0xff]
  %v19 = vld [vmem:[%s1 + $0x38] sm:$0xff]
  %v20 = vpack.c.bf16 %v15, %v15
  %v21 = vpack.c.bf16 %v17, %v16
  %v22 = vpack.c.bf16 %v19, %v18
  %v23 = vld [vmem:[%s2] sm:$0x1]
  %v25 = vlaneseq
  %v26 = vshrl.u32 %v25, 7
  %v27 = vsub.s32 0, %v26
  %v28 = vrot.slane %v23, %v27
  %vm30 = vcmask 261120
  %v32 = vsel %vm30, %v20, 0
  %34 = vmatprep.subr.bf16.mxu0 0
  %35 = vmatpush1.bf16.msra.mxu0 %v21
  %36 = vmatprep.subr.bf16.mxu0 0
  %37 = vmatpush1.bf16.msra.mxu0 %v22
  %38 = vmatprep.subr.bf16.mxu0 0
  %39 = vmatpush1.bf16.msra.mxu0 0
  %40 = vmatprep.subr.bf16.mxu0 0
  %41 = vmatpush1.bf16.msra.mxu0 0
  %42 = vmatprep.subr.bf16.mxu0 0
  %43 = vmatpush1.bf16.msra.mxu0 0
  %44 = vmatprep.subr.bf16.mxu0 0
  %45 = vmatpush1.bf16.msra.mxu0 0
  %46 = vmatprep.subr.bf16.mxu0 0
  %47 = vmatpush1.bf16.msra.mxu0 0
  %48 = vmatprep.subr.bf16.mxu0 0
  %49 = vmatpush1.bf16.msra.mxu0 0
  %50 = vmatprep.subr.bf16.mxu0 0
  %51 = vmatpush1.bf16.msra.mxu0 0
  %52 = vmatprep.subr.bf16.mxu0 0
  %53 = vmatpush1.bf16.msra.mxu0 0
  %54 = vmatprep.subr.bf16.mxu0 0
  %55 = vmatpush1.bf16.msra.mxu0 0
  %56 = vmatprep.subr.bf16.mxu0 0
  %57 = vmatpush1.bf16.msra.mxu0 0
  %58 = vmatprep.subr.bf16.mxu0 0
  %59 = vmatpush1.bf16.msra.mxu0 0
  %60 = vmatprep.subr.bf16.mxu0 0
  %61 = vmatpush1.bf16.msra.mxu0 0
  %62 = vmatprep.subr.bf16.mxu0 0
  %63 = vmatpush1.bf16.msra.mxu0 0
  %64 = vmatprep.subr.bf16.mxu0 0
  %65 = vmatpush1.bf16.msra.mxu0 0
  %66 = vmatprep.mubr.bf16.mxu0 0
  %67 = vmatmul.mubr.bf16.gmra.mrb[0].mxu0 %v32
  %v68 = vpop.f32.mrb[0].mxu0
  %v69 = vadd.f32 %v28, %v68
  %v70 = vpop.f32.mrb[0].mxu0
  %v71 = vpop.f32.mrb[0].mxu0
  %v72 = vpop.f32.mrb[0].mxu0
  %73 = vdwg.mxu0
  %74 = vst [vmem:[%s3] sm:$0x3] %v69
  // Predicated region
  $region14: #{ladder_vae_forward.9} parent=0 // pred_check
    _
  $region15: #{ladder_vae_forward.9} parent=0 // pred_check_branch
    %76 = sbr.rel (0) target = $region17
  $region16: #{ladder_vae_forward.9} parent=0 // pred_region
    _
  $region17: #{ladder_vae_forward.9} parent=0 // pred_fallthru
    _
  // Predicated region
  $region18: #{ladder_vae_forward.9} parent=0 // pred_check
    _
  $region19: #{ladder_vae_forward.9} parent=0 // pred_check_branch
    %78 = sbr.rel (0) target = $region21
  $region20: #{ladder_vae_forward.9} parent=0 // pred_region
    _
  $region21: #{ladder_vae_forward.9} parent=0 // pred_fallthru
    _

// kernel: ladder_vae_forward.10
$region0: #{ladder_vae_forward.10}
  #allocation0 [shape = 'u32[]', space=smem, size = 0x4, offset = 0x4, fixed_abs, tag = 'smem constant byte address 0x4 - core index']
  #allocation1 [shape = 'u32[144,128]{1,0:T(1,128)}', space=vmem, size = 0x12000, scoped, tag = 'internal scratch']
  %s0 = inlined_call_operand.vmem [shape: f32[16,64], index: 0, kind: input, shape index: {}]
  %s1 = inlined_call_operand.vmem [shape: f32[192,16], index: 1, kind: input, shape index: {}]
  %s2 = inlined_call_operand.vmem [shape: f32[1,16], index: 2, kind: input, shape index: {}]
  %s3 = inlined_call_operand.vmem [shape: f32[1,16], index: 3, kind: input, shape index: {}]
  %s4 = inlined_call_operand.vmem [shape: f32[1,16], index: 4, kind: input, shape index: {}]
  %s5 = inlined_call_operand.vmem [shape: f32[48,128], index: 5, kind: input, shape index: {}]
  %s6 = inlined_call_operand.vmem [shape: f32[64,128], index: 6, kind: input, shape index: {}]
  %s7 = inlined_call_operand.vmem [shape: f32[1,128], index: 7, kind: input, shape index: {}]
  %s8 = inlined_call_operand.vmem [shape: f32[16,128], index: 8, kind: output, shape index: {}]
  %s9 = sld [smem:[#allocation0]]
  $region42: #{ladder_vae_forward.10} parent=0
    _
  %s11 = ssub.s32 1, %s9
  %s12 = scalar_select 0, %s11, %s9
  // Predicated region
  $region2: #{ladder_vae_forward.10} parent=0 // pred_check
    _
  $region3: #{ladder_vae_forward.10} parent=0 // pred_check_branch
    %14 = sbr.rel (0) target = $region5
  $region4: #{ladder_vae_forward.10} parent=0 // pred_region
    _
  $region5: #{ladder_vae_forward.10} parent=0 // pred_fallthru
    _
  // Predicated region
  $region6: #{ladder_vae_forward.10} parent=0 // pred_check
    _
  $region7: #{ladder_vae_forward.10} parent=0 // pred_check_branch
    %16 = sbr.rel (0) target = $region9
  $region8: #{ladder_vae_forward.10} parent=0 // pred_region
    _
  $region9: #{ladder_vae_forward.10} parent=0 // pred_fallthru
    _
  // Predicated region
  $region10: #{ladder_vae_forward.10} parent=0 // pred_check
    _
  $region11: #{ladder_vae_forward.10} parent=0 // pred_check_branch
    %18 = sbr.rel (0) target = $region13
  $region12: #{ladder_vae_forward.10} parent=0 // pred_region
    _
  $region13: #{ladder_vae_forward.10} parent=0 // pred_fallthru
    _
  // Predicated region
  $region14: #{ladder_vae_forward.10} parent=0 // pred_check
    _
  $region15: #{ladder_vae_forward.10} parent=0 // pred_check_branch
    %20 = sbr.rel (0) target = $region17
  $region16: #{ladder_vae_forward.10} parent=0 // pred_region
    _
  $region17: #{ladder_vae_forward.10} parent=0 // pred_fallthru
    _
  // Predicated region
  $region18: #{ladder_vae_forward.10} parent=0 // pred_check
    _
  $region19: #{ladder_vae_forward.10} parent=0 // pred_check_branch
    %22 = sbr.rel (0) target = $region21
  $region20: #{ladder_vae_forward.10} parent=0 // pred_region
    _
  $region21: #{ladder_vae_forward.10} parent=0 // pred_fallthru
    _
  // Predicated region
  $region22: #{ladder_vae_forward.10} parent=0 // pred_check
    _
  $region23: #{ladder_vae_forward.10} parent=0 // pred_check_branch
    %24 = sbr.rel (0) target = $region25
  $region24: #{ladder_vae_forward.10} parent=0 // pred_region
    _
  $region25: #{ladder_vae_forward.10} parent=0 // pred_fallthru
    _
  // Predicated region
  $region26: #{ladder_vae_forward.10} parent=0 // pred_check
    _
  $region27: #{ladder_vae_forward.10} parent=0 // pred_check_branch
    %26 = sbr.rel (0) target = $region29
  $region28: #{ladder_vae_forward.10} parent=0 // pred_region
    _
  $region29: #{ladder_vae_forward.10} parent=0 // pred_fallthru
    _
  // Predicated region
  $region30: #{ladder_vae_forward.10} parent=0 // pred_check
    _
  $region31: #{ladder_vae_forward.10} parent=0 // pred_check_branch
    %28 = sbr.rel (0) target = $region33
  $region32: #{ladder_vae_forward.10} parent=0 // pred_region
    _
  $region33: #{ladder_vae_forward.10} parent=0 // pred_fallthru
    _
  %v30 = vld [vmem:[%s0] sm:$0xff]
  %v31 = vld [vmem:[%s0 + $0x8] sm:$0xff]
  %v32 = vlaneseq
  %v33 = vshrl.u32 %v32, 7
  %v34 = vadd.s32 %v33, 8
  %vm35 = vcmp.lt.s32.totalorder %v33, 0
  %v36 = vsub.s32 0, %v33
  %v37 = vsel %vm35, %v36, %v33
  %v38 = vshrl.u32 %v37, 3
  %v39 = vand.u32 %v37, 7
  %v40 = vsub.s32 0, %v39
  %v41 = vsel %vm35, %v40, %v39
  %vm42 = vcmp.lt.s32.totalorder %v34, 0
  %v43 = vsub.s32 0, %v34
  %v44 = vsel %vm42, %v43, %v34
  %v45 = vshrl.u32 %v44, 3
  %v46 = vand.u32 %v44, 7
  %v47 = vsub.s32 0, %v46
  %v48 = vsel %vm42, %v47, %v46
  %vm49 = vcmp.ne.s32.totalorder %v41, 0
  %vm50 = vcmp.ne.s32.totalorder %v48, 0
  %vm51 = vcmp.lt.s32.totalorder %v41, 0
  %vm52 = vcmp.lt.s32.totalorder %v48, 0
  %vm53 = vmand %vm51, %vm49
  %vm54 = vmand %vm52, %vm50
  %v55 = vadd.s32 %v41, 8
  %v56 = vadd.s32 %v48, 8
  %v57 = vsel %vm53, %v55, %v41
  %v58 = vsel %vm54, %v56, %v48
  %vm59 = vcmp.ne.s32.totalorder %v57, 0
  %vm60 = vcmp.ne.s32.totalorder %v58, 0
  %v61 = vsel %vm59, 1, 0
  %v62 = vsel %vm60, 1, 0
  %v63 = vcvt.s32.f32 %v61
  %v64 = vcvt.s32.f32 %v62
  %vm65 = vcmp.ne.s32.totalorder %v57, 7
  %vm66 = vcmp.ne.s32.totalorder %v58, 7
  %v67 = vsel %vm65, 1, 0
  %v68 = vsel %vm66, 1, 0
  %v69 = vcvt.s32.f32 %v67
  %v70 = vcvt.s32.f32 %v68
  %v71 = vld [vmem:[%s1] sm:$0xff]
  %v72 = vld [vmem:[%s1 + $0x8] sm:$0xff]
  %v73 = vld [vmem:[%s1 + $0x10] sm:$0xff]
  %v74 = vld [vmem:[%s1 + $0x18] sm:$0xff]
  %v75 = vld [vmem:[%s1 + $0x20] sm:$0xff]
  %v76 = vld [vmem:[%s1 + $0x28] sm:$0xff]
  %v77 = vld [vmem:[%s1 + $0x30] sm:$0xff]
  %v78 = vld [vmem:[%s1 + $0x38] sm:$0xff]
  %v79 = vld [vmem:[%s1 + $0x40] sm:$0xff]
  %v80 = vld [vmem:[%s1 + $0x48] sm:$0xff]
  %v81 = vld [vmem:[%s1 + $0x50] sm:$0xff]
  %v82 = vld [vmem:[%s1 + $0x58] sm:$0xff]
  %v83 = vld [vmem:[%s1 + $0x60] sm:$0xff]
  %v84 = vld [vmem:[%s1 + $0x68] sm:$0xff]
  %v85 = vld [vmem:[%s1 + $0x70] sm:$0xff]
  %v86 = vld [vmem:[%s1 + $0x78] sm:$0xff]
  %v87 = vld [vmem:[%s1 + $0x80] sm:$0xff]
  %v88 = vld [vmem:[%s1 + $0x88] sm:$0xff]
  %v89 = vld [vmem:[%s1 + $0x90] sm:$0xff]
  %v90 = vld [vmem:[%s1 + $0x98] sm:$0xff]
  %v91 = vld [vmem:[%s1 + $0xa0] sm:$0xff]
  %v92 = vld [vmem:[%s1 + $0xa8] sm:$0xff]
  %v93 = vld [vmem:[%s1 + $0xb0] sm:$0xff]
  %v94 = vld [vmem:[%s1 + $0xb8] sm:$0xff]
  %v95 = vrot.slane %v30, 7
  %v96 = vrot.slane %v31, 7
  %vm97 = vcmp.lt.s32.totalorder %v33, 1
  %v98 = vsel %vm97, %v95, %v96
  %v99 = vsel %vm97, %v96, %v95
  %v100 = vmul.f32 %v99, %v63
  %v101 = vmul.f32 %v98, %v64
  %v102 = vpack.c.bf16 %v101, %v100
  %v103 = vpack.c.bf16 %v72, %v71
  %v104 = vpack.c.bf16 %v74, %v73
  %v105 = vpack.c.bf16 %v76, %v75
  %v106 = vpack.c.bf16 %v78, %v77
  %v107 = vpack.c.bf16 %v31, %v30
  %v108 = vpack.c.bf16 %v80, %v79
  %v109 = vpack.c.bf16 %v82, %v81
  %v110 = vpack.c.bf16 %v84, %v83
  %v111 = vpack.c.bf16 %v86, %v85
  %vm112 = vcmask 523264
  %v114 = vsel %vm112, %v107, 0
  %116 = vmatprep.subr.bf16.mxu0 0
  %117 = vmatpush1.bf16.msra.mxu0 %v108
  %118 = vmatprep.subr.bf16.mxu0 0
  %119 = vmatpush1.bf16.msra.mxu0 %v109
  %120 = vmatprep.subr.bf16.mxu0 0
  %121 = vmatpush1.bf16.msra.mxu0 %v110
  %122 = vmatprep.subr.bf16.mxu0 0
  %123 = vmatpush1.bf16.msra.mxu0 %v111
  %124 = vmatprep.subr.bf16.mxu0 0
  %125 = vmatpush1.bf16.msra.mxu0 0
  %126 = vmatprep.subr.bf16.mxu0 0
  %127 = vmatpush1.bf16.msra.mxu0 0
  %128 = vmatprep.subr.bf16.mxu0 0
  %129 = vmatpush1.bf16.msra.mxu0 0
  %130 = vmatprep.subr.bf16.mxu0 0
  %131 = vmatpush1.bf16.msra.mxu0 0
  %132 = vmatprep.subr.bf16.mxu0 0
  %133 = vmatpush1.bf16.msra.mxu0 0
  %134 = vmatprep.subr.bf16.mxu0 0
  %135 = vmatpush1.bf16.msra.mxu0 0
  %136 = vmatprep.subr.bf16.mxu0 0
  %137 = vmatpush1.bf16.msra.mxu0 0
  %138 = vmatprep.subr.bf16.mxu0 0
  %139 = vmatpush1.bf16.msra.mxu0 0
  %140 = vmatprep.subr.bf16.mxu0 0
  %141 = vmatpush1.bf16.msra.mxu0 0
  %142 = vmatprep.subr.bf16.mxu0 0
  %143 = vmatpush1.bf16.msra.mxu0 0
  %144 = vmatprep.subr.bf16.mxu0 0
  %145 = vmatpush1.bf16.msra.mxu0 0
  %146 = vmatprep.subr.bf16.mxu0 0
  %147 = vmatpush1.bf16.msra.mxu0 0
  %148 = vmatprep.mubr.bf16.mxu0 0
  %149 = vmatmul.mubr.bf16.gmra.mrb[0].mxu0 %v114
  %v150 = vpop.f32.mrb[0].mxu0
  %v151 = vadd.f32 0.0, %v150
  %v152 = vpop.f32.mrb[0].mxu0
  %v153 = vpop.f32.mrb[0].mxu0
  %v154 = vadd.f32 0.0, %v153
  %v155 = vpop.f32.mrb[0].mxu0
  %156 = vdwg.mxu0
  %v158 = vsel %vm112, %v102, 0
  %160 = vmatprep.subr.bf16.mxu0 0
  %161 = vmatpush1.bf16.msra.mxu0 %v103
  %162 = vmatprep.subr.bf16.mxu0 0
  %163 = vmatpush1.bf16.msra.mxu0 %v104
  %164 = vmatprep.subr.bf16.mxu0 0
  %165 = vmatpush1.bf16.msra.mxu0 %v105
  %166 = vmatprep.subr.bf16.mxu0 0
  %167 = vmatpush1.bf16.msra.mxu0 %v106
  %168 = vmatprep.subr.bf16.mxu0 0
  %169 = vmatpush1.bf16.msra.mxu0 0
  %170 = vmatprep.subr.bf16.mxu0 0
  %171 = vmatpush1.bf16.msra.mxu0 0
  %172 = vmatprep.subr.bf16.mxu0 0
  %173 = vmatpush1.bf16.msra.mxu0 0
  %174 = vmatprep.subr.bf16.mxu0 0
  %175 = vmatpush1.bf16.msra.mxu0 0
  %176 = vmatprep.subr.bf16.mxu0 0
  %177 = vmatpush1.bf16.msra.mxu0 0
  %178 = vmatprep.subr.bf16.mxu0 0
  %179 = vmatpush1.bf16.msra.mxu0 0
  %180 = vmatprep.subr.bf16.mxu0 0
  %181 = vmatpush1.bf16.msra.mxu0 0
  %182 = vmatprep.subr.bf16.mxu0 0
  %183 = vmatpush1.bf16.msra.mxu0 0
  %184 = vmatprep.subr.bf16.mxu0 0
  %185 = vmatpush1.bf16.msra.mxu0 0
  %186 = vmatprep.subr.bf16.mxu0 0
  %187 = vmatpush1.bf16.msra.mxu0 0
  %188 = vmatprep.subr.bf16.mxu0 0
  %189 = vmatpush1.bf16.msra.mxu0 0
  %190 = vmatprep.subr.bf16.mxu0 0
  %191 = vmatpush1.bf16.msra.mxu0 0
  %192 = vmatprep.mubr.bf16.mxu0 0
  %193 = vmatmul.mubr.bf16.gmra.mrb[0].mxu0 %v158
  %v194 = vpop.f32.mrb[0].mxu0
  %v195 = vadd.f32 %v151, %v194
  %v196 = vpop.f32.mrb[0].mxu0
  %v197 = vpop.f32.mrb[0].mxu0
  %v198 = vadd.f32 %v154, %v197
  %v199 = vpop.f32.mrb[0].mxu0
  %200 = vdwg.mxu0
  %v201 = vrot.slane %v30, 1
  %v202 = vrot.slane %v31, 1
  %vm203 = vcmp.lt.s32.totalorder %v33, 7
  %v204 = vsel %vm203, %v201, %v202
  %v205 = vsel %vm203, %v202, %v201
  %v206 = vmul.f32 %v204, %v69
  %v207 = vmul.f32 %v205, %v70
  %v208 = vpack.c.bf16 %v207, %v206
  %v209 = vpack.c.bf16 %v88, %v87
  %v210 = vpack.c.bf16 %v90, %v89
  %v211 = vpack.c.bf16 %v92, %v91
  %v212 = vpack.c.bf16 %v94, %v93
  %v214 = vsel %vm112, %v208, 0
  %216 = vmatprep.subr.bf16.mxu0 0
  %217 = vmatpush1.bf16.msra.mxu0 %v209
  %218 = vmatprep.subr.bf16.mxu0 0
  %219 = vmatpush1.bf16.msra.mxu0 %v210
  %220 = vmatprep.subr.bf16.mxu0 0
  %221 = vmatpush1.bf16.msra.mxu0 %v211
  %222 = vmatprep.subr.bf16.mxu0 0
  %223 = vmatpush1.bf16.msra.mxu0 %v212
  %224 = vmatprep.subr.bf16.mxu0 0
  %225 = vmatpush1.bf16.msra.mxu0 0
  %226 = vmatprep.subr.bf16.mxu0 0
  %227 = vmatpush1.bf16.msra.mxu0 0
  %228 = vmatprep.subr.bf16.mxu0 0
  %229 = vmatpush1.bf16.msra.mxu0 0
  %230 = vmatprep.subr.bf16.mxu0 0
  %231 = vmatpush1.bf16.msra.mxu0 0
  %232 = vmatprep.subr.bf16.mxu0 0
  %233 = vmatpush1.bf16.msra.mxu0 0
  %234 = vmatprep.subr.bf16.mxu0 0
  %235 = vmatpush1.bf16.msra.mxu0 0
  %236 = vmatprep.subr.bf16.mxu0 0
  %237 = vmatpush1.bf16.msra.mxu0 0
  %238 = vmatprep.subr.bf16.mxu0 0
  %239 = vmatpush1.bf16.msra.mxu0 0
  %240 = vmatprep.subr.bf16.mxu0 0
  %241 = vmatpush1.bf16.msra.mxu0 0
  %242 = vmatprep.subr.bf16.mxu0 0
  %243 = vmatpush1.bf16.msra.mxu0 0
  %244 = vmatprep.subr.bf16.mxu0 0
  %245 = vmatpush1.bf16.msra.mxu0 0
  %246 = vmatprep.subr.bf16.mxu0 0
  %247 = vmatpush1.bf16.msra.mxu0 0
  %248 = vmatprep.mubr.bf16.mxu0 0
  %249 = vmatmul.mubr.bf16.gmra.mrb[0].mxu0 %v214
  %v250 = vpop.f32.mrb[0].mxu0
  %v251 = vadd.f32 0.0, %v250
  %v252 = vpop.f32.mrb[0].mxu0
  %v253 = vpop.f32.mrb[0].mxu0
  %v254 = vadd.f32 0.0, %v253
  %v255 = vpop.f32.mrb[0].mxu0
  %256 = vdwg.mxu0
  %v257 = vadd.f32 %v195, %v251
  %v258 = vadd.f32 %v198, %v254
  %v259 = vld [vmem:[%s2] sm:$0x1]
  %v261 = vlaneseq
  %v262 = vshrl.u32 %v261, 7
  %v263 = vsub.s32 0, %v262
  %v264 = vrot.slane %v259, %v263
  %v266 = vadd.f32 %v257, %v264
  %v267 = vadd.f32 %v258, %v264
  %v268 = vld [vmem:[%s3] sm:$0x1]
  %v269 = vld [vmem:[%s4] sm:$0x1]
  %vm270 = vcmask 130048
  %v271 = vsel %vm270, %v266, 0.0
  %v272 = vsel %vm270, %v267, 0.0
  %v273 = vadd.f32 %v271, %v272
  %v274 = vrot.slane %v273, 4
  %v275 = vadd.f32 %v273, %v274
  %v276 = vrot.slane %v275, 2
  %v277 = vadd.f32 %v275, %v276
  %v278 = vrot.slane %v277, 1
  %v279 = vadd.f32 %v277, %v278
  %v280 = vrcp.pop 16.0
  %v281 = vmul.f32 %v279, %v280
  %v282 = vsub.f32 %v266, %v281
  %v283 = vsub.f32 %v267, %v281
  %v284 = vmul.f32 %v282, %v282
  %v285 = vmul.f32 %v283, %v283
  %v286 = vsel %vm270, %v284, 0.0
  %v287 = vsel %vm270, %v285, 0.0
  %v288 = vadd.f32 %v286, %v287
  %v289 = vrot.slane %v288, 4
  %v290 = vadd.f32 %v288, %v289
  %v291 = vrot.slane %v290, 2
  %v292 = vadd.f32 %v290, %v291
  %v293 = vrot.slane %v292, 1
  %v294 = vadd.f32 %v292, %v293
  %v295 = vmul.f32 %v294, %v280
  %v296 = vadd.f32 %v295, 1e-05
  %v297 = vrsqrt.pop %v296
  %v298 = vmul.f32 %v282, %v297
  %v299 = vmul.f32 %v283, %v297
  %v301 = vlaneseq
  %v302 = vshrl.u32 %v301, 7
  %v303 = vsub.s32 0, %v302
  %v304 = vrot.slane %v268, %v303
  %v306 = vmul.f32 %v298, %v304
  %v307 = vmul.f32 %v299, %v304
  %v309 = vlaneseq
  %v310 = vshrl.u32 %v309, 7
  %v311 = vsub.s32 0, %v310
  %v312 = vrot.slane %v269, %v311
  %v314 = vadd.f32 %v306, %v312
  %v315 = vadd.f32 %v307, %v312
  %v316 = vmax.f32 %v314, 0.0
  %v317 = vmax.f32 %v315, 0.0
  %v318 = vld [vmem:[%s5] sm:$0xff]
  %v319 = vld [vmem:[%s5 + $0x8] sm:$0xff]
  %v320 = vld [vmem:[%s5 + $0x10] sm:$0xff]
  %v321 = vld [vmem:[%s5 + $0x18] sm:$0xff]
  %v322 = vld [vmem:[%s5 + $0x20] sm:$0xff]
  %v323 = vld [vmem:[%s5 + $0x28] sm:$0xff]
  %v324 = vrot.slane %v316, 7
  %v325 = vrot.slane %v317, 7
  %v326 = vsel %vm97, %v324, %v325
  %v327 = vsel %vm97, %v325, %v324
  %v328 = vmul.f32 %v327, %v63
  %v329 = vmul.f32 %v326, %v64
  %v330 = vpack.c.bf16 %v329, %v328
  %v331 = vpack.c.bf16 %v319, %v318
  %v332 = vpack.c.bf16 %v317, %v316
  %v333 = vpack.c.bf16 %v321, %v320
  %v335 = vsel %vm270, %v332, 0
  %337 = vmatprep.subr.bf16.mxu0 0
  %338 = vmatpush1.bf16.msra.mxu0 %v333
  %339 = vmatprep.subr.bf16.mxu0 0
  %340 = vmatpush1.bf16.msra.mxu0 0
  %341 = vmatprep.subr.bf16.mxu0 0
  %342 = vmatpush1.bf16.msra.mxu0 0
  %343 = vmatprep.subr.bf16.mxu0 0
  %344 = vmatpush1.bf16.msra.mxu0 0
  %345 = vmatprep.subr.bf16.mxu0 0
  %346 = vmatpush1.bf16.msra.mxu0 0
  %347 = vmatprep.subr.bf16.mxu0 0
  %348 = vmatpush1.bf16.msra.mxu0 0
  %349 = vmatprep.subr.bf16.mxu0 0
  %350 = vmatpush1.bf16.msra.mxu0 0
  %351 = vmatprep.subr.bf16.mxu0 0
  %352 = vmatpush1.bf16.msra.mxu0 0
  %353 = vmatprep.subr.bf16.mxu0 0
  %354 = vmatpush1.bf16.msra.mxu0 0
  %355 = vmatprep.subr.bf16.mxu0 0
  %356 = vmatpush1.bf16.msra.mxu0 0
  %357 = vmatprep.subr.bf16.mxu0 0
  %358 = vmatpush1.bf16.msra.mxu0 0
  %359 = vmatprep.subr.bf16.mxu0 0
  %360 = vmatpush1.bf16.msra.mxu0 0
  %361 = vmatprep.subr.bf16.mxu0 0
  %362 = vmatpush1.bf16.msra.mxu0 0
  %363 = vmatprep.subr.bf16.mxu0 0
  %364 = vmatpush1.bf16.msra.mxu0 0
  %365 = vmatprep.subr.bf16.mxu0 0
  %366 = vmatpush1.bf16.msra.mxu0 0
  %367 = vmatprep.subr.bf16.mxu0 0
  %368 = vmatpush1.bf16.msra.mxu0 0
  %369 = vmatprep.mubr.bf16.mxu0 0
  %370 = vmatmul.mubr.bf16.gmra.mrb[0].mxu0 %v335
  %v371 = vpop.f32.mrb[0].mxu0
  %v372 = vadd.f32 0.0, %v371
  %v373 = vpop.f32.mrb[0].mxu0
  %v374 = vpop.f32.mrb[0].mxu0
  %v375 = vadd.f32 0.0, %v374
  %v376 = vpop.f32.mrb[0].mxu0
  %377 = vdwg.mxu0
  %v379 = vsel %vm270, %v330, 0
  %381 = vmatprep.subr.bf16.mxu0 0
  %382 = vmatpush1.bf16.msra.mxu0 %v331
  %383 = vmatprep.subr.bf16.mxu0 0
  %384 = vmatpush1.bf16.msra.mxu0 0
  %385 = vmatprep.subr.bf16.mxu0 0
  %386 = vmatpush1.bf16.msra.mxu0 0
  %387 = vmatprep.subr.bf16.mxu0 0
  %388 = vmatpush1.bf16.msra.mxu0 0
  %389 = vmatprep.subr.bf16.mxu0 0
  %390 = vmatpush1.bf16.msra.mxu0 0
  %391 = vmatprep.subr.bf16.mxu0 0
  %392 = vmatpush1.bf16.msra.mxu0 0
  %393 = vmatprep.subr.bf16.mxu0 0
  %394 = vmatpush1.bf16.msra.mxu0 0
  %395 = vmatprep.subr.bf16.mxu0 0
  %396 = vmatpush1.bf16.msra.mxu0 0
  %397 = vmatprep.subr.bf16.mxu0 0
  %398 = vmatpush1.bf16.msra.mxu0 0
  %399 = vmatprep.subr.bf16.mxu0 0
  %400 = vmatpush1.bf16.msra.mxu0 0
  %401 = vmatprep.subr.bf16.mxu0 0
  %402 = vmatpush1.bf16.msra.mxu0 0
  %403 = vmatprep.subr.bf16.mxu0 0
  %404 = vmatpush1.bf16.msra.mxu0 0
  %405 = vmatprep.subr.bf16.mxu0 0
  %406 = vmatpush1.bf16.msra.mxu0 0
  %407 = vmatprep.subr.bf16.mxu0 0
  %408 = vmatpush1.bf16.msra.mxu0 0
  %409 = vmatprep.subr.bf16.mxu0 0
  %410 = vmatpush1.bf16.msra.mxu0 0
  %411 = vmatprep.subr.bf16.mxu0 0
  %412 = vmatpush1.bf16.msra.mxu0 0
  %413 = vmatprep.mubr.bf16.mxu0 0
  %414 = vmatmul.mubr.bf16.gmra.mrb[0].mxu0 %v379
  %v415 = vpop.f32.mrb[0].mxu0
  %v416 = vadd.f32 %v372, %v415
  %v417 = vpop.f32.mrb[0].mxu0
  %v418 = vpop.f32.mrb[0].mxu0
  %v419 = vadd.f32 %v375, %v418
  %v420 = vpop.f32.mrb[0].mxu0
  %421 = vdwg.mxu0
  %v422 = vrot.slane %v316, 1
  %v423 = vrot.slane %v317, 1
  %v424 = vsel %vm203, %v422, %v423
  %v425 = vsel %vm203, %v423, %v422
  %v426 = vmul.f32 %v424, %v69
  %v427 = vmul.f32 %v425, %v70
  %v428 = vpack.c.bf16 %v427, %v426
  %v429 = vpack.c.bf16 %v323, %v322
  %v431 = vsel %vm270, %v428, 0
  %433 = vmatprep.subr.bf16.mxu0 0
  %434 = vmatpush1.bf16.msra.mxu0 %v429
  %435 = vmatprep.subr.bf16.mxu0 0
  %436 = vmatpush1.bf16.msra.mxu0 0
  %437 = vmatprep.subr.bf16.mxu0 0
  %438 = vmatpush1.bf16.msra.mxu0 0
  %439 = vmatprep.subr.bf16.mxu0 0
  %440 = vmatpush1.bf16.msra.mxu0 0
  %441 = vmatprep.subr.bf16.mxu0 0
  %442 = vmatpush1.bf16.msra.mxu0 0
  %443 = vmatprep.subr.bf16.mxu0 0
  %444 = vmatpush1.bf16.msra.mxu0 0
  %445 = vmatprep.subr.bf16.mxu0 0
  %446 = vmatpush1.bf16.msra.mxu0 0
  %447 = vmatprep.subr.bf16.mxu0 0
  %448 = vmatpush1.bf16.msra.mxu0 0
  %449 = vmatprep.subr.bf16.mxu0 0
  %450 = vmatpush1.bf16.msra.mxu0 0
  %451 = vmatprep.subr.bf16.mxu0 0
  %452 = vmatpush1.bf16.msra.mxu0 0
  %453 = vmatprep.subr.bf16.mxu0 0
  %454 = vmatpush1.bf16.msra.mxu0 0
  %455 = vmatprep.subr.bf16.mxu0 0
  %456 = vmatpush1.bf16.msra.mxu0 0
  %457 = vmatprep.subr.bf16.mxu0 0
  %458 = vmatpush1.bf16.msra.mxu0 0
  %459 = vmatprep.subr.bf16.mxu0 0
  %460 = vmatpush1.bf16.msra.mxu0 0
  %461 = vmatprep.subr.bf16.mxu0 0
  %462 = vmatpush1.bf16.msra.mxu0 0
  %463 = vmatprep.subr.bf16.mxu0 0
  %464 = vmatpush1.bf16.msra.mxu0 0
  %465 = vmatprep.mubr.bf16.mxu0 0
  %466 = vmatmul.mubr.bf16.gmra.mrb[0].mxu0 %v431
  %v467 = vpop.f32.mrb[0].mxu0
  %v468 = vadd.f32 0.0, %v467
  %v469 = vpop.f32.mrb[0].mxu0
  %v470 = vpop.f32.mrb[0].mxu0
  %v471 = vadd.f32 0.0, %v470
  %v472 = vpop.f32.mrb[0].mxu0
  %473 = vdwg.mxu0
  %v474 = vadd.f32 %v416, %v468
  %v475 = vadd.f32 %v419, %v471
  %v476 = vld [vmem:[%s6] sm:$0xff]
  %v477 = vld [vmem:[%s6 + $0x8] sm:$0xff]
  %v478 = vld [vmem:[%s6 + $0x10] sm:$0xff]
  %v479 = vld [vmem:[%s6 + $0x18] sm:$0xff]
  %v480 = vld [vmem:[%s6 + $0x20] sm:$0xff]
  %v481 = vld [vmem:[%s6 + $0x28] sm:$0xff]
  %v482 = vld [vmem:[%s6 + $0x30] sm:$0xff]
  %v483 = vld [vmem:[%s6 + $0x38] sm:$0xff]
  %v484 = vpack.c.bf16 %v477, %v476
  %v485 = vpack.c.bf16 %v479, %v478
  %v486 = vpack.c.bf16 %v481, %v480
  %v487 = vpack.c.bf16 %v483, %v482
  %488 = vmatprep.subr.bf16.mxu0 0
  %489 = vmatpush1.bf16.msra.mxu0 %v484
  %490 = vmatprep.subr.bf16.mxu0 0
  %491 = vmatpush1.bf16.msra.mxu0 %v485
  %492 = vmatprep.subr.bf16.mxu0 0
  %493 = vmatpush1.bf16.msra.mxu0 %v486
  %494 = vmatprep.subr.bf16.mxu0 0
  %495 = vmatpush1.bf16.msra.mxu0 %v487
  %496 = vmatprep.subr.bf16.mxu0 0
  %497 = vmatpush1.bf16.msra.mxu0 0
  %498 = vmatprep.subr.bf16.mxu0 0
  %499 = vmatpush1.bf16.msra.mxu0 0
  %500 = vmatprep.subr.bf16.mxu0 0
  %501 = vmatpush1.bf16.msra.mxu0 0
  %502 = vmatprep.subr.bf16.mxu0 0
  %503 = vmatpush1.bf16.msra.mxu0 0
  %504 = vmatprep.subr.bf16.mxu0 0
  %505 = vmatpush1.bf16.msra.mxu0 0
  %506 = vmatprep.subr.bf16.mxu0 0
  %507 = vmatpush1.bf16.msra.mxu0 0
  %508 = vmatprep.subr.bf16.mxu0 0
  %509 = vmatpush1.bf16.msra.mxu0 0
  %510 = vmatprep.subr.bf16.mxu0 0
  %511 = vmatpush1.bf16.msra.mxu0 0
  %512 = vmatprep.subr.bf16.mxu0 0
  %513 = vmatpush1.bf16.msra.mxu0 0
  %514 = vmatprep.subr.bf16.mxu0 0
  %515 = vmatpush1.bf16.msra.mxu0 0
  %516 = vmatprep.subr.bf16.mxu0 0
  %517 = vmatpush1.bf16.msra.mxu0 0
  %518 = vmatprep.subr.bf16.mxu0 0
  %519 = vmatpush1.bf16.msra.mxu0 0
  %520 = vmatprep.mubr.bf16.mxu0 0
  %521 = vmatmul.mubr.bf16.gmra.mrb[0].mxu0 %v114
  %v522 = vpop.f32.mrb[0].mxu0
  %v523 = vadd.f32 0.0, %v522
  %v524 = vpop.f32.mrb[0].mxu0
  %v525 = vpop.f32.mrb[0].mxu0
  %v526 = vadd.f32 0.0, %v525
  %v527 = vpop.f32.mrb[0].mxu0
  %528 = vdwg.mxu0
  %v529 = vadd.f32 %v474, %v523
  %v530 = vadd.f32 %v475, %v526
  %v531 = vld [vmem:[%s7] sm:$0x1]
  %v533 = vlaneseq
  %v534 = vshrl.u32 %v533, 7
  %v535 = vsub.s32 0, %v534
  %v536 = vrot.slane %v531, %v535
  %v538 = vadd.f32 %v529, %v536
  %v539 = vadd.f32 %v530, %v536
  %540 = vst [vmem:[%s8] sm:$0xff] %v538
  %541 = vst [vmem:[%s8 + $0x8] sm:$0xff] %v539
  // Predicated region
  $region34: #{ladder_vae_forward.10} parent=0 // pred_check
    _
  $region35: #{ladder_vae_forward.10} parent=0 // pred_check_branch
    %543 = sbr.rel (0) target = $region37
  $region36: #{ladder_vae_forward.10} parent=0 // pred_region
    _
  $region37: #{ladder_vae_forward.10} parent=0 // pred_fallthru
    _
  // Predicated region
  $region38: #{ladder_vae_forward.10} parent=0 // pred_check
    _
  $region39: #{ladder_vae_forward.10} parent=0 // pred_check_branch
    %545 = sbr.rel (0) target = $region41
  $region40: #{ladder_vae_forward.10} parent=0 // pred_region
    _
  $region41: #{ladder_vae_forward.10} parent=0 // pred_fallthru
    _

// kernel: ladder_vae_forward.12
$region0: #{ladder_vae_forward.12}
  #allocation0 [shape = 'u32[]', space=smem, size = 0x4, offset = 0x4, fixed_abs, tag = 'smem constant byte address 0x4 - core index']
  #allocation1 [shape = 'u32[144,128]{1,0:T(1,128)}', space=vmem, size = 0x12000, scoped, tag = 'internal scratch']
  %s0 = inlined_call_operand.vmem [shape: f32[2,64], index: 0, kind: input, shape index: {}]
  %s1 = inlined_call_operand.vmem [shape: f32[64,128], index: 1, kind: input, shape index: {}]
  %s2 = inlined_call_operand.vmem [shape: f32[1,128], index: 2, kind: input, shape index: {}]
  %s3 = inlined_call_operand.vmem [shape: f32[2,8], index: 3, kind: input, shape index: {}]
  %s4 = inlined_call_operand.vmem [shape: f32[2,128], index: 4, kind: output, shape index: {0}]
  %s5 = inlined_call_operand.hbm [shape: f32[2,8], index: 5, kind: output, shape index: {1}]
  %6 = xla_tuple %s4, %s5
  %s7 = sld [smem:[#allocation0]]
  $region34: #{ladder_vae_forward.12} parent=0
    _
  %s9 = ssub.s32 1, %s7
  %s10 = scalar_select 0, %s9, %s7
  $region1: #{ladder_vae_forward.12} parent=0
    #allocation2 [shape = 'u8[1024]{0}', space=vmem, size = 0x400, scoped, tag = 'output window, operand 1, single buffered']
    #allocation3 [shape = 's32[1]{0}', space=sflag, size = 0x4, scoped, tag = 'scoped memory for ladder_vae_forward.12']
    %11 = vsyncpa [#allocation3], 0
    // Predicated region
    $region2: #{ladder_vae_forward.12} parent=1 // pred_check
      _
    $region3: #{ladder_vae_forward.12} parent=1 // pred_check_branch
      %13 = sbr.rel (0) target = $region5
    $region4: #{ladder_vae_forward.12} parent=1 // pred_region
      _
    $region5: #{ladder_vae_forward.12} parent=1 // pred_fallthru
      _
    // Predicated region
    $region6: #{ladder_vae_forward.12} parent=1 // pred_check
      _
    $region7: #{ladder_vae_forward.12} parent=1 // pred_check_branch
      %15 = sbr.rel (0) target = $region9
    $region8: #{ladder_vae_forward.12} parent=1 // pred_region
      _
    $region9: #{ladder_vae_forward.12} parent=1 // pred_fallthru
      _
    // Predicated region
    $region10: #{ladder_vae_forward.12} parent=1 // pred_check
      _
    $region11: #{ladder_vae_forward.12} parent=1 // pred_check_branch
      %17 = sbr.rel (0) target = $region13
    $region12: #{ladder_vae_forward.12} parent=1 // pred_region
      _
    $region13: #{ladder_vae_forward.12} parent=1 // pred_fallthru
      _
    // Predicated region
    $region14: #{ladder_vae_forward.12} parent=1 // pred_check
      _
    $region15: #{ladder_vae_forward.12} parent=1 // pred_check_branch
      %19 = sbr.rel (0) target = $region17
    $region16: #{ladder_vae_forward.12} parent=1 // pred_region
      _
    $region17: #{ladder_vae_forward.12} parent=1 // pred_fallthru
      _
    %v21 = vld [vmem:[%s0] sm:$0x3]
    %v22 = vld [vmem:[%s1] sm:$0xff]
    %v23 = vld [vmem:[%s1 + $0x8] sm:$0xff]
    %v24 = vld [vmem:[%s1 + $0x10] sm:$0xff]
    %v25 = vld [vmem:[%s1 + $0x18] sm:$0xff]
    %v26 = vld [vmem:[%s1 + $0x20] sm:$0xff]
    %v27 = vld [vmem:[%s1 + $0x28] sm:$0xff]
    %v28 = vld [vmem:[%s1 + $0x30] sm:$0xff]
    %v29 = vld [vmem:[%s1 + $0x38] sm:$0xff]
    %v30 = vpack.c.bf16 %v21, %v21
    %v31 = vpack.c.bf16 %v23, %v22
    %v32 = vpack.c.bf16 %v25, %v24
    %v33 = vpack.c.bf16 %v27, %v26
    %v34 = vpack.c.bf16 %v29, %v28
    %v35 = vld [vmem:[%s2] sm:$0x1]
    %v37 = vlaneseq
    %v38 = vshrl.u32 %v37, 7
    %v39 = vsub.s32 0, %v38
    %v40 = vrot.slane %v35, %v39
    %vm42 = vcmask 523264
    %v44 = vsel %vm42, %v30, 0
    %46 = vmatprep.subr.bf16.mxu0 0
    %47 = vmatpush1.bf16.msra.mxu0 %v31
    %48 = vmatprep.subr.bf16.mxu0 0
    %49 = vmatpush1.bf16.msra.mxu0 %v32
    %50 = vmatprep.subr.bf16.mxu0 0
    %51 = vmatpush1.bf16.msra.mxu0 %v33
    %52 = vmatprep.subr.bf16.mxu0 0
    %53 = vmatpush1.bf16.msra.mxu0 %v34
    %54 = vmatprep.subr.bf16.mxu0 0
    %55 = vmatpush1.bf16.msra.mxu0 0
    %56 = vmatprep.subr.bf16.mxu0 0
    %57 = vmatpush1.bf16.msra.mxu0 0
    %58 = vmatprep.subr.bf16.mxu0 0
    %59 = vmatpush1.bf16.msra.mxu0 0
    %60 = vmatprep.subr.bf16.mxu0 0
    %61 = vmatpush1.bf16.msra.mxu0 0
    %62 = vmatprep.subr.bf16.mxu0 0
    %63 = vmatpush1.bf16.msra.mxu0 0
    %64 = vmatprep.subr.bf16.mxu0 0
    %65 = vmatpush1.bf16.msra.mxu0 0
    %66 = vmatprep.subr.bf16.mxu0 0
    %67 = vmatpush1.bf16.msra.mxu0 0
    %68 = vmatprep.subr.bf16.mxu0 0
    %69 = vmatpush1.bf16.msra.mxu0 0
    %70 = vmatprep.subr.bf16.mxu0 0
    %71 = vmatpush1.bf16.msra.mxu0 0
    %72 = vmatprep.subr.bf16.mxu0 0
    %73 = vmatpush1.bf16.msra.mxu0 0
    %74 = vmatprep.subr.bf16.mxu0 0
    %75 = vmatpush1.bf16.msra.mxu0 0
    %76 = vmatprep.subr.bf16.mxu0 0
    %77 = vmatpush1.bf16.msra.mxu0 0
    %78 = vmatprep.mubr.bf16.mxu0 0
    %79 = vmatmul.mubr.bf16.gmra.mrb[0].mxu0 %v44
    %v80 = vpop.f32.mrb[0].mxu0
    %v81 = vadd.f32 %v40, %v80
    %v82 = vpop.f32.mrb[0].mxu0
    %v83 = vpop.f32.mrb[0].mxu0
    %v84 = vpop.f32.mrb[0].mxu0
    %85 = vdwg.mxu0
    %86 = vst [vmem:[%s4] sm:$0x3] %v81
    %v87 = vld [vmem:[%s3] sm:$0x3]
    %v88 = vmul.f32 %v81, 0.5
    %v89 = vmul.f32 %v88, 1.442695
    %v90 = vpow.pop %v89
    %92 = vrot.lane.b32.xlu0 %v90, 120
    %v93 = vpop.permute.xlu0 %92
    %v95 = vmul.f32 %v87, %v93
    %v96 = vadd.f32 %v81, %v95
    %vm97 = vcmask 58368
    %98 = vst.msk [vmem:[#allocation2] sm:$0x3] %vm97, %v96
    // Predicated region
    $region18: #{ladder_vae_forward.12} parent=1 // pred_check
      _
    $region19: #{ladder_vae_forward.12} parent=1 // pred_check_branch
      %100 = sbr.rel (0) target = $region21
    $region20: #{ladder_vae_forward.12} parent=1 // pred_region
      _
    $region21: #{ladder_vae_forward.12} parent=1 // pred_fallthru
      _
    // Predicated region
    $region22: #{ladder_vae_forward.12} parent=1 // pred_check
      _
    $region23: #{ladder_vae_forward.12} parent=1 // pred_check_branch
      %102 = sbr.rel (0) target = $region25
    $region24: #{ladder_vae_forward.12} parent=1 // pred_region
      %s104 = ssub.s32 32, 32
      %105 = vsyncadd [#allocation3], %s104
      %s107 = sshll.u32 [#allocation2], 4
      %s108 = int_to_ptr.vmem [resolvable:$true] %s107
      %110 = dma.vmem_to_hbm [thread:$0]  %s108, 32, %s5, [#allocation3]
    $region25: #{ladder_vae_forward.12} parent=1 // pred_fallthru
      _
    // Predicated region
    $region26: #{ladder_vae_forward.12} parent=1 // pred_check
      _
    $region27: #{ladder_vae_forward.12} parent=1 // pred_check_branch
      %112 = sbr.rel (0) target = $region29
    $region28: #{ladder_vae_forward.12} parent=1 // pred_region
      _
    $region29: #{ladder_vae_forward.12} parent=1 // pred_fallthru
      _
    // Predicated region
    $region30: #{ladder_vae_forward.12} parent=1 // pred_check
      _
    $region31: #{ladder_vae_forward.12} parent=1 // pred_check_branch
      %114 = sbr.rel (0) target = $region33
    $region32: #{ladder_vae_forward.12} parent=1 // pred_region
      %115 = dma.done [#allocation3], 32
    $region33: #{ladder_vae_forward.12} parent=1 // pred_fallthru
      _
    %116 = vsyncpa [#allocation3], 1

// kernel: ladder_vae_forward.11
$region0: #{ladder_vae_forward.11}
  #allocation0 [shape = 'u32[]', space=smem, size = 0x4, offset = 0x4, fixed_abs, tag = 'smem constant byte address 0x4 - core index']
  #allocation1 [shape = 'u32[144,128]{1,0:T(1,128)}', space=vmem, size = 0x12000, scoped, tag = 'internal scratch']
  %s0 = inlined_call_operand.vmem [shape: f32[8,32], index: 0, kind: input, shape index: {}]
  %s1 = inlined_call_operand.vmem [shape: f32[96,8], index: 1, kind: input, shape index: {}]
  %s2 = inlined_call_operand.vmem [shape: f32[1,8], index: 2, kind: input, shape index: {}]
  %s3 = inlined_call_operand.vmem [shape: f32[1,8], index: 3, kind: input, shape index: {}]
  %s4 = inlined_call_operand.vmem [shape: f32[1,8], index: 4, kind: input, shape index: {}]
  %s5 = inlined_call_operand.vmem [shape: f32[24,128], index: 5, kind: input, shape index: {}]
  %s6 = inlined_call_operand.vmem [shape: f32[32,128], index: 6, kind: input, shape index: {}]
  %s7 = inlined_call_operand.vmem [shape: f32[1,128], index: 7, kind: input, shape index: {}]
  %s8 = inlined_call_operand.vmem [shape: f32[8,128], index: 8, kind: output, shape index: {}]
  %s9 = sld [smem:[#allocation0]]
  $region42: #{ladder_vae_forward.11} parent=0
    _
  %s11 = ssub.s32 1, %s9
  %s12 = scalar_select 0, %s11, %s9
  // Predicated region
  $region2: #{ladder_vae_forward.11} parent=0 // pred_check
    _
  $region3: #{ladder_vae_forward.11} parent=0 // pred_check_branch
    %14 = sbr.rel (0) target = $region5
  $region4: #{ladder_vae_forward.11} parent=0 // pred_region
    _
  $region5: #{ladder_vae_forward.11} parent=0 // pred_fallthru
    _
  // Predicated region
  $region6: #{ladder_vae_forward.11} parent=0 // pred_check
    _
  $region7: #{ladder_vae_forward.11} parent=0 // pred_check_branch
    %16 = sbr.rel (0) target = $region9
  $region8: #{ladder_vae_forward.11} parent=0 // pred_region
    _
  $region9: #{ladder_vae_forward.11} parent=0 // pred_fallthru
    _
  // Predicated region
  $region10: #{ladder_vae_forward.11} parent=0 // pred_check
    _
  $region11: #{ladder_vae_forward.11} parent=0 // pred_check_branch
    %18 = sbr.rel (0) target = $region13
  $region12: #{ladder_vae_forward.11} parent=0 // pred_region
    _
  $region13: #{ladder_vae_forward.11} parent=0 // pred_fallthru
    _
  // Predicated region
  $region14: #{ladder_vae_forward.11} parent=0 // pred_check
    _
  $region15: #{ladder_vae_forward.11} parent=0 // pred_check_branch
    %20 = sbr.rel (0) target = $region17
  $region16: #{ladder_vae_forward.11} parent=0 // pred_region
    _
  $region17: #{ladder_vae_forward.11} parent=0 // pred_fallthru
    _
  // Predicated region
  $region18: #{ladder_vae_forward.11} parent=0 // pred_check
    _
  $region19: #{ladder_vae_forward.11} parent=0 // pred_check_branch
    %22 = sbr.rel (0) target = $region21
  $region20: #{ladder_vae_forward.11} parent=0 // pred_region
    _
  $region21: #{ladder_vae_forward.11} parent=0 // pred_fallthru
    _
  // Predicated region
  $region22: #{ladder_vae_forward.11} parent=0 // pred_check
    _
  $region23: #{ladder_vae_forward.11} parent=0 // pred_check_branch
    %24 = sbr.rel (0) target = $region25
  $region24: #{ladder_vae_forward.11} parent=0 // pred_region
    _
  $region25: #{ladder_vae_forward.11} parent=0 // pred_fallthru
    _
  // Predicated region
  $region26: #{ladder_vae_forward.11} parent=0 // pred_check
    _
  $region27: #{ladder_vae_forward.11} parent=0 // pred_check_branch
    %26 = sbr.rel (0) target = $region29
  $region28: #{ladder_vae_forward.11} parent=0 // pred_region
    _
  $region29: #{ladder_vae_forward.11} parent=0 // pred_fallthru
    _
  // Predicated region
  $region30: #{ladder_vae_forward.11} parent=0 // pred_check
    _
  $region31: #{ladder_vae_forward.11} parent=0 // pred_check_branch
    %28 = sbr.rel (0) target = $region33
  $region32: #{ladder_vae_forward.11} parent=0 // pred_region
    _
  $region33: #{ladder_vae_forward.11} parent=0 // pred_fallthru
    _
  %v30 = vld [vmem:[%s0] sm:$0xff]
  %v31 = vlaneseq
  %v32 = vshrl.u32 %v31, 7
  %vm33 = vcmp.lt.s32.totalorder %v32, 0
  %v34 = vsub.s32 0, %v32
  %v35 = vsel %vm33, %v34, %v32
  %v36 = vshrl.u32 %v35, 2
  %v37 = vand.u32 %v35, 3
  %v38 = vsub.s32 0, %v37
  %v39 = vsel %vm33, %v38, %v37
  %vm40 = vcmp.ne.s32.totalorder %v39, 0
  %vm41 = vcmp.lt.s32.totalorder %v39, 0
  %vm42 = vmand %vm41, %vm40
  %v43 = vadd.s32 %v39, 4
  %v44 = vsel %vm42, %v43, %v39
  %vm45 = vcmp.ne.s32.totalorder %v44, 0
  %v46 = vsel %vm45, 1, 0
  %v47 = vcvt.s32.f32 %v46
  %vm48 = vcmp.ne.s32.totalorder %v44, 3
  %v49 = vsel %vm48, 1, 0
  %v50 = vcvt.s32.f32 %v49
  %v51 = vld [vmem:[%s1] sm:$0xff]
  %v52 = vld [vmem:[%s1 + $0x8] sm:$0xff]
  %v53 = vld [vmem:[%s1 + $0x10] sm:$0xff]
  %v54 = vld [vmem:[%s1 + $0x18] sm:$0xff]
  %v55 = vld [vmem:[%s1 + $0x20] sm:$0xff]
  %v56 = vld [vmem:[%s1 + $0x28] sm:$0xff]
  %v57 = vld [vmem:[%s1 + $0x30] sm:$0xff]
  %v58 = vld [vmem:[%s1 + $0x38] sm:$0xff]
  %v59 = vld [vmem:[%s1 + $0x40] sm:$0xff]
  %v60 = vld [vmem:[%s1 + $0x48] sm:$0xff]
  %v61 = vld [vmem:[%s1 + $0x50] sm:$0xff]
  %v62 = vld [vmem:[%s1 + $0x58] sm:$0xff]
  %v63 = vrot.slane %v30, 7
  %v64 = vmul.f32 %v63, %v47
  %v65 = vpack.c.bf16 %v64, %v64
  %v66 = vpack.c.bf16 %v52, %v51
  %v67 = vpack.c.bf16 %v54, %v53
  %v68 = vpack.c.bf16 %v30, %v30
  %v69 = vpack.c.bf16 %v56, %v55
  %v70 = vpack.c.bf16 %v58, %v57
  %vm71 = vcmask 261120
  %v73 = vsel %vm71, %v68, 0
  %75 = vmatprep.subr.bf16.mxu0 0
  %76 = vmatpush1.bf16.msra.mxu0 %v69
  %77 = vmatprep.subr.bf16.mxu0 0
  %78 = vmatpush1.bf16.msra.mxu0 %v70
  %79 = vmatprep.subr.bf16.mxu0 0
  %80 = vmatpush1.bf16.msra.mxu0 0
  %81 = vmatprep.subr.bf16.mxu0 0
  %82 = vmatpush1.bf16.msra.mxu0 0
  %83 = vmatprep.subr.bf16.mxu0 0
  %84 = vmatpush1.bf16.msra.mxu0 0
  %85 = vmatprep.subr.bf16.mxu0 0
  %86 = vmatpush1.bf16.msra.mxu0 0
  %87 = vmatprep.subr.bf16.mxu0 0
  %88 = vmatpush1.bf16.msra.mxu0 0
  %89 = vmatprep.subr.bf16.mxu0 0
  %90 = vmatpush1.bf16.msra.mxu0 0
  %91 = vmatprep.subr.bf16.mxu0 0
  %92 = vmatpush1.bf16.msra.mxu0 0
  %93 = vmatprep.subr.bf16.mxu0 0
  %94 = vmatpush1.bf16.msra.mxu0 0
  %95 = vmatprep.subr.bf16.mxu0 0
  %96 = vmatpush1.bf16.msra.mxu0 0
  %97 = vmatprep.subr.bf16.mxu0 0
  %98 = vmatpush1.bf16.msra.mxu0 0
  %99 = vmatprep.subr.bf16.mxu0 0
  %100 = vmatpush1.bf16.msra.mxu0 0
  %101 = vmatprep.subr.bf16.mxu0 0
  %102 = vmatpush1.bf16.msra.mxu0 0
  %103 = vmatprep.subr.bf16.mxu0 0
  %104 = vmatpush1.bf16.msra.mxu0 0
  %105 = vmatprep.subr.bf16.mxu0 0
  %106 = vmatpush1.bf16.msra.mxu0 0
  %107 = vmatprep.mubr.bf16.mxu0 0
  %108 = vmatmul.mubr.bf16.gmra.mrb[0].mxu0 %v73
  %v109 = vpop.f32.mrb[0].mxu0
  %v110 = vadd.f32 0.0, %v109
  %v111 = vpop.f32.mrb[0].mxu0
  %v112 = vpop.f32.mrb[0].mxu0
  %v113 = vpop.f32.mrb[0].mxu0
  %114 = vdwg.mxu0
  %v116 = vsel %vm71, %v65, 0
  %118 = vmatprep.subr.bf16.mxu0 0
  %119 = vmatpush1.bf16.msra.mxu0 %v66
  %120 = vmatprep.subr.bf16.mxu0 0
  %121 = vmatpush1.bf16.msra.mxu0 %v67
  %122 = vmatprep.subr.bf16.mxu0 0
  %123 = vmatpush1.bf16.msra.mxu0 0
  %124 = vmatprep.subr.bf16.mxu0 0
  %125 = vmatpush1.bf16.msra.mxu0 0
  %126 = vmatprep.subr.bf16.mxu0 0
  %127 = vmatpush1.bf16.msra.mxu0 0
  %128 = vmatprep.subr.bf16.mxu0 0
  %129 = vmatpush1.bf16.msra.mxu0 0
  %130 = vmatprep.subr.bf16.mxu0 0
  %131 = vmatpush1.bf16.msra.mxu0 0
  %132 = vmatprep.subr.bf16.mxu0 0
  %133 = vmatpush1.bf16.msra.mxu0 0
  %134 = vmatprep.subr.bf16.mxu0 0
  %135 = vmatpush1.bf16.msra.mxu0 0
  %136 = vmatprep.subr.bf16.mxu0 0
  %137 = vmatpush1.bf16.msra.mxu0 0
  %138 = vmatprep.subr.bf16.mxu0 0
  %139 = vmatpush1.bf16.msra.mxu0 0
  %140 = vmatprep.subr.bf16.mxu0 0
  %141 = vmatpush1.bf16.msra.mxu0 0
  %142 = vmatprep.subr.bf16.mxu0 0
  %143 = vmatpush1.bf16.msra.mxu0 0
  %144 = vmatprep.subr.bf16.mxu0 0
  %145 = vmatpush1.bf16.msra.mxu0 0
  %146 = vmatprep.subr.bf16.mxu0 0
  %147 = vmatpush1.bf16.msra.mxu0 0
  %148 = vmatprep.subr.bf16.mxu0 0
  %149 = vmatpush1.bf16.msra.mxu0 0
  %150 = vmatprep.mubr.bf16.mxu0 0
  %151 = vmatmul.mubr.bf16.gmra.mrb[0].mxu0 %v116
  %v152 = vpop.f32.mrb[0].mxu0
  %v153 = vadd.f32 %v110, %v152
  %v154 = vpop.f32.mrb[0].mxu0
  %v155 = vpop.f32.mrb[0].mxu0
  %v156 = vpop.f32.mrb[0].mxu0
  %157 = vdwg.mxu0
  %v158 = vrot.slane %v30, 1
  %v159 = vmul.f32 %v158, %v50
  %v160 = vpack.c.bf16 %v159, %v159
  %v161 = vpack.c.bf16 %v60, %v59
  %v162 = vpack.c.bf16 %v62, %v61
  %v164 = vsel %vm71, %v160, 0
  %166 = vmatprep.subr.bf16.mxu0 0
  %167 = vmatpush1.bf16.msra.mxu0 %v161
  %168 = vmatprep.subr.bf16.mxu0 0
  %169 = vmatpush1.bf16.msra.mxu0 %v162
  %170 = vmatprep.subr.bf16.mxu0 0
  %171 = vmatpush1.bf16.msra.mxu0 0
  %172 = vmatprep.subr.bf16.mxu0 0
  %173 = vmatpush1.bf16.msra.mxu0 0
  %174 = vmatprep.subr.bf16.mxu0 0
  %175 = vmatpush1.bf16.msra.mxu0 0
  %176 = vmatprep.subr.bf16.mxu0 0
  %177 = vmatpush1.bf16.msra.mxu0 0
  %178 = vmatprep.subr.bf16.mxu0 0
  %179 = vmatpush1.bf16.msra.mxu0 0
  %180 = vmatprep.subr.bf16.mxu0 0
  %181 = vmatpush1.bf16.msra.mxu0 0
  %182 = vmatprep.subr.bf16.mxu0 0
  %183 = vmatpush1.bf16.msra.mxu0 0
  %184 = vmatprep.subr.bf16.mxu0 0
  %185 = vmatpush1.bf16.msra.mxu0 0
  %186 = vmatprep.subr.bf16.mxu0 0
  %187 = vmatpush1.bf16.msra.mxu0 0
  %188 = vmatprep.subr.bf16.mxu0 0
  %189 = vmatpush1.bf16.msra.mxu0 0
  %190 = vmatprep.subr.bf16.mxu0 0
  %191 = vmatpush1.bf16.msra.mxu0 0
  %192 = vmatprep.subr.bf16.mxu0 0
  %193 = vmatpush1.bf16.msra.mxu0 0
  %194 = vmatprep.subr.bf16.mxu0 0
  %195 = vmatpush1.bf16.msra.mxu0 0
  %196 = vmatprep.subr.bf16.mxu0 0
  %197 = vmatpush1.bf16.msra.mxu0 0
  %198 = vmatprep.mubr.bf16.mxu0 0
  %199 = vmatmul.mubr.bf16.gmra.mrb[0].mxu0 %v164
  %v200 = vpop.f32.mrb[0].mxu0
  %v201 = vadd.f32 0.0, %v200
  %v202 = vpop.f32.mrb[0].mxu0
  %v203 = vpop.f32.mrb[0].mxu0
  %v204 = vpop.f32.mrb[0].mxu0
  %205 = vdwg.mxu0
  %v206 = vadd.f32 %v153, %v201
  %v207 = vld [vmem:[%s2] sm:$0x1]
  %v209 = vlaneseq
  %v210 = vshrl.u32 %v209, 7
  %v211 = vsub.s32 0, %v210
  %v212 = vrot.slane %v207, %v211
  %v214 = vadd.f32 %v206, %v212
  %v215 = vld [vmem:[%s3] sm:$0x1]
  %v216 = vld [vmem:[%s4] sm:$0x1]
  %vm217 = vcmask 64512
  %v218 = vsel %vm217, %v214, 0.0
  %v219 = vrot.slane %v218, 4
  %v220 = vadd.f32 %v218, %v219
  %v221 = vrot.slane %v220, 2
  %v222 = vadd.f32 %v220, %v221
  %v223 = vrot.slane %v222, 1
  %v224 = vadd.f32 %v222, %v223
  %v225 = vrcp.pop 8.0
  %v226 = vmul.f32 %v224, %v225
  %v227 = vsub.f32 %v214, %v226
  %v228 = vmul.f32 %v227, %v227
  %v229 = vsel %vm217, %v228, 0.0
  %v230 = vrot.slane %v229, 4
  %v231 = vadd.f32 %v229, %v230
  %v232 = vrot.slane %v231, 2
  %v233 = vadd.f32 %v231, %v232
  %v234 = vrot.slane %v233, 1
  %v235 = vadd.f32 %v233, %v234
  %v236 = vmul.f32 %v235, %v225
  %v237 = vadd.f32 %v236, 1e-05
  %v238 = vrsqrt.pop %v237
  %v239 = vmul.f32 %v227, %v238
  %v241 = vlaneseq
  %v242 = vshrl.u32 %v241, 7
  %v243 = vsub.s32 0, %v242
  %v244 = vrot.slane %v215, %v243
  %v246 = vmul.f32 %v239, %v244
  %v248 = vlaneseq
  %v249 = vshrl.u32 %v248, 7
  %v250 = vsub.s32 0, %v249
  %v251 = vrot.slane %v216, %v250
  %v253 = vadd.f32 %v246, %v251
  %v254 = vmax.f32 %v253, 0.0
  %v255 = vld [vmem:[%s5] sm:$0xff]
  %v256 = vld [vmem:[%s5 + $0x8] sm:$0xff]
  %v257 = vld [vmem:[%s5 + $0x10] sm:$0xff]
  %v258 = vrot.slane %v254, 7
  %v259 = vmul.f32 %v258, %v47
  %v260 = vpack.c.bf16 %v259, %v259
  %v261 = vpack.c.bf16 %v255, %v255
  %v262 = vpack.c.bf16 %v254, %v254
  %v263 = vpack.c.bf16 %v256, %v256
  %v265 = vsel %vm217, %v262, 0
  %vm267 = vcmask 1043456
  %v269 = vsel %vm267, %v263, 0
  %271 = vmatprep.subr.bf16.mxu0 0
  %272 = vmatpush1.bf16.msra.mxu0 %v269
  %273 = vmatprep.subr.bf16.mxu0 0
  %274 = vmatpush1.bf16.msra.mxu0 0
  %275 = vmatprep.subr.bf16.mxu0 0
  %276 = vmatpush1.bf16.msra.mxu0 0
  %277 = vmatprep.subr.bf16.mxu0 0
  %278 = vmatpush1.bf16.msra.mxu0 0
  %279 = vmatprep.subr.bf16.mxu0 0
  %280 = vmatpush1.bf16.msra.mxu0 0
  %281 = vmatprep.subr.bf16.mxu0 0
  %282 = vmatpush1.bf16.msra.mxu0 0
  %283 = vmatprep.subr.bf16.mxu0 0
  %284 = vmatpush1.bf16.msra.mxu0 0
  %285 = vmatprep.subr.bf16.mxu0 0
  %286 = vmatpush1.bf16.msra.mxu0 0
  %287 = vmatprep.subr.bf16.mxu0 0
  %288 = vmatpush1.bf16.msra.mxu0 0
  %289 = vmatprep.subr.bf16.mxu0 0
  %290 = vmatpush1.bf16.msra.mxu0 0
  %291 = vmatprep.subr.bf16.mxu0 0
  %292 = vmatpush1.bf16.msra.mxu0 0
  %293 = vmatprep.subr.bf16.mxu0 0
  %294 = vmatpush1.bf16.msra.mxu0 0
  %295 = vmatprep.subr.bf16.mxu0 0
  %296 = vmatpush1.bf16.msra.mxu0 0
  %297 = vmatprep.subr.bf16.mxu0 0
  %298 = vmatpush1.bf16.msra.mxu0 0
  %299 = vmatprep.subr.bf16.mxu0 0
  %300 = vmatpush1.bf16.msra.mxu0 0
  %301 = vmatprep.subr.bf16.mxu0 0
  %302 = vmatpush1.bf16.msra.mxu0 0
  %303 = vmatprep.mubr.bf16.mxu0 0
  %304 = vmatmul.mubr.bf16.gmra.mrb[0].mxu0 %v265
  %v305 = vpop.f32.mrb[0].mxu0
  %v306 = vadd.f32 0.0, %v305
  %v307 = vpop.f32.mrb[0].mxu0
  %v308 = vpop.f32.mrb[0].mxu0
  %v309 = vpop.f32.mrb[0].mxu0
  %310 = vdwg.mxu0
  %v312 = vsel %vm217, %v260, 0
  %v315 = vsel %vm267, %v261, 0
  %317 = vmatprep.subr.bf16.mxu0 0
  %318 = vmatpush1.bf16.msra.mxu0 %v315
  %319 = vmatprep.subr.bf16.mxu0 0
  %320 = vmatpush1.bf16.msra.mxu0 0
  %321 = vmatprep.subr.bf16.mxu0 0
  %322 = vmatpush1.bf16.msra.mxu0 0
  %323 = vmatprep.subr.bf16.mxu0 0
  %324 = vmatpush1.bf16.msra.mxu0 0
  %325 = vmatprep.subr.bf16.mxu0 0
  %326 = vmatpush1.bf16.msra.mxu0 0
  %327 = vmatprep.subr.bf16.mxu0 0
  %328 = vmatpush1.bf16.msra.mxu0 0
  %329 = vmatprep.subr.bf16.mxu0 0
  %330 = vmatpush1.bf16.msra.mxu0 0
  %331 = vmatprep.subr.bf16.mxu0 0
  %332 = vmatpush1.bf16.msra.mxu0 0
  %333 = vmatprep.subr.bf16.mxu0 0
  %334 = vmatpush1.bf16.msra.mxu0 0
  %335 = vmatprep.subr.bf16.mxu0 0
  %336 = vmatpush1.bf16.msra.mxu0 0
  %337 = vmatprep.subr.bf16.mxu0 0
  %338 = vmatpush1.bf16.msra.mxu0 0
  %339 = vmatprep.subr.bf16.mxu0 0
  %340 = vmatpush1.bf16.msra.mxu0 0
  %341 = vmatprep.subr.bf16.mxu0 0
  %342 = vmatpush1.bf16.msra.mxu0 0
  %343 = vmatprep.subr.bf16.mxu0 0
  %344 = vmatpush1.bf16.msra.mxu0 0
  %345 = vmatprep.subr.bf16.mxu0 0
  %346 = vmatpush1.bf16.msra.mxu0 0
  %347 = vmatprep.subr.bf16.mxu0 0
  %348 = vmatpush1.bf16.msra.mxu0 0
  %349 = vmatprep.mubr.bf16.mxu0 0
  %350 = vmatmul.mubr.bf16.gmra.mrb[0].mxu0 %v312
  %v351 = vpop.f32.mrb[0].mxu0
  %v352 = vadd.f32 %v306, %v351
  %v353 = vpop.f32.mrb[0].mxu0
  %v354 = vpop.f32.mrb[0].mxu0
  %v355 = vpop.f32.mrb[0].mxu0
  %356 = vdwg.mxu0
  %v357 = vrot.slane %v254, 1
  %v358 = vmul.f32 %v357, %v50
  %v359 = vpack.c.bf16 %v358, %v358
  %v360 = vpack.c.bf16 %v257, %v257
  %v362 = vsel %vm217, %v359, 0
  %v365 = vsel %vm267, %v360, 0
  %367 = vmatprep.subr.bf16.mxu0 0
  %368 = vmatpush1.bf16.msra.mxu0 %v365
  %369 = vmatprep.subr.bf16.mxu0 0
  %370 = vmatpush1.bf16.msra.mxu0 0
  %371 = vmatprep.subr.bf16.mxu0 0
  %372 = vmatpush1.bf16.msra.mxu0 0
  %373 = vmatprep.subr.bf16.mxu0 0
  %374 = vmatpush1.bf16.msra.mxu0 0
  %375 = vmatprep.subr.bf16.mxu0 0
  %376 = vmatpush1.bf16.msra.mxu0 0
  %377 = vmatprep.subr.bf16.mxu0 0
  %378 = vmatpush1.bf16.msra.mxu0 0
  %379 = vmatprep.subr.bf16.mxu0 0
  %380 = vmatpush1.bf16.msra.mxu0 0
  %381 = vmatprep.subr.bf16.mxu0 0
  %382 = vmatpush1.bf16.msra.mxu0 0
  %383 = vmatprep.subr.bf16.mxu0 0
  %384 = vmatpush1.bf16.msra.mxu0 0
  %385 = vmatprep.subr.bf16.mxu0 0
  %386 = vmatpush1.bf16.msra.mxu0 0
  %387 = vmatprep.subr.bf16.mxu0 0
  %388 = vmatpush1.bf16.msra.mxu0 0
  %389 = vmatprep.subr.bf16.mxu0 0
  %390 = vmatpush1.bf16.msra.mxu0 0
  %391 = vmatprep.subr.bf16.mxu0 0
  %392 = vmatpush1.bf16.msra.mxu0 0
  %393 = vmatprep.subr.bf16.mxu0 0
  %394 = vmatpush1.bf16.msra.mxu0 0
  %395 = vmatprep.subr.bf16.mxu0 0
  %396 = vmatpush1.bf16.msra.mxu0 0
  %397 = vmatprep.subr.bf16.mxu0 0
  %398 = vmatpush1.bf16.msra.mxu0 0
  %399 = vmatprep.mubr.bf16.mxu0 0
  %400 = vmatmul.mubr.bf16.gmra.mrb[0].mxu0 %v362
  %v401 = vpop.f32.mrb[0].mxu0
  %v402 = vadd.f32 0.0, %v401
  %v403 = vpop.f32.mrb[0].mxu0
  %v404 = vpop.f32.mrb[0].mxu0
  %v405 = vpop.f32.mrb[0].mxu0
  %406 = vdwg.mxu0
  %v407 = vadd.f32 %v352, %v402
  %v408 = vld [vmem:[%s6] sm:$0xff]
  %v409 = vld [vmem:[%s6 + $0x8] sm:$0xff]
  %v410 = vld [vmem:[%s6 + $0x10] sm:$0xff]
  %v411 = vld [vmem:[%s6 + $0x18] sm:$0xff]
  %v412 = vpack.c.bf16 %v409, %v408
  %v413 = vpack.c.bf16 %v411, %v410
  %414 = vmatprep.subr.bf16.mxu0 0
  %415 = vmatpush1.bf16.msra.mxu0 %v412
  %416 = vmatprep.subr.bf16.mxu0 0
  %417 = vmatpush1.bf16.msra.mxu0 %v413
  %418 = vmatprep.subr.bf16.mxu0 0
  %419 = vmatpush1.bf16.msra.mxu0 0
  %420 = vmatprep.subr.bf16.mxu0 0
  %421 = vmatpush1.bf16.msra.mxu0 0
  %422 = vmatprep.subr.bf16.mxu0 0
  %423 = vmatpush1.bf16.msra.mxu0 0
  %424 = vmatprep.subr.bf16.mxu0 0
  %425 = vmatpush1.bf16.msra.mxu0 0
  %426 = vmatprep.subr.bf16.mxu0 0
  %427 = vmatpush1.bf16.msra.mxu0 0
  %428 = vmatprep.subr.bf16.mxu0 0
  %429 = vmatpush1.bf16.msra.mxu0 0
  %430 = vmatprep.subr.bf16.mxu0 0
  %431 = vmatpush1.bf16.msra.mxu0 0
  %432 = vmatprep.subr.bf16.mxu0 0
  %433 = vmatpush1.bf16.msra.mxu0 0
  %434 = vmatprep.subr.bf16.mxu0 0
  %435 = vmatpush1.bf16.msra.mxu0 0
  %436 = vmatprep.subr.bf16.mxu0 0
  %437 = vmatpush1.bf16.msra.mxu0 0
  %438 = vmatprep.subr.bf16.mxu0 0
  %439 = vmatpush1.bf16.msra.mxu0 0
  %440 = vmatprep.subr.bf16.mxu0 0
  %441 = vmatpush1.bf16.msra.mxu0 0
  %442 = vmatprep.subr.bf16.mxu0 0
  %443 = vmatpush1.bf16.msra.mxu0 0
  %444 = vmatprep.subr.bf16.mxu0 0
  %445 = vmatpush1.bf16.msra.mxu0 0
  %446 = vmatprep.mubr.bf16.mxu0 0
  %447 = vmatmul.mubr.bf16.gmra.mrb[0].mxu0 %v73
  %v448 = vpop.f32.mrb[0].mxu0
  %v449 = vadd.f32 0.0, %v448
  %v450 = vpop.f32.mrb[0].mxu0
  %v451 = vpop.f32.mrb[0].mxu0
  %v452 = vpop.f32.mrb[0].mxu0
  %453 = vdwg.mxu0
  %v454 = vadd.f32 %v407, %v449
  %v455 = vld [vmem:[%s7] sm:$0x1]
  %v457 = vlaneseq
  %v458 = vshrl.u32 %v457, 7
  %v459 = vsub.s32 0, %v458
  %v460 = vrot.slane %v455, %v459
  %v462 = vadd.f32 %v454, %v460
  %463 = vst [vmem:[%s8] sm:$0xff] %v462
  // Predicated region
  $region34: #{ladder_vae_forward.11} parent=0 // pred_check
    _
  $region35: #{ladder_vae_forward.11} parent=0 // pred_check_branch
    %465 = sbr.rel (0) target = $region37
  $region36: #{ladder_vae_forward.11} parent=0 // pred_region
    _
  $region37: #{ladder_vae_forward.11} parent=0 // pred_fallthru
    _
  // Predicated region
  $region38: #{ladder_vae_forward.11} parent=0 // pred_check
    _
  $region39: #{ladder_vae_forward.11} parent=0 // pred_check_branch
    %467 = sbr.rel (0) target = $region41
  $region40: #{ladder_vae_forward.11} parent=0 // pred_region
    _
  $region41: #{ladder_vae_forward.11} parent=0 // pred_fallthru
    _

// kernel: ladder_vae_forward.13
$region0: #{ladder_vae_forward.13}
  #allocation0 [shape = 'u32[]', space=smem, size = 0x4, offset = 0x4, fixed_abs, tag = 'smem constant byte address 0x4 - core index']
  #allocation1 [shape = 'u32[144,128]{1,0:T(1,128)}', space=vmem, size = 0x12000, scoped, tag = 'internal scratch']
  %s0 = inlined_call_operand.vmem [shape: f32[2,256], index: 0, kind: input, shape index: {}]
  %s1 = inlined_call_operand.vmem [shape: f32[256,128], index: 1, kind: input, shape index: {}]
  %s2 = inlined_call_operand.vmem [shape: f32[1,128], index: 2, kind: input, shape index: {}]
  %s3 = inlined_call_operand.vmem [shape: f32[2,16], index: 3, kind: input, shape index: {}]
  %s4 = inlined_call_operand.vmem [shape: f32[2,128], index: 4, kind: output, shape index: {0}]
  %s5 = inlined_call_operand.hbm [shape: f32[2,16], index: 5, kind: output, shape index: {1}]
  %6 = xla_tuple %s4, %s5
  %s7 = sld [smem:[#allocation0]]
  $region34: #{ladder_vae_forward.13} parent=0
    _
  %s9 = ssub.s32 1, %s7
  %s10 = scalar_select 0, %s9, %s7
  $region1: #{ladder_vae_forward.13} parent=0
    #allocation2 [shape = 'u8[1024]{0}', space=vmem, size = 0x400, scoped, tag = 'output window, operand 1, single buffered']
    #allocation3 [shape = 's32[1]{0}', space=sflag, size = 0x4, scoped, tag = 'scoped memory for ladder_vae_forward.13']
    %11 = vsyncpa [#allocation3], 0
    // Predicated region
    $region2: #{ladder_vae_forward.13} parent=1 // pred_check
      _
    $region3: #{ladder_vae_forward.13} parent=1 // pred_check_branch
      %13 = sbr.rel (0) target = $region5
    $region4: #{ladder_vae_forward.13} parent=1 // pred_region
      _
    $region5: #{ladder_vae_forward.13} parent=1 // pred_fallthru
      _
    // Predicated region
    $region6: #{ladder_vae_forward.13} parent=1 // pred_check
      _
    $region7: #{ladder_vae_forward.13} parent=1 // pred_check_branch
      %15 = sbr.rel (0) target = $region9
    $region8: #{ladder_vae_forward.13} parent=1 // pred_region
      _
    $region9: #{ladder_vae_forward.13} parent=1 // pred_fallthru
      _
    // Predicated region
    $region10: #{ladder_vae_forward.13} parent=1 // pred_check
      _
    $region11: #{ladder_vae_forward.13} parent=1 // pred_check_branch
      %17 = sbr.rel (0) target = $region13
    $region12: #{ladder_vae_forward.13} parent=1 // pred_region
      _
    $region13: #{ladder_vae_forward.13} parent=1 // pred_fallthru
      _
    // Predicated region
    $region14: #{ladder_vae_forward.13} parent=1 // pred_check
      _
    $region15: #{ladder_vae_forward.13} parent=1 // pred_check_branch
      %19 = sbr.rel (0) target = $region17
    $region16: #{ladder_vae_forward.13} parent=1 // pred_region
      _
    $region17: #{ladder_vae_forward.13} parent=1 // pred_fallthru
      _
    %v21 = vld [vmem:[%s0] sm:$0xf]
    %v22 = vld [vmem:[%s1] sm:$0xff]
    %v23 = vld [vmem:[%s1 + $0x8] sm:$0xff]
    %v24 = vld [vmem:[%s1 + $0x10] sm:$0xff]
    %v25 = vld [vmem:[%s1 + $0x18] sm:$0xff]
    %v26 = vld [vmem:[%s1 + $0x20] sm:$0xff]
    %v27 = vld [vmem:[%s1 + $0x28] sm:$0xff]
    %v28 = vld [vmem:[%s1 + $0x30] sm:$0xff]
    %v29 = vld [vmem:[%s1 + $0x38] sm:$0xff]
    %v30 = vld [vmem:[%s1 + $0x40] sm:$0xff]
    %v31 = vld [vmem:[%s1 + $0x48] sm:$0xff]
    %v32 = vld [vmem:[%s1 + $0x50] sm:$0xff]
    %v33 = vld [vmem:[%s1 + $0x58] sm:$0xff]
    %v34 = vld [vmem:[%s1 + $0x60] sm:$0xff]
    %v35 = vld [vmem:[%s1 + $0x68] sm:$0xff]
    %v36 = vld [vmem:[%s1 + $0x70] sm:$0xff]
    %v37 = vld [vmem:[%s1 + $0x78] sm:$0xff]
    %v38 = vld [vmem:[%s1 + $0x80] sm:$0xff]
    %v39 = vld [vmem:[%s1 + $0x88] sm:$0xff]
    %v40 = vld [vmem:[%s1 + $0x90] sm:$0xff]
    %v41 = vld [vmem:[%s1 + $0x98] sm:$0xff]
    %v42 = vld [vmem:[%s1 + $0xa0] sm:$0xff]
    %v43 = vld [vmem:[%s1 + $0xa8] sm:$0xff]
    %v44 = vld [vmem:[%s1 + $0xb0] sm:$0xff]
    %v45 = vld [vmem:[%s1 + $0xb8] sm:$0xff]
    %v46 = vld [vmem:[%s1 + $0xc0] sm:$0xff]
    %v47 = vld [vmem:[%s1 + $0xc8] sm:$0xff]
    %v48 = vld [vmem:[%s1 + $0xd0] sm:$0xff]
    %v49 = vld [vmem:[%s1 + $0xd8] sm:$0xff]
    %v50 = vld [vmem:[%s1 + $0xe0] sm:$0xff]
    %v51 = vld [vmem:[%s1 + $0xe8] sm:$0xff]
    %v52 = vld [vmem:[%s1 + $0xf0] sm:$0xff]
    %v53 = vld [vmem:[%s1 + $0xf8] sm:$0xff]
    %v56 = vunpack.c.l.s4 1983009808
    %v57 = vunpack.c.0.s8 %v56
    %v58 = vlaneseq
    %v59 = vshrl.u32 %v58, 7
    %v60 = vsub.s32 %v57, %v59
    %v61 = vrot.slane %v21, %v60
    %v62 = vcombine.high %v61, %v61
    %v65 = vpack.c.bf16 %v61, %v61
    %v66 = vpack.c.bf16 %v62, %v62
    %v67 = vpack.c.bf16 %v23, %v22
    %v68 = vpack.c.bf16 %v25, %v24
    %v69 = vpack.c.bf16 %v27, %v26
    %v70 = vpack.c.bf16 %v29, %v28
    %v71 = vpack.c.bf16 %v31, %v30
    %v72 = vpack.c.bf16 %v33, %v32
    %v73 = vpack.c.bf16 %v35, %v34
    %v74 = vpack.c.bf16 %v37, %v36
    %v75 = vpack.c.bf16 %v39, %v38
    %v76 = vpack.c.bf16 %v41, %v40
    %v77 = vpack.c.bf16 %v43, %v42
    %v78 = vpack.c.bf16 %v45, %v44
    %v79 = vpack.c.bf16 %v47, %v46
    %v80 = vpack.c.bf16 %v49, %v48
    %v81 = vpack.c.bf16 %v51, %v50
    %v82 = vpack.c.bf16 %v53, %v52
    %v83 = vld [vmem:[%s2] sm:$0x1]
    %v85 = vlaneseq
    %v86 = vshrl.u32 %v85, 7
    %v87 = vsub.s32 0, %v86
    %v88 = vrot.slane %v83, %v87
    %90 = vmatprep.subr.bf16.mxu0 0
    %91 = vmatpush1.bf16.msra.mxu0 %v67
    %92 = vmatprep.subr.bf16.mxu0 0
    %93 = vmatpush1.bf16.msra.mxu0 %v68
    %94 = vmatprep.subr.bf16.mxu0 0
    %95 = vmatpush1.bf16.msra.mxu0 %v69
    %96 = vmatprep.subr.bf16.mxu0 0
    %97 = vmatpush1.bf16.msra.mxu0 %v70
    %98 = vmatprep.subr.bf16.mxu0 0
    %99 = vmatpush1.bf16.msra.mxu0 %v71
    %100 = vmatprep.subr.bf16.mxu0 0
    %101 = vmatpush1.bf16.msra.mxu0 %v72
    %102 = vmatprep.subr.bf16.mxu0 0
    %103 = vmatpush1.bf16.msra.mxu0 %v73
    %104 = vmatprep.subr.bf16.mxu0 0
    %105 = vmatpush1.bf16.msra.mxu0 %v74
    %106 = vmatprep.subr.bf16.mxu0 0
    %107 = vmatpush1.bf16.msra.mxu0 %v75
    %108 = vmatprep.subr.bf16.mxu0 0
    %109 = vmatpush1.bf16.msra.mxu0 %v76
    %110 = vmatprep.subr.bf16.mxu0 0
    %111 = vmatpush1.bf16.msra.mxu0 %v77
    %112 = vmatprep.subr.bf16.mxu0 0
    %113 = vmatpush1.bf16.msra.mxu0 %v78
    %114 = vmatprep.subr.bf16.mxu0 0
    %115 = vmatpush1.bf16.msra.mxu0 %v79
    %116 = vmatprep.subr.bf16.mxu0 0
    %117 = vmatpush1.bf16.msra.mxu0 %v80
    %118 = vmatprep.subr.bf16.mxu0 0
    %119 = vmatpush1.bf16.msra.mxu0 %v81
    %120 = vmatprep.subr.bf16.mxu0 0
    %121 = vmatpush1.bf16.msra.mxu0 %v82
    %122 = vmatprep.mubr.bf16.mxu0 %v66
    %123 = vmatmul.mubr.bf16.gmra.mrb[0].mxu0 %v65
    %v124 = vpop.f32.mrb[0].mxu0
    %v125 = vadd.f32 %v88, %v124
    %v126 = vpop.f32.mrb[0].mxu0
    %v127 = vpop.f32.mrb[0].mxu0
    %v128 = vpop.f32.mrb[0].mxu0
    %129 = vdwg.mxu0
    %130 = vst [vmem:[%s4] sm:$0x3] %v125
    %v131 = vld [vmem:[%s3] sm:$0x3]
    %v132 = vmul.f32 %v125, 0.5
    %v133 = vmul.f32 %v132, 1.442695
    %v134 = vpow.pop %v133
    %136 = vrot.lane.b32.xlu0 %v134, 112
    %v137 = vpop.permute.xlu0 %136
    %v139 = vmul.f32 %v131, %v137
    %v140 = vadd.f32 %v125, %v139
    %vm141 = vcmask 123904
    %142 = vst.msk [vmem:[#allocation2] sm:$0x3] %vm141, %v140
    // Predicated region
    $region18: #{ladder_vae_forward.13} parent=1 // pred_check
      _
    $region19: #{ladder_vae_forward.13} parent=1 // pred_check_branch
      %144 = sbr.rel (0) target = $region21
    $region20: #{ladder_vae_forward.13} parent=1 // pred_region
      _
    $region21: #{ladder_vae_forward.13} parent=1 // pred_fallthru
      _
    // Predicated region
    $region22: #{ladder_vae_forward.13} parent=1 // pred_check
      _
    $region23: #{ladder_vae_forward.13} parent=1 // pred_check_branch
      %146 = sbr.rel (0) target = $region25
    $region24: #{ladder_vae_forward.13} parent=1 // pred_region
      %s148 = ssub.s32 32, 32
      %149 = vsyncadd [#allocation3], %s148
      %s151 = sshll.u32 [#allocation2], 4
      %s152 = int_to_ptr.vmem [resolvable:$true] %s151
      %154 = dma.vmem_to_hbm [thread:$0]  %s152, 32, %s5, [#allocation3]
    $region25: #{ladder_vae_forward.13} parent=1 // pred_fallthru
      _
    // Predicated region
    $region26: #{ladder_vae_forward.13} parent=1 // pred_check
      _
    $region27: #{ladder_vae_forward.13} parent=1 // pred_check_branch
      %156 = sbr.rel (0) target = $region29
    $region28: #{ladder_vae_forward.13} parent=1 // pred_region
      _
    $region29: #{ladder_vae_forward.13} parent=1 // pred_fallthru
      _
    // Predicated region
    $region30: #{ladder_vae_forward.13} parent=1 // pred_check
      _
    $region31: #{ladder_vae_forward.13} parent=1 // pred_check_branch
      %158 = sbr.rel (0) target = $region33
    $region32: #{ladder_vae_forward.13} parent=1 // pred_region
      %159 = dma.done [#allocation3], 32
    $region33: #{ladder_vae_forward.13} parent=1 // pred_fallthru
      _
    %160 = vsyncpa [#allocation3], 1

</llo_original>
